<compile_context>
chip_gen: v5e
topology: v5e:2x2
jax: 0.10.0
libtpu: 0.0.40
codegen_flags: <defaults>
</compile_context>

<pallas_src>
import functools

import jax
import jax.numpy as jnp
from jax.experimental import pallas as pl
from jax.experimental.pallas import tpu as pltpu


# ----------------------------- Pallas kernels ------------------------------ #

def _conv_kernel(w_ref, col_ref, scale_ref, shift_ref, o_ref, *, relu):
    """(Cout, tm) = W(Cout, K) @ col(K, tm); optional ReLU; per-channel affine.

    Channel-major: Cout on sublanes, M = N*OH*OW on lanes -> lane-dense store
    and output already in the next layer's activation layout."""
    y = jnp.dot(w_ref[...], col_ref[...], preferred_element_type=jnp.float32)
    if relu:
        y = jnp.maximum(y, 0.0)
    y = y * scale_ref[...] + shift_ref[...]
    o_ref[...] = y.astype(o_ref.dtype)


def _head_kernel(x_ref, w4_ref, s4_ref, b4_ref, pool_ref, wl_ref, bl_ref,
                 o_ref, *, log_softmax):
    """Fused head: conv4 (1x1) + ReLU + eval-BN affine, global average pool
    (matmul with a block-diagonal 1/25 matrix), last 1x1 conv + bias, and
    optional log_softmax.  Output layout is (10, N); wrapper transposes."""
    h = jnp.dot(w4_ref[...], x_ref[...], preferred_element_type=jnp.float32)
    h = jnp.maximum(h, 0.0) * s4_ref[...] + b4_ref[...]                 # (32, N*25)
    g = jnp.dot(h, pool_ref[...], preferred_element_type=jnp.float32)   # (32, N)
    logits = jnp.dot(wl_ref[...], g,
                     preferred_element_type=jnp.float32) + bl_ref[...]  # (10, N)
    if log_softmax:
        m = jnp.max(logits, axis=0, keepdims=True)
        z = logits - m
        lse = jnp.log(jnp.sum(jnp.exp(z), axis=0, keepdims=True))
        logits = z - lse
    o_ref[...] = logits


# ------------------------------ conv wrappers ------------------------------- #

def _im2col_cm(x, kh, kw, stride, padding, dilation):
    """Channel-major im2col: x (C, N, H, W) -> (kh*kw*C, N*OH*OW).

    Pure pad/slice/concat (no transposes) so the XLA glue between Pallas calls
    is cheap.  K ordering = (tap-major, channel-minor), matching
    _pack_conv_weight()."""
    C, N, H, W = x.shape
    xp = jnp.pad(x, ((0, 0), (0, 0), (padding, padding), (padding, padding)))
    Hp, Wp = H + 2 * padding, W + 2 * padding
    OH = (Hp - dilation * (kh - 1) - 1) // stride + 1
    OW = (Wp - dilation * (kw - 1) - 1) // stride + 1
    taps = []
    for i in range(kh):
        for j in range(kw):
            taps.append(
                xp[:, :,
                   i * dilation: i * dilation + stride * (OH - 1) + 1: stride,
                   j * dilation: j * dilation + stride * (OW - 1) + 1: stride])
    col = jnp.stack(taps, axis=0).reshape(kh * kw * C, N * OH * OW)
    return col, OH, OW


def _conv_cm(col, wmat, scale, shift, *, relu):
    """Pallas matmul conv in channel-major layout, M-tiled when M is large."""
    Cout, K = wmat.shape
    _, M = col.shape
    tm = 512 if (M > 512 and M % 512 == 0) else M      # 512 = multiple of 128
    grid = (M // tm,)
    return pl.pallas_call(
        functools.partial(_conv_kernel, relu=relu),
        grid=grid,
        in_specs=[pl.BlockSpec((Cout, K), lambda m: (0, 0)),
                  pl.BlockSpec((K, tm), lambda m: (0, m)),
                  pl.BlockSpec((Cout, 1), lambda m: (0, 0)),
                  pl.BlockSpec((Cout, 1), lambda m: (0, 0))],
        out_specs=pl.BlockSpec((Cout, tm), lambda m: (0, m)),
        out_shape=jax.ShapeDtypeStruct((Cout, M), jnp.bfloat16),
        compiler_params=pltpu.CompilerParams(
            dimension_semantics=("parallel",)),
    )(wmat, col, scale, shift)


# ------------------------------- parameters -------------------------------- #

def _bn_eval_affine(key, c):
    """Eval-mode BatchNorm2d folded to (scale, shift): running_mean=0, var=1."""
    k1, k2 = jax.random.split(key)
    gamma = 1.0 + 0.1 * jax.random.normal(k1, (c,), jnp.float32)
    beta = 0.1 * jax.random.normal(k2, (c,), jnp.float32)
    eps = 1e-5
    return gamma / jnp.sqrt(1.0 + eps), beta


def init_params(key):
    p = {}

    def conv_w(k, cout, cin, kh, kw):
        return 0.1 * jax.random.normal(k, (cout, cin, kh, kw), jnp.float32)

    keys = iter(jax.random.split(key, 32))
    # conv1: Conv(3->16,k3,p2,d2)+ReLU+BN, Conv(16->32,k3,p2,d2)+ReLU+BN
    p["c1a_w"] = conv_w(next(keys), 16, 3, 3, 3); p["c1a_s"], p["c1a_b"] = _bn_eval_affine(next(keys), 16)
    p["c1b_w"] = conv_w(next(keys), 32, 16, 3, 3); p["c1b_s"], p["c1b_b"] = _bn_eval_affine(next(keys), 32)
    # transition1: Conv(32->32,k3,s2,p2,d2), Conv(32->16,k1)
    p["t1a_w"] = conv_w(next(keys), 32, 32, 3, 3)
    p["t1b_w"] = conv_w(next(keys), 16, 32, 1, 1)
    # conv2
    p["c2a_w"] = conv_w(next(keys), 32, 16, 3, 3); p["c2a_s"], p["c2a_b"] = _bn_eval_affine(next(keys), 32)
    p["c2b_w"] = conv_w(next(keys), 64, 32, 3, 3); p["c2b_s"], p["c2b_b"] = _bn_eval_affine(next(keys), 64)
    # transition2: Conv(64->64,k3,s2,p2,d1), Conv(64->16,k1)
    p["t2a_w"] = conv_w(next(keys), 64, 64, 3, 3)
    p["t2b_w"] = conv_w(next(keys), 16, 64, 1, 1)
    # conv3: pads [2,1], dils [2,1]
    p["c3a_w"] = conv_w(next(keys), 32, 16, 3, 3); p["c3a_s"], p["c3a_b"] = _bn_eval_affine(next(keys), 32)
    p["c3b_w"] = conv_w(next(keys), 64, 32, 3, 3); p["c3b_s"], p["c3b_b"] = _bn_eval_affine(next(keys), 64)
    # transition3: Conv(64->64,k3,s2,p1,d1), Conv(64->16,k1)
    p["t3a_w"] = conv_w(next(keys), 64, 64, 3, 3)
    p["t3b_w"] = conv_w(next(keys), 16, 64, 1, 1)
    # conv4: Conv(16->32,k1,bias=False)+ReLU+BN
    p["c4_w"] = conv_w(next(keys), 32, 16, 1, 1); p["c4_s"], p["c4_b"] = _bn_eval_affine(next(keys), 32)
    # last_conv: Conv(32->10,k1,bias=True)
    p["last_w"] = conv_w(next(keys), 10, 32, 1, 1)
    p["last_b"] = 0.1 * jax.random.normal(next(keys), (10,), jnp.float32)
    return p


def _pack_conv_weight(w):
    """(Cout, Cin, kh, kw) -> (Cout, kh*kw*Cin) bf16, matching _im2col_cm K-order."""
    Cout, Cin, kh, kw = w.shape
    return jnp.transpose(w, (0, 2, 3, 1)).reshape(Cout, kh * kw * Cin).astype(jnp.bfloat16)


def _fold_1x1(w3, w1):
    """Compose a 3x3 conv followed (no nonlinearity) by a 1x1 conv — exact."""
    return jnp.einsum("oc,cikl->oikl", w1[:, :, 0, 0], w3)


def prepare_inference_params(p):
    """Fold transition 1x1s, pack weights to (Cout, K) bf16, affine to (C,1) f32."""
    q = {}

    def add(name, w, s=None, b=None):
        cout = w.shape[0]
        q[name + "_w"] = _pack_conv_weight(w)
        q[name + "_s"] = (jnp.ones((cout,), jnp.float32) if s is None else s).reshape(cout, 1)
        q[name + "_b"] = (jnp.zeros((cout,), jnp.float32) if b is None else b).reshape(cout, 1)

    add("c1a", p["c1a_w"], p["c1a_s"], p["c1a_b"])
    add("c1b", p["c1b_w"], p["c1b_s"], p["c1b_b"])
    add("t1", _fold_1x1(p["t1a_w"], p["t1b_w"]))          # 32 -> 16, exact fold
    add("c2a", p["c2a_w"], p["c2a_s"], p["c2a_b"])
    add("c2b", p["c2b_w"], p["c2b_s"], p["c2b_b"])
    add("t2", _fold_1x1(p["t2a_w"], p["t2b_w"]))          # 64 -> 16, exact fold
    add("c3a", p["c3a_w"], p["c3a_s"], p["c3a_b"])
    add("c3b", p["c3b_w"], p["c3b_s"], p["c3b_b"])
    add("t3", _fold_1x1(p["t3a_w"], p["t3b_w"]))          # 64 -> 16, exact fold
    # fused head parameters
    q["w4"] = p["c4_w"].reshape(32, 16).astype(jnp.bfloat16)
    q["s4"] = p["c4_s"].reshape(32, 1)
    q["b4"] = p["c4_b"].reshape(32, 1)
    q["wl"] = p["last_w"].reshape(10, 32).astype(jnp.float32)
    q["bl"] = p["last_b"].reshape(10, 1)
    return q


# -------------------------------- forward ---------------------------------- #

# (param name, stride, padding, dilation, relu+BN) — all 3x3 after folding.
_CONV_PLAN = (
    ("c1a", 1, 2, 2, True),
    ("c1b", 1, 2, 2, True),
    ("t1", 2, 2, 2, False),
    ("c2a", 1, 2, 2, True),
    ("c2b", 1, 2, 2, True),
    ("t2", 2, 2, 1, False),
    ("c3a", 1, 2, 2, True),
    ("c3b", 1, 1, 1, True),
    ("t3", 2, 1, 1, False),
)


def cifarnet_forward(q, x, *, loss_function="NLLoss"):
    N, C, H, W = x.shape
    # Single layout change at the boundary: NCHW -> channel-major bf16.
    h = jnp.transpose(x, (1, 0, 2, 3)).astype(jnp.bfloat16).reshape(C, N * H * W)

    for name, stride, padding, dilation, relu in _CONV_PLAN:
        col, H, W = _im2col_cm(h.reshape(C, N, H, W), 3, 3, stride, padding, dilation)
        h = _conv_cm(col, q[name + "_w"], q[name + "_s"], q[name + "_b"], relu=relu)
        C = h.shape[0]

    # Fused head: conv4 (1x1+ReLU+BN) + AvgPool2d(5) + last 1x1 + bias
    # (+ log_softmax for the 'NLLoss' config).  5x5 map -> global average.
    assert (H, W) == (5, 5), (H, W)
    M = N * H * W
    pool = jnp.repeat(jnp.eye(N, dtype=jnp.float32), H * W, axis=0) / float(H * W)
    out = pl.pallas_call(
        functools.partial(_head_kernel,
                          log_softmax=(loss_function == "NLLoss")),
        grid=(1,),
        in_specs=[pl.BlockSpec((C, M), lambda i: (0, 0)),
                  pl.BlockSpec((32, C), lambda i: (0, 0)),
                  pl.BlockSpec((32, 1), lambda i: (0, 0)),
                  pl.BlockSpec((32, 1), lambda i: (0, 0)),
                  pl.BlockSpec((M, N), lambda i: (0, 0)),
                  pl.BlockSpec((10, 32), lambda i: (0, 0)),
                  pl.BlockSpec((10, 1), lambda i: (0, 0))],
        out_specs=pl.BlockSpec((10, N), lambda i: (0, 0)),
        out_shape=jax.ShapeDtypeStruct((10, N), jnp.float32),
        compiler_params=pltpu.CompilerParams(
            dimension_semantics=("arbitrary",)),
    )(h, q["w4"], q["s4"], q["b4"], pool, q["wl"], q["bl"])
    return jnp.transpose(out)                               # (N, 10)


# ---------------------------------- main ------------------------------------ #

if __name__ == "__main__":
    key = jax.random.PRNGKey(0)
    k_param, k_x = jax.random.split(key)
    raw_params = init_params(k_param)
    params = prepare_inference_params(raw_params)

    # CIFAR-shaped input: spatial 32x32 is required so AvgPool2d(5) sees 5x5.
    x = jax.random.normal(k_x, (2, 3, 32, 32), jnp.float32)

    fwd = jax.jit(functools.partial(cifarnet_forward, loss_function="NLLoss"))
    out = fwd(params, x)
    jax.block_until_ready(out)

    assert out.shape == (2, 10), out.shape
    assert bool(jnp.all(jnp.isfinite(out)))
    # log_softmax rows must exponentiate-sum to 1.
    assert bool(jnp.allclose(jnp.sum(jnp.exp(out), axis=-1), 1.0, atol=1e-2))
    print("KERNEL_OK")
</pallas_src>

<mosaic_0001>
module attributes {stable_mosaic.version = 11 : i64} {
  func.func @_conv_kernel(%arg0: i32, %arg1: memref<16x27xbf16, #tpu.memory_space<vmem>>, %arg2: memref<27x512xbf16, #tpu.memory_space<vmem>>, %arg3: memref<16x1xf32, #tpu.memory_space<vmem>>, %arg4: memref<16x1xf32, #tpu.memory_space<vmem>>, %arg5: memref<16x512xbf16, #tpu.memory_space<vmem>>) attributes {dimension_semantics = [#tpu.dimension_semantics<parallel>], iteration_bounds = array<i64: 4>, scalar_prefetch = 0 : i64, scratch_operands = 0 : i64, tpu.core_type = #tpu.core_type<tc>, window_params = [{pipeline_mode = #tpu.pipeline_mode<synchronous>, transform_indices = @transform_0, window_bounds = array<i64: 16, 27>}, {transform_indices = @transform_1, window_bounds = array<i64: 27, 512>}, {pipeline_mode = #tpu.pipeline_mode<synchronous>, transform_indices = @transform_2, window_bounds = array<i64: 16, 1>}, {pipeline_mode = #tpu.pipeline_mode<synchronous>, transform_indices = @transform_3, window_bounds = array<i64: 16, 1>}, {transform_indices = @transform_4, window_bounds = array<i64: 16, 512>}]} {
    %c0 = arith.constant 0 : index
    %c0_0 = arith.constant 0 : index
    %0 = vector.load %arg1[%c0, %c0_0] : memref<16x27xbf16, #tpu.memory_space<vmem>>, vector<16x27xbf16>
    %c0_1 = arith.constant 0 : index
    %c0_2 = arith.constant 0 : index
    %1 = vector.load %arg2[%c0_1, %c0_2] : memref<27x512xbf16, #tpu.memory_space<vmem>>, vector<27x512xbf16>
    %cst = arith.constant dense<0.000000e+00> : vector<16x512xf32>
    %2 = tpu.matmul %0, %1, %cst {dimension_numbers = #tpu.dot_dimension_numbers<[1], [0], [0], [1], [0, 0, 1, 1], [], []>} : vector<16x27xbf16>, vector<27x512xbf16>, vector<16x512xf32> -> vector<16x512xf32>
    %cst_3 = arith.constant 0.000000e+00 : f32
    %3 = vector.broadcast %cst_3 : f32 to vector<16x512xf32>
    %4 = arith.maximumf %2, %3 : vector<16x512xf32>
    %c0_4 = arith.constant 0 : index
    %c0_5 = arith.constant 0 : index
    %5 = vector.load %arg3[%c0_4, %c0_5] : memref<16x1xf32, #tpu.memory_space<vmem>>, vector<16x1xf32>
    %6 = vector.broadcast %5 : vector<16x1xf32> to vector<16x512xf32>
    %7 = arith.mulf %4, %6 : vector<16x512xf32>
    %c0_6 = arith.constant 0 : index
    %c0_7 = arith.constant 0 : index
    %8 = vector.load %arg4[%c0_6, %c0_7] : memref<16x1xf32, #tpu.memory_space<vmem>>, vector<16x1xf32>
    %9 = vector.broadcast %8 : vector<16x1xf32> to vector<16x512xf32>
    %10 = arith.addf %7, %9 : vector<16x512xf32>
    %11 = arith.truncf %10 : vector<16x512xf32> to vector<16x512xbf16>
    %c0_8 = arith.constant 0 : index
    %c0_9 = arith.constant 0 : index
    %12 = vector.load %arg5[%c0_8, %c0_9] : memref<16x512xbf16, #tpu.memory_space<vmem>>, vector<16x512xbf16>
    tpu.vector_store %arg5[%c0_8, %c0_9], %11 {strides = array<i32>} : memref<16x512xbf16, #tpu.memory_space<vmem>>, vector<16x512xbf16>,
    return
  }
  func.func @transform_0(%arg0: i32) -> (i32, i32) {
    %c0_i32 = arith.constant 0 : i32
    %c0_i32_0 = arith.constant 0 : i32
    %c0_i32_1 = arith.constant 0 : i32
    return %c0_i32, %c0_i32_0 : i32, i32
  }
  func.func @transform_1(%arg0: i32) -> (i32, i32) {
    %c0_i32 = arith.constant 0 : i32
    %c0_i32_0 = arith.constant 0 : i32
    return %c0_i32, %arg0 : i32, i32
  }
  func.func @transform_2(%arg0: i32) -> (i32, i32) {
    %c0_i32 = arith.constant 0 : i32
    %c0_i32_0 = arith.constant 0 : i32
    %c0_i32_1 = arith.constant 0 : i32
    return %c0_i32, %c0_i32_0 : i32, i32
  }
  func.func @transform_3(%arg0: i32) -> (i32, i32) {
    %c0_i32 = arith.constant 0 : i32
    %c0_i32_0 = arith.constant 0 : i32
    %c0_i32_1 = arith.constant 0 : i32
    return %c0_i32, %c0_i32_0 : i32, i32
  }
  func.func @transform_4(%arg0: i32) -> (i32, i32) {
    %c0_i32 = arith.constant 0 : i32
    %c0_i32_0 = arith.constant 0 : i32
    return %c0_i32, %arg0 : i32, i32
  }
}

module attributes {stable_mosaic.version = 11 : i64} {
  func.func @_conv_kernel(%arg0: i32, %arg1: memref<32x144xbf16, #tpu.memory_space<vmem>>, %arg2: memref<144x512xbf16, #tpu.memory_space<vmem>>, %arg3: memref<32x1xf32, #tpu.memory_space<vmem>>, %arg4: memref<32x1xf32, #tpu.memory_space<vmem>>, %arg5: memref<32x512xbf16, #tpu.memory_space<vmem>>) attributes {dimension_semantics = [#tpu.dimension_semantics<parallel>], iteration_bounds = array<i64: 4>, scalar_prefetch = 0 : i64, scratch_operands = 0 : i64, tpu.core_type = #tpu.core_type<tc>, window_params = [{pipeline_mode = #tpu.pipeline_mode<synchronous>, transform_indices = @transform_0, window_bounds = array<i64: 32, 144>}, {transform_indices = @transform_1, window_bounds = array<i64: 144, 512>}, {pipeline_mode = #tpu.pipeline_mode<synchronous>, transform_indices = @transform_2, window_bounds = array<i64: 32, 1>}, {pipeline_mode = #tpu.pipeline_mode<synchronous>, transform_indices = @transform_3, window_bounds = array<i64: 32, 1>}, {transform_indices = @transform_4, window_bounds = array<i64: 32, 512>}]} {
    %c0 = arith.constant 0 : index
    %c0_0 = arith.constant 0 : index
    %0 = vector.load %arg1[%c0, %c0_0] : memref<32x144xbf16, #tpu.memory_space<vmem>>, vector<32x144xbf16>
    %c0_1 = arith.constant 0 : index
    %c0_2 = arith.constant 0 : index
    %1 = vector.load %arg2[%c0_1, %c0_2] : memref<144x512xbf16, #tpu.memory_space<vmem>>, vector<144x512xbf16>
    %cst = arith.constant dense<0.000000e+00> : vector<32x512xf32>
    %2 = tpu.matmul %0, %1, %cst {dimension_numbers = #tpu.dot_dimension_numbers<[1], [0], [0], [1], [0, 0, 1, 1], [], []>} : vector<32x144xbf16>, vector<144x512xbf16>, vector<32x512xf32> -> vector<32x512xf32>
    %cst_3 = arith.constant 0.000000e+00 : f32
    %3 = vector.broadcast %cst_3 : f32 to vector<32x512xf32>
    %4 = arith.maximumf %2, %3 : vector<32x512xf32>
    %c0_4 = arith.constant 0 : index
    %c0_5 = arith.constant 0 : index
    %5 = vector.load %arg3[%c0_4, %c0_5] : memref<32x1xf32, #tpu.memory_space<vmem>>, vector<32x1xf32>
    %6 = vector.broadcast %5 : vector<32x1xf32> to vector<32x512xf32>
    %7 = arith.mulf %4, %6 : vector<32x512xf32>
    %c0_6 = arith.constant 0 : index
    %c0_7 = arith.constant 0 : index
    %8 = vector.load %arg4[%c0_6, %c0_7] : memref<32x1xf32, #tpu.memory_space<vmem>>, vector<32x1xf32>
    %9 = vector.broadcast %8 : vector<32x1xf32> to vector<32x512xf32>
    %10 = arith.addf %7, %9 : vector<32x512xf32>
    %11 = arith.truncf %10 : vector<32x512xf32> to vector<32x512xbf16>
    %c0_8 = arith.constant 0 : index
    %c0_9 = arith.constant 0 : index
    %12 = vector.load %arg5[%c0_8, %c0_9] : memref<32x512xbf16, #tpu.memory_space<vmem>>, vector<32x512xbf16>
    tpu.vector_store %arg5[%c0_8, %c0_9], %11 {strides = array<i32>} : memref<32x512xbf16, #tpu.memory_space<vmem>>, vector<32x512xbf16>,
    return
  }
  func.func @transform_0(%arg0: i32) -> (i32, i32) {
    %c0_i32 = arith.constant 0 : i32
    %c0_i32_0 = arith.constant 0 : i32
    %c0_i32_1 = arith.constant 0 : i32
    return %c0_i32, %c0_i32_0 : i32, i32
  }
  func.func @transform_1(%arg0: i32) -> (i32, i32) {
    %c0_i32 = arith.constant 0 : i32
    %c0_i32_0 = arith.constant 0 : i32
    return %c0_i32, %arg0 : i32, i32
  }
  func.func @transform_2(%arg0: i32) -> (i32, i32) {
    %c0_i32 = arith.constant 0 : i32
    %c0_i32_0 = arith.constant 0 : i32
    %c0_i32_1 = arith.constant 0 : i32
    return %c0_i32, %c0_i32_0 : i32, i32
  }
  func.func @transform_3(%arg0: i32) -> (i32, i32) {
    %c0_i32 = arith.constant 0 : i32
    %c0_i32_0 = arith.constant 0 : i32
    %c0_i32_1 = arith.constant 0 : i32
    return %c0_i32, %c0_i32_0 : i32, i32
  }
  func.func @transform_4(%arg0: i32) -> (i32, i32) {
    %c0_i32 = arith.constant 0 : i32
    %c0_i32_0 = arith.constant 0 : i32
    return %c0_i32, %arg0 : i32, i32
  }
}

module attributes {stable_mosaic.version = 11 : i64} {
  func.func @_conv_kernel(%arg0: i32, %arg1: memref<16x288xbf16, #tpu.memory_space<vmem>>, %arg2: memref<288x512xbf16, #tpu.memory_space<vmem>>, %arg3: memref<16x1xf32, #tpu.memory_space<vmem>>, %arg4: memref<16x1xf32, #tpu.memory_space<vmem>>, %arg5: memref<16x512xbf16, #tpu.memory_space<vmem>>) attributes {dimension_semantics = [#tpu.dimension_semantics<parallel>], iteration_bounds = array<i64: 1>, scalar_prefetch = 0 : i64, scratch_operands = 0 : i64, tpu.core_type = #tpu.core_type<tc>, window_params = [{pipeline_mode = #tpu.pipeline_mode<synchronous>, transform_indices = @transform_0, window_bounds = array<i64: 16, 288>}, {transform_indices = @transform_1, window_bounds = array<i64: 288, 512>}, {pipeline_mode = #tpu.pipeline_mode<synchronous>, transform_indices = @transform_2, window_bounds = array<i64: 16, 1>}, {pipeline_mode = #tpu.pipeline_mode<synchronous>, transform_indices = @transform_3, window_bounds = array<i64: 16, 1>}, {transform_indices = @transform_4, window_bounds = array<i64: 16, 512>}]} {
    %c0 = arith.constant 0 : index
    %c0_0 = arith.constant 0 : index
    %0 = vector.load %arg1[%c0, %c0_0] : memref<16x288xbf16, #tpu.memory_space<vmem>>, vector<16x288xbf16>
    %c0_1 = arith.constant 0 : index
    %c0_2 = arith.constant 0 : index
    %1 = vector.load %arg2[%c0_1, %c0_2] : memref<288x512xbf16, #tpu.memory_space<vmem>>, vector<288x512xbf16>
    %cst = arith.constant dense<0.000000e+00> : vector<16x512xf32>
    %2 = tpu.matmul %0, %1, %cst {dimension_numbers = #tpu.dot_dimension_numbers<[1], [0], [0], [1], [0, 0, 1, 1], [], []>} : vector<16x288xbf16>, vector<288x512xbf16>, vector<16x512xf32> -> vector<16x512xf32>
    %c0_3 = arith.constant 0 : index
    %c0_4 = arith.constant 0 : index
    %3 = vector.load %arg3[%c0_3, %c0_4] : memref<16x1xf32, #tpu.memory_space<vmem>>, vector<16x1xf32>
    %4 = vector.broadcast %3 : vector<16x1xf32> to vector<16x512xf32>
    %5 = arith.mulf %2, %4 : vector<16x512xf32>
    %c0_5 = arith.constant 0 : index
    %c0_6 = arith.constant 0 : index
    %6 = vector.load %arg4[%c0_5, %c0_6] : memref<16x1xf32, #tpu.memory_space<vmem>>, vector<16x1xf32>
    %7 = vector.broadcast %6 : vector<16x1xf32> to vector<16x512xf32>
    %8 = arith.addf %5, %7 : vector<16x512xf32>
    %9 = arith.truncf %8 : vector<16x512xf32> to vector<16x512xbf16>
    %c0_7 = arith.constant 0 : index
    %c0_8 = arith.constant 0 : index
    %10 = vector.load %arg5[%c0_7, %c0_8] : memref<16x512xbf16, #tpu.memory_space<vmem>>, vector<16x512xbf16>
    tpu.vector_store %arg5[%c0_7, %c0_8], %9 {strides = array<i32>} : memref<16x512xbf16, #tpu.memory_space<vmem>>, vector<16x512xbf16>,
    return
  }
  func.func @transform_0(%arg0: i32) -> (i32, i32) {
    %c0_i32 = arith.constant 0 : i32
    %c0_i32_0 = arith.constant 0 : i32
    %c0_i32_1 = arith.constant 0 : i32
    return %c0_i32, %c0_i32_0 : i32, i32
  }
  func.func @transform_1(%arg0: i32) -> (i32, i32) {
    %c0_i32 = arith.constant 0 : i32
    %c0_i32_0 = arith.constant 0 : i32
    return %c0_i32, %arg0 : i32, i32
  }
  func.func @transform_2(%arg0: i32) -> (i32, i32) {
    %c0_i32 = arith.constant 0 : i32
    %c0_i32_0 = arith.constant 0 : i32
    %c0_i32_1 = arith.constant 0 : i32
    return %c0_i32, %c0_i32_0 : i32, i32
  }
  func.func @transform_3(%arg0: i32) -> (i32, i32) {
    %c0_i32 = arith.constant 0 : i32
    %c0_i32_0 = arith.constant 0 : i32
    %c0_i32_1 = arith.constant 0 : i32
    return %c0_i32, %c0_i32_0 : i32, i32
  }
  func.func @transform_4(%arg0: i32) -> (i32, i32) {
    %c0_i32 = arith.constant 0 : i32
    %c0_i32_0 = arith.constant 0 : i32
    return %c0_i32, %arg0 : i32, i32
  }
}

module attributes {stable_mosaic.version = 11 : i64} {
  func.func @_conv_kernel(%arg0: i32, %arg1: memref<32x144xbf16, #tpu.memory_space<vmem>>, %arg2: memref<144x512xbf16, #tpu.memory_space<vmem>>, %arg3: memref<32x1xf32, #tpu.memory_space<vmem>>, %arg4: memref<32x1xf32, #tpu.memory_space<vmem>>, %arg5: memref<32x512xbf16, #tpu.memory_space<vmem>>) attributes {dimension_semantics = [#tpu.dimension_semantics<parallel>], iteration_bounds = array<i64: 1>, scalar_prefetch = 0 : i64, scratch_operands = 0 : i64, tpu.core_type = #tpu.core_type<tc>, window_params = [{pipeline_mode = #tpu.pipeline_mode<synchronous>, transform_indices = @transform_0, window_bounds = array<i64: 32, 144>}, {transform_indices = @transform_1, window_bounds = array<i64: 144, 512>}, {pipeline_mode = #tpu.pipeline_mode<synchronous>, transform_indices = @transform_2, window_bounds = array<i64: 32, 1>}, {pipeline_mode = #tpu.pipeline_mode<synchronous>, transform_indices = @transform_3, window_bounds = array<i64: 32, 1>}, {transform_indices = @transform_4, window_bounds = array<i64: 32, 512>}]} {
    %c0 = arith.constant 0 : index
    %c0_0 = arith.constant 0 : index
    %0 = vector.load %arg1[%c0, %c0_0] : memref<32x144xbf16, #tpu.memory_space<vmem>>, vector<32x144xbf16>
    %c0_1 = arith.constant 0 : index
    %c0_2 = arith.constant 0 : index
    %1 = vector.load %arg2[%c0_1, %c0_2] : memref<144x512xbf16, #tpu.memory_space<vmem>>, vector<144x512xbf16>
    %cst = arith.constant dense<0.000000e+00> : vector<32x512xf32>
    %2 = tpu.matmul %0, %1, %cst {dimension_numbers = #tpu.dot_dimension_numbers<[1], [0], [0], [1], [0, 0, 1, 1], [], []>} : vector<32x144xbf16>, vector<144x512xbf16>, vector<32x512xf32> -> vector<32x512xf32>
    %cst_3 = arith.constant 0.000000e+00 : f32
    %3 = vector.broadcast %cst_3 : f32 to vector<32x512xf32>
    %4 = arith.maximumf %2, %3 : vector<32x512xf32>
    %c0_4 = arith.constant 0 : index
    %c0_5 = arith.constant 0 : index
    %5 = vector.load %arg3[%c0_4, %c0_5] : memref<32x1xf32, #tpu.memory_space<vmem>>, vector<32x1xf32>
    %6 = vector.broadcast %5 : vector<32x1xf32> to vector<32x512xf32>
    %7 = arith.mulf %4, %6 : vector<32x512xf32>
    %c0_6 = arith.constant 0 : index
    %c0_7 = arith.constant 0 : index
    %8 = vector.load %arg4[%c0_6, %c0_7] : memref<32x1xf32, #tpu.memory_space<vmem>>, vector<32x1xf32>
    %9 = vector.broadcast %8 : vector<32x1xf32> to vector<32x512xf32>
    %10 = arith.addf %7, %9 : vector<32x512xf32>
    %11 = arith.truncf %10 : vector<32x512xf32> to vector<32x512xbf16>
    %c0_8 = arith.constant 0 : index
    %c0_9 = arith.constant 0 : index
    %12 = vector.load %arg5[%c0_8, %c0_9] : memref<32x512xbf16, #tpu.memory_space<vmem>>, vector<32x512xbf16>
    tpu.vector_store %arg5[%c0_8, %c0_9], %11 {strides = array<i32>} : memref<32x512xbf16, #tpu.memory_space<vmem>>, vector<32x512xbf16>,
    return
  }
  func.func @transform_0(%arg0: i32) -> (i32, i32) {
    %c0_i32 = arith.constant 0 : i32
    %c0_i32_0 = arith.constant 0 : i32
    %c0_i32_1 = arith.constant 0 : i32
    return %c0_i32, %c0_i32_0 : i32, i32
  }
  func.func @transform_1(%arg0: i32) -> (i32, i32) {
    %c0_i32 = arith.constant 0 : i32
    %c0_i32_0 = arith.constant 0 : i32
    return %c0_i32, %arg0 : i32, i32
  }
  func.func @transform_2(%arg0: i32) -> (i32, i32) {
    %c0_i32 = arith.constant 0 : i32
    %c0_i32_0 = arith.constant 0 : i32
    %c0_i32_1 = arith.constant 0 : i32
    return %c0_i32, %c0_i32_0 : i32, i32
  }
  func.func @transform_3(%arg0: i32) -> (i32, i32) {
    %c0_i32 = arith.constant 0 : i32
    %c0_i32_0 = arith.constant 0 : i32
    %c0_i32_1 = arith.constant 0 : i32
    return %c0_i32, %c0_i32_0 : i32, i32
  }
  func.func @transform_4(%arg0: i32) -> (i32, i32) {
    %c0_i32 = arith.constant 0 : i32
    %c0_i32_0 = arith.constant 0 : i32
    return %c0_i32, %arg0 : i32, i32
  }
}

module attributes {stable_mosaic.version = 11 : i64} {
  func.func @_conv_kernel(%arg0: i32, %arg1: memref<64x288xbf16, #tpu.memory_space<vmem>>, %arg2: memref<288x512xbf16, #tpu.memory_space<vmem>>, %arg3: memref<64x1xf32, #tpu.memory_space<vmem>>, %arg4: memref<64x1xf32, #tpu.memory_space<vmem>>, %arg5: memref<64x512xbf16, #tpu.memory_space<vmem>>) attributes {dimension_semantics = [#tpu.dimension_semantics<parallel>], iteration_bounds = array<i64: 1>, scalar_prefetch = 0 : i64, scratch_operands = 0 : i64, tpu.core_type = #tpu.core_type<tc>, window_params = [{pipeline_mode = #tpu.pipeline_mode<synchronous>, transform_indices = @transform_0, window_bounds = array<i64: 64, 288>}, {transform_indices = @transform_1, window_bounds = array<i64: 288, 512>}, {pipeline_mode = #tpu.pipeline_mode<synchronous>, transform_indices = @transform_2, window_bounds = array<i64: 64, 1>}, {pipeline_mode = #tpu.pipeline_mode<synchronous>, transform_indices = @transform_3, window_bounds = array<i64: 64, 1>}, {transform_indices = @transform_4, window_bounds = array<i64: 64, 512>}]} {
    %c0 = arith.constant 0 : index
    %c0_0 = arith.constant 0 : index
    %0 = vector.load %arg1[%c0, %c0_0] : memref<64x288xbf16, #tpu.memory_space<vmem>>, vector<64x288xbf16>
    %c0_1 = arith.constant 0 : index
    %c0_2 = arith.constant 0 : index
    %1 = vector.load %arg2[%c0_1, %c0_2] : memref<288x512xbf16, #tpu.memory_space<vmem>>, vector<288x512xbf16>
    %cst = arith.constant dense<0.000000e+00> : vector<64x512xf32>
    %2 = tpu.matmul %0, %1, %cst {dimension_numbers = #tpu.dot_dimension_numbers<[1], [0], [0], [1], [0, 0, 1, 1], [], []>} : vector<64x288xbf16>, vector<288x512xbf16>, vector<64x512xf32> -> vector<64x512xf32>
    %cst_3 = arith.constant 0.000000e+00 : f32
    %3 = vector.broadcast %cst_3 : f32 to vector<64x512xf32>
    %4 = arith.maximumf %2, %3 : vector<64x512xf32>
    %c0_4 = arith.constant 0 : index
    %c0_5 = arith.constant 0 : index
    %5 = vector.load %arg3[%c0_4, %c0_5] : memref<64x1xf32, #tpu.memory_space<vmem>>, vector<64x1xf32>
    %6 = vector.broadcast %5 : vector<64x1xf32> to vector<64x512xf32>
    %7 = arith.mulf %4, %6 : vector<64x512xf32>
    %c0_6 = arith.constant 0 : index
    %c0_7 = arith.constant 0 : index
    %8 = vector.load %arg4[%c0_6, %c0_7] : memref<64x1xf32, #tpu.memory_space<vmem>>, vector<64x1xf32>
    %9 = vector.broadcast %8 : vector<64x1xf32> to vector<64x512xf32>
    %10 = arith.addf %7, %9 : vector<64x512xf32>
    %11 = arith.truncf %10 : vector<64x512xf32> to vector<64x512xbf16>
    %c0_8 = arith.constant 0 : index
    %c0_9 = arith.constant 0 : index
    %12 = vector.load %arg5[%c0_8, %c0_9] : memref<64x512xbf16, #tpu.memory_space<vmem>>, vector<64x512xbf16>
    tpu.vector_store %arg5[%c0_8, %c0_9], %11 {strides = array<i32>} : memref<64x512xbf16, #tpu.memory_space<vmem>>, vector<64x512xbf16>,
    return
  }
  func.func @transform_0(%arg0: i32) -> (i32, i32) {
    %c0_i32 = arith.constant 0 : i32
    %c0_i32_0 = arith.constant 0 : i32
    %c0_i32_1 = arith.constant 0 : i32
    return %c0_i32, %c0_i32_0 : i32, i32
  }
  func.func @transform_1(%arg0: i32) -> (i32, i32) {
    %c0_i32 = arith.constant 0 : i32
    %c0_i32_0 = arith.constant 0 : i32
    return %c0_i32, %arg0 : i32, i32
  }
  func.func @transform_2(%arg0: i32) -> (i32, i32) {
    %c0_i32 = arith.constant 0 : i32
    %c0_i32_0 = arith.constant 0 : i32
    %c0_i32_1 = arith.constant 0 : i32
    return %c0_i32, %c0_i32_0 : i32, i32
  }
  func.func @transform_3(%arg0: i32) -> (i32, i32) {
    %c0_i32 = arith.constant 0 : i32
    %c0_i32_0 = arith.constant 0 : i32
    %c0_i32_1 = arith.constant 0 : i32
    return %c0_i32, %c0_i32_0 : i32, i32
  }
  func.func @transform_4(%arg0: i32) -> (i32, i32) {
    %c0_i32 = arith.constant 0 : i32
    %c0_i32_0 = arith.constant 0 : i32
    return %c0_i32, %arg0 : i32, i32
  }
}

module attributes {stable_mosaic.version = 11 : i64} {
  func.func @_conv_kernel(%arg0: i32, %arg1: memref<16x576xbf16, #tpu.memory_space<vmem>>, %arg2: memref<576x162xbf16, #tpu.memory_space<vmem>>, %arg3: memref<16x1xf32, #tpu.memory_space<vmem>>, %arg4: memref<16x1xf32, #tpu.memory_space<vmem>>, %arg5: memref<16x162xbf16, #tpu.memory_space<vmem>>) attributes {dimension_semantics = [#tpu.dimension_semantics<parallel>], iteration_bounds = array<i64: 1>, scalar_prefetch = 0 : i64, scratch_operands = 0 : i64, tpu.core_type = #tpu.core_type<tc>, window_params = [{pipeline_mode = #tpu.pipeline_mode<synchronous>, transform_indices = @transform_0, window_bounds = array<i64: 16, 576>}, {transform_indices = @transform_1, window_bounds = array<i64: 576, 162>}, {pipeline_mode = #tpu.pipeline_mode<synchronous>, transform_indices = @transform_2, window_bounds = array<i64: 16, 1>}, {pipeline_mode = #tpu.pipeline_mode<synchronous>, transform_indices = @transform_3, window_bounds = array<i64: 16, 1>}, {transform_indices = @transform_4, window_bounds = array<i64: 16, 162>}]} {
    %c0 = arith.constant 0 : index
    %c0_0 = arith.constant 0 : index
    %0 = vector.load %arg1[%c0, %c0_0] : memref<16x576xbf16, #tpu.memory_space<vmem>>, vector<16x576xbf16>
    %c0_1 = arith.constant 0 : index
    %c0_2 = arith.constant 0 : index
    %1 = vector.load %arg2[%c0_1, %c0_2] : memref<576x162xbf16, #tpu.memory_space<vmem>>, vector<576x162xbf16>
    %cst = arith.constant dense<0.000000e+00> : vector<16x162xf32>
    %2 = tpu.matmul %0, %1, %cst {dimension_numbers = #tpu.dot_dimension_numbers<[1], [0], [0], [1], [0, 0, 1, 1], [], []>} : vector<16x576xbf16>, vector<576x162xbf16>, vector<16x162xf32> -> vector<16x162xf32>
    %c0_3 = arith.constant 0 : index
    %c0_4 = arith.constant 0 : index
    %3 = vector.load %arg3[%c0_3, %c0_4] : memref<16x1xf32, #tpu.memory_space<vmem>>, vector<16x1xf32>
    %4 = vector.broadcast %3 : vector<16x1xf32> to vector<16x162xf32>
    %5 = arith.mulf %2, %4 : vector<16x162xf32>
    %c0_5 = arith.constant 0 : index
    %c0_6 = arith.constant 0 : index
    %6 = vector.load %arg4[%c0_5, %c0_6] : memref<16x1xf32, #tpu.memory_space<vmem>>, vector<16x1xf32>
    %7 = vector.broadcast %6 : vector<16x1xf32> to vector<16x162xf32>
    %8 = arith.addf %5, %7 : vector<16x162xf32>
    %9 = arith.truncf %8 : vector<16x162xf32> to vector<16x162xbf16>
    %c0_7 = arith.constant 0 : index
    %c0_8 = arith.constant 0 : index
    %10 = vector.load %arg5[%c0_7, %c0_8] : memref<16x162xbf16, #tpu.memory_space<vmem>>, vector<16x162xbf16>
    tpu.vector_store %arg5[%c0_7, %c0_8], %9 {strides = array<i32>} : memref<16x162xbf16, #tpu.memory_space<vmem>>, vector<16x162xbf16>,
    return
  }
  func.func @transform_0(%arg0: i32) -> (i32, i32) {
    %c0_i32 = arith.constant 0 : i32
    %c0_i32_0 = arith.constant 0 : i32
    %c0_i32_1 = arith.constant 0 : i32
    return %c0_i32, %c0_i32_0 : i32, i32
  }
  func.func @transform_1(%arg0: i32) -> (i32, i32) {
    %c0_i32 = arith.constant 0 : i32
    %c0_i32_0 = arith.constant 0 : i32
    return %c0_i32, %arg0 : i32, i32
  }
  func.func @transform_2(%arg0: i32) -> (i32, i32) {
    %c0_i32 = arith.constant 0 : i32
    %c0_i32_0 = arith.constant 0 : i32
    %c0_i32_1 = arith.constant 0 : i32
    return %c0_i32, %c0_i32_0 : i32, i32
  }
  func.func @transform_3(%arg0: i32) -> (i32, i32) {
    %c0_i32 = arith.constant 0 : i32
    %c0_i32_0 = arith.constant 0 : i32
    %c0_i32_1 = arith.constant 0 : i32
    return %c0_i32, %c0_i32_0 : i32, i32
  }
  func.func @transform_4(%arg0: i32) -> (i32, i32) {
    %c0_i32 = arith.constant 0 : i32
    %c0_i32_0 = arith.constant 0 : i32
    return %c0_i32, %arg0 : i32, i32
  }
}

module attributes {stable_mosaic.version = 11 : i64} {
  func.func @_conv_kernel(%arg0: i32, %arg1: memref<32x144xbf16, #tpu.memory_space<vmem>>, %arg2: memref<144x162xbf16, #tpu.memory_space<vmem>>, %arg3: memref<32x1xf32, #tpu.memory_space<vmem>>, %arg4: memref<32x1xf32, #tpu.memory_space<vmem>>, %arg5: memref<32x162xbf16, #tpu.memory_space<vmem>>) attributes {dimension_semantics = [#tpu.dimension_semantics<parallel>], iteration_bounds = array<i64: 1>, scalar_prefetch = 0 : i64, scratch_operands = 0 : i64, tpu.core_type = #tpu.core_type<tc>, window_params = [{pipeline_mode = #tpu.pipeline_mode<synchronous>, transform_indices = @transform_0, window_bounds = array<i64: 32, 144>}, {transform_indices = @transform_1, window_bounds = array<i64: 144, 162>}, {pipeline_mode = #tpu.pipeline_mode<synchronous>, transform_indices = @transform_2, window_bounds = array<i64: 32, 1>}, {pipeline_mode = #tpu.pipeline_mode<synchronous>, transform_indices = @transform_3, window_bounds = array<i64: 32, 1>}, {transform_indices = @transform_4, window_bounds = array<i64: 32, 162>}]} {
    %c0 = arith.constant 0 : index
    %c0_0 = arith.constant 0 : index
    %0 = vector.load %arg1[%c0, %c0_0] : memref<32x144xbf16, #tpu.memory_space<vmem>>, vector<32x144xbf16>
    %c0_1 = arith.constant 0 : index
    %c0_2 = arith.constant 0 : index
    %1 = vector.load %arg2[%c0_1, %c0_2] : memref<144x162xbf16, #tpu.memory_space<vmem>>, vector<144x162xbf16>
    %cst = arith.constant dense<0.000000e+00> : vector<32x162xf32>
    %2 = tpu.matmul %0, %1, %cst {dimension_numbers = #tpu.dot_dimension_numbers<[1], [0], [0], [1], [0, 0, 1, 1], [], []>} : vector<32x144xbf16>, vector<144x162xbf16>, vector<32x162xf32> -> vector<32x162xf32>
    %cst_3 = arith.constant 0.000000e+00 : f32
    %3 = vector.broadcast %cst_3 : f32 to vector<32x162xf32>
    %4 = arith.maximumf %2, %3 : vector<32x162xf32>
    %c0_4 = arith.constant 0 : index
    %c0_5 = arith.constant 0 : index
    %5 = vector.load %arg3[%c0_4, %c0_5] : memref<32x1xf32, #tpu.memory_space<vmem>>, vector<32x1xf32>
    %6 = vector.broadcast %5 : vector<32x1xf32> to vector<32x162xf32>
    %7 = arith.mulf %4, %6 : vector<32x162xf32>
    %c0_6 = arith.constant 0 : index
    %c0_7 = arith.constant 0 : index
    %8 = vector.load %arg4[%c0_6, %c0_7] : memref<32x1xf32, #tpu.memory_space<vmem>>, vector<32x1xf32>
    %9 = vector.broadcast %8 : vector<32x1xf32> to vector<32x162xf32>
    %10 = arith.addf %7, %9 : vector<32x162xf32>
    %11 = arith.truncf %10 : vector<32x162xf32> to vector<32x162xbf16>
    %c0_8 = arith.constant 0 : index
    %c0_9 = arith.constant 0 : index
    %12 = vector.load %arg5[%c0_8, %c0_9] : memref<32x162xbf16, #tpu.memory_space<vmem>>, vector<32x162xbf16>
    tpu.vector_store %arg5[%c0_8, %c0_9], %11 {strides = array<i32>} : memref<32x162xbf16, #tpu.memory_space<vmem>>, vector<32x162xbf16>,
    return
  }
  func.func @transform_0(%arg0: i32) -> (i32, i32) {
    %c0_i32 = arith.constant 0 : i32
    %c0_i32_0 = arith.constant 0 : i32
    %c0_i32_1 = arith.constant 0 : i32
    return %c0_i32, %c0_i32_0 : i32, i32
  }
  func.func @transform_1(%arg0: i32) -> (i32, i32) {
    %c0_i32 = arith.constant 0 : i32
    %c0_i32_0 = arith.constant 0 : i32
    return %c0_i32, %arg0 : i32, i32
  }
  func.func @transform_2(%arg0: i32) -> (i32, i32) {
    %c0_i32 = arith.constant 0 : i32
    %c0_i32_0 = arith.constant 0 : i32
    %c0_i32_1 = arith.constant 0 : i32
    return %c0_i32, %c0_i32_0 : i32, i32
  }
  func.func @transform_3(%arg0: i32) -> (i32, i32) {
    %c0_i32 = arith.constant 0 : i32
    %c0_i32_0 = arith.constant 0 : i32
    %c0_i32_1 = arith.constant 0 : i32
    return %c0_i32, %c0_i32_0 : i32, i32
  }
  func.func @transform_4(%arg0: i32) -> (i32, i32) {
    %c0_i32 = arith.constant 0 : i32
    %c0_i32_0 = arith.constant 0 : i32
    return %c0_i32, %arg0 : i32, i32
  }
}

module attributes {stable_mosaic.version = 11 : i64} {
  func.func @_conv_kernel(%arg0: i32, %arg1: memref<64x288xbf16, #tpu.memory_space<vmem>>, %arg2: memref<288x162xbf16, #tpu.memory_space<vmem>>, %arg3: memref<64x1xf32, #tpu.memory_space<vmem>>, %arg4: memref<64x1xf32, #tpu.memory_space<vmem>>, %arg5: memref<64x162xbf16, #tpu.memory_space<vmem>>) attributes {dimension_semantics = [#tpu.dimension_semantics<parallel>], iteration_bounds = array<i64: 1>, scalar_prefetch = 0 : i64, scratch_operands = 0 : i64, tpu.core_type = #tpu.core_type<tc>, window_params = [{pipeline_mode = #tpu.pipeline_mode<synchronous>, transform_indices = @transform_0, window_bounds = array<i64: 64, 288>}, {transform_indices = @transform_1, window_bounds = array<i64: 288, 162>}, {pipeline_mode = #tpu.pipeline_mode<synchronous>, transform_indices = @transform_2, window_bounds = array<i64: 64, 1>}, {pipeline_mode = #tpu.pipeline_mode<synchronous>, transform_indices = @transform_3, window_bounds = array<i64: 64, 1>}, {transform_indices = @transform_4, window_bounds = array<i64: 64, 162>}]} {
    %c0 = arith.constant 0 : index
    %c0_0 = arith.constant 0 : index
    %0 = vector.load %arg1[%c0, %c0_0] : memref<64x288xbf16, #tpu.memory_space<vmem>>, vector<64x288xbf16>
    %c0_1 = arith.constant 0 : index
    %c0_2 = arith.constant 0 : index
    %1 = vector.load %arg2[%c0_1, %c0_2] : memref<288x162xbf16, #tpu.memory_space<vmem>>, vector<288x162xbf16>
    %cst = arith.constant dense<0.000000e+00> : vector<64x162xf32>
    %2 = tpu.matmul %0, %1, %cst {dimension_numbers = #tpu.dot_dimension_numbers<[1], [0], [0], [1], [0, 0, 1, 1], [], []>} : vector<64x288xbf16>, vector<288x162xbf16>, vector<64x162xf32> -> vector<64x162xf32>
    %cst_3 = arith.constant 0.000000e+00 : f32
    %3 = vector.broadcast %cst_3 : f32 to vector<64x162xf32>
    %4 = arith.maximumf %2, %3 : vector<64x162xf32>
    %c0_4 = arith.constant 0 : index
    %c0_5 = arith.constant 0 : index
    %5 = vector.load %arg3[%c0_4, %c0_5] : memref<64x1xf32, #tpu.memory_space<vmem>>, vector<64x1xf32>
    %6 = vector.broadcast %5 : vector<64x1xf32> to vector<64x162xf32>
    %7 = arith.mulf %4, %6 : vector<64x162xf32>
    %c0_6 = arith.constant 0 : index
    %c0_7 = arith.constant 0 : index
    %8 = vector.load %arg4[%c0_6, %c0_7] : memref<64x1xf32, #tpu.memory_space<vmem>>, vector<64x1xf32>
    %9 = vector.broadcast %8 : vector<64x1xf32> to vector<64x162xf32>
    %10 = arith.addf %7, %9 : vector<64x162xf32>
    %11 = arith.truncf %10 : vector<64x162xf32> to vector<64x162xbf16>
    %c0_8 = arith.constant 0 : index
    %c0_9 = arith.constant 0 : index
    %12 = vector.load %arg5[%c0_8, %c0_9] : memref<64x162xbf16, #tpu.memory_space<vmem>>, vector<64x162xbf16>
    tpu.vector_store %arg5[%c0_8, %c0_9], %11 {strides = array<i32>} : memref<64x162xbf16, #tpu.memory_space<vmem>>, vector<64x162xbf16>,
    return
  }
  func.func @transform_0(%arg0: i32) -> (i32, i32) {
    %c0_i32 = arith.constant 0 : i32
    %c0_i32_0 = arith.constant 0 : i32
    %c0_i32_1 = arith.constant 0 : i32
    return %c0_i32, %c0_i32_0 : i32, i32
  }
  func.func @transform_1(%arg0: i32) -> (i32, i32) {
    %c0_i32 = arith.constant 0 : i32
    %c0_i32_0 = arith.constant 0 : i32
    return %c0_i32, %arg0 : i32, i32
  }
  func.func @transform_2(%arg0: i32) -> (i32, i32) {
    %c0_i32 = arith.constant 0 : i32
    %c0_i32_0 = arith.constant 0 : i32
    %c0_i32_1 = arith.constant 0 : i32
    return %c0_i32, %c0_i32_0 : i32, i32
  }
  func.func @transform_3(%arg0: i32) -> (i32, i32) {
    %c0_i32 = arith.constant 0 : i32
    %c0_i32_0 = arith.constant 0 : i32
    %c0_i32_1 = arith.constant 0 : i32
    return %c0_i32, %c0_i32_0 : i32, i32
  }
  func.func @transform_4(%arg0: i32) -> (i32, i32) {
    %c0_i32 = arith.constant 0 : i32
    %c0_i32_0 = arith.constant 0 : i32
    return %c0_i32, %arg0 : i32, i32
  }
}

module attributes {stable_mosaic.version = 11 : i64} {
  func.func @_conv_kernel(%arg0: i32, %arg1: memref<16x576xbf16, #tpu.memory_space<vmem>>, %arg2: memref<576x50xbf16, #tpu.memory_space<vmem>>, %arg3: memref<16x1xf32, #tpu.memory_space<vmem>>, %arg4: memref<16x1xf32, #tpu.memory_space<vmem>>, %arg5: memref<16x50xbf16, #tpu.memory_space<vmem>>) attributes {dimension_semantics = [#tpu.dimension_semantics<parallel>], iteration_bounds = array<i64: 1>, scalar_prefetch = 0 : i64, scratch_operands = 0 : i64, tpu.core_type = #tpu.core_type<tc>, window_params = [{pipeline_mode = #tpu.pipeline_mode<synchronous>, transform_indices = @transform_0, window_bounds = array<i64: 16, 576>}, {transform_indices = @transform_1, window_bounds = array<i64: 576, 50>}, {pipeline_mode = #tpu.pipeline_mode<synchronous>, transform_indices = @transform_2, window_bounds = array<i64: 16, 1>}, {pipeline_mode = #tpu.pipeline_mode<synchronous>, transform_indices = @transform_3, window_bounds = array<i64: 16, 1>}, {transform_indices = @transform_4, window_bounds = array<i64: 16, 50>}]} {
    %c0 = arith.constant 0 : index
    %c0_0 = arith.constant 0 : index
    %0 = vector.load %arg1[%c0, %c0_0] : memref<16x576xbf16, #tpu.memory_space<vmem>>, vector<16x576xbf16>
    %c0_1 = arith.constant 0 : index
    %c0_2 = arith.constant 0 : index
    %1 = vector.load %arg2[%c0_1, %c0_2] : memref<576x50xbf16, #tpu.memory_space<vmem>>, vector<576x50xbf16>
    %cst = arith.constant dense<0.000000e+00> : vector<16x50xf32>
    %2 = tpu.matmul %0, %1, %cst {dimension_numbers = #tpu.dot_dimension_numbers<[1], [0], [0], [1], [0, 0, 1, 1], [], []>} : vector<16x576xbf16>, vector<576x50xbf16>, vector<16x50xf32> -> vector<16x50xf32>
    %c0_3 = arith.constant 0 : index
    %c0_4 = arith.constant 0 : index
    %3 = vector.load %arg3[%c0_3, %c0_4] : memref<16x1xf32, #tpu.memory_space<vmem>>, vector<16x1xf32>
    %4 = vector.broadcast %3 : vector<16x1xf32> to vector<16x50xf32>
    %5 = arith.mulf %2, %4 : vector<16x50xf32>
    %c0_5 = arith.constant 0 : index
    %c0_6 = arith.constant 0 : index
    %6 = vector.load %arg4[%c0_5, %c0_6] : memref<16x1xf32, #tpu.memory_space<vmem>>, vector<16x1xf32>
    %7 = vector.broadcast %6 : vector<16x1xf32> to vector<16x50xf32>
    %8 = arith.addf %5, %7 : vector<16x50xf32>
    %9 = arith.truncf %8 : vector<16x50xf32> to vector<16x50xbf16>
    %c0_7 = arith.constant 0 : index
    %c0_8 = arith.constant 0 : index
    %10 = vector.load %arg5[%c0_7, %c0_8] : memref<16x50xbf16, #tpu.memory_space<vmem>>, vector<16x50xbf16>
    tpu.vector_store %arg5[%c0_7, %c0_8], %9 {strides = array<i32>} : memref<16x50xbf16, #tpu.memory_space<vmem>>, vector<16x50xbf16>,
    return
  }
  func.func @transform_0(%arg0: i32) -> (i32, i32) {
    %c0_i32 = arith.constant 0 : i32
    %c0_i32_0 = arith.constant 0 : i32
    %c0_i32_1 = arith.constant 0 : i32
    return %c0_i32, %c0_i32_0 : i32, i32
  }
  func.func @transform_1(%arg0: i32) -> (i32, i32) {
    %c0_i32 = arith.constant 0 : i32
    %c0_i32_0 = arith.constant 0 : i32
    return %c0_i32, %arg0 : i32, i32
  }
  func.func @transform_2(%arg0: i32) -> (i32, i32) {
    %c0_i32 = arith.constant 0 : i32
    %c0_i32_0 = arith.constant 0 : i32
    %c0_i32_1 = arith.constant 0 : i32
    return %c0_i32, %c0_i32_0 : i32, i32
  }
  func.func @transform_3(%arg0: i32) -> (i32, i32) {
    %c0_i32 = arith.constant 0 : i32
    %c0_i32_0 = arith.constant 0 : i32
    %c0_i32_1 = arith.constant 0 : i32
    return %c0_i32, %c0_i32_0 : i32, i32
  }
  func.func @transform_4(%arg0: i32) -> (i32, i32) {
    %c0_i32 = arith.constant 0 : i32
    %c0_i32_0 = arith.constant 0 : i32
    return %c0_i32, %arg0 : i32, i32
  }
}

module attributes {stable_mosaic.version = 11 : i64} {
  func.func @_head_kernel(%arg0: i32, %arg1: memref<16x50xbf16, #tpu.memory_space<vmem>>, %arg2: memref<32x16xbf16, #tpu.memory_space<vmem>>, %arg3: memref<32x1xf32, #tpu.memory_space<vmem>>, %arg4: memref<32x1xf32, #tpu.memory_space<vmem>>, %arg5: memref<50x2xf32, #tpu.memory_space<vmem>>, %arg6: memref<10x32xf32, #tpu.memory_space<vmem>>, %arg7: memref<10x1xf32, #tpu.memory_space<vmem>>, %arg8: memref<10x2xf32, #tpu.memory_space<vmem>>) attributes {dimension_semantics = [#tpu.dimension_semantics<arbitrary>], iteration_bounds = array<i64: 1>, scalar_prefetch = 0 : i64, scratch_operands = 0 : i64, tpu.core_type = #tpu.core_type<tc>, window_params = [{pipeline_mode = #tpu.pipeline_mode<synchronous>, transform_indices = @transform_0, window_bounds = array<i64: 16, 50>}, {pipeline_mode = #tpu.pipeline_mode<synchronous>, transform_indices = @transform_1, window_bounds = array<i64: 32, 16>}, {pipeline_mode = #tpu.pipeline_mode<synchronous>, transform_indices = @transform_2, window_bounds = array<i64: 32, 1>}, {pipeline_mode = #tpu.pipeline_mode<synchronous>, transform_indices = @transform_3, window_bounds = array<i64: 32, 1>}, {pipeline_mode = #tpu.pipeline_mode<synchronous>, transform_indices = @transform_4, window_bounds = array<i64: 50, 2>}, {pipeline_mode = #tpu.pipeline_mode<synchronous>, transform_indices = @transform_5, window_bounds = array<i64: 10, 32>}, {pipeline_mode = #tpu.pipeline_mode<synchronous>, transform_indices = @transform_6, window_bounds = array<i64: 10, 1>}, {pipeline_mode = #tpu.pipeline_mode<synchronous>, transform_indices = @transform_7, window_bounds = array<i64: 10, 2>}]} {
    %c0 = arith.constant 0 : index
    %c0_0 = arith.constant 0 : index
    %0 = vector.load %arg2[%c0, %c0_0] : memref<32x16xbf16, #tpu.memory_space<vmem>>, vector<32x16xbf16>
    %c0_1 = arith.constant 0 : index
    %c0_2 = arith.constant 0 : index
    %1 = vector.load %arg1[%c0_1, %c0_2] : memref<16x50xbf16, #tpu.memory_space<vmem>>, vector<16x50xbf16>
    %cst = arith.constant dense<0.000000e+00> : vector<32x50xf32>
    %2 = tpu.matmul %0, %1, %cst {dimension_numbers = #tpu.dot_dimension_numbers<[1], [0], [0], [1], [0, 0, 1, 1], [], []>} : vector<32x16xbf16>, vector<16x50xbf16>, vector<32x50xf32> -> vector<32x50xf32>
    %cst_3 = arith.constant 0.000000e+00 : f32
    %3 = vector.broadcast %cst_3 : f32 to vector<32x50xf32>
    %4 = arith.maximumf %2, %3 : vector<32x50xf32>
    %c0_4 = arith.constant 0 : index
    %c0_5 = arith.constant 0 : index
    %5 = vector.load %arg3[%c0_4, %c0_5] : memref<32x1xf32, #tpu.memory_space<vmem>>, vector<32x1xf32>
    %6 = vector.broadcast %5 : vector<32x1xf32> to vector<32x50xf32>
    %7 = arith.mulf %4, %6 : vector<32x50xf32>
    %c0_6 = arith.constant 0 : index
    %c0_7 = arith.constant 0 : index
    %8 = vector.load %arg4[%c0_6, %c0_7] : memref<32x1xf32, #tpu.memory_space<vmem>>, vector<32x1xf32>
    %9 = vector.broadcast %8 : vector<32x1xf32> to vector<32x50xf32>
    %10 = arith.addf %7, %9 : vector<32x50xf32>
    %c0_8 = arith.constant 0 : index
    %c0_9 = arith.constant 0 : index
    %11 = vector.load %arg5[%c0_8, %c0_9] : memref<50x2xf32, #tpu.memory_space<vmem>>, vector<50x2xf32>
    %cst_10 = arith.constant dense<0.000000e+00> : vector<32x2xf32>
    %12 = tpu.matmul %10, %11, %cst_10 {dimension_numbers = #tpu.dot_dimension_numbers<[1], [0], [0], [1], [0, 0, 1, 1], [], []>} : vector<32x50xf32>, vector<50x2xf32>, vector<32x2xf32> -> vector<32x2xf32>
    %c0_11 = arith.constant 0 : index
    %c0_12 = arith.constant 0 : index
    %13 = vector.load %arg6[%c0_11, %c0_12] : memref<10x32xf32, #tpu.memory_space<vmem>>, vector<10x32xf32>
    %cst_13 = arith.constant dense<0.000000e+00> : vector<10x2xf32>
    %14 = tpu.matmul %13, %12, %cst_13 {dimension_numbers = #tpu.dot_dimension_numbers<[1], [0], [0], [1], [0, 0, 1, 1], [], []>} : vector<10x32xf32>, vector<32x2xf32>, vector<10x2xf32> -> vector<10x2xf32>
    %c0_14 = arith.constant 0 : index
    %c0_15 = arith.constant 0 : index
    %15 = vector.load %arg7[%c0_14, %c0_15] : memref<10x1xf32, #tpu.memory_space<vmem>>, vector<10x1xf32>
    %16 = vector.broadcast %15 : vector<10x1xf32> to vector<10x2xf32>
    %17 = arith.addf %14, %16 : vector<10x2xf32>
    %cst_16 = arith.constant dense<0xFF800000> : vector<2xf32>
    %18 = vector.multi_reduction <maximumf>, %17, %cst_16 [0] : vector<10x2xf32> to vector<2xf32>
    %19 = vector.shape_cast %18 : vector<2xf32> to vector<1x2xf32>
    %20 = vector.broadcast %19 : vector<1x2xf32> to vector<10x2xf32>
    %21 = arith.subf %17, %20 : vector<10x2xf32>
    %22 = math.exp %21 : vector<10x2xf32>
    %cst_17 = arith.constant dense<0.000000e+00> : vector<2xf32>
    %23 = vector.multi_reduction <add>, %22, %cst_17 [0] : vector<10x2xf32> to vector<2xf32>
    %24 = vector.shape_cast %23 : vector<2xf32> to vector<1x2xf32>
    %25 = math.log %24 : vector<1x2xf32>
    %26 = vector.broadcast %25 : vector<1x2xf32> to vector<10x2xf32>
    %27 = arith.subf %21, %26 : vector<10x2xf32>
    %c0_18 = arith.constant 0 : index
    %c0_19 = arith.constant 0 : index
    %28 = vector.load %arg8[%c0_18, %c0_19] : memref<10x2xf32, #tpu.memory_space<vmem>>, vector<10x2xf32>
    tpu.vector_store %arg8[%c0_18, %c0_19], %27 {strides = array<i32>} : memref<10x2xf32, #tpu.memory_space<vmem>>, vector<10x2xf32>,
    return
  }
  func.func @transform_0(%arg0: i32) -> (i32, i32) {
    %c0_i32 = arith.constant 0 : i32
    %c0_i32_0 = arith.constant 0 : i32
    %c0_i32_1 = arith.constant 0 : i32
    return %c0_i32, %c0_i32_0 : i32, i32
  }
  func.func @transform_1(%arg0: i32) -> (i32, i32) {
    %c0_i32 = arith.constant 0 : i32
    %c0_i32_0 = arith.constant 0 : i32
    %c0_i32_1 = arith.constant 0 : i32
    return %c0_i32, %c0_i32_0 : i32, i32
  }
  func.func @transform_2(%arg0: i32) -> (i32, i32) {
    %c0_i32 = arith.constant 0 : i32
    %c0_i32_0 = arith.constant 0 : i32
    %c0_i32_1 = arith.constant 0 : i32
    return %c0_i32, %c0_i32_0 : i32, i32
  }
  func.func @transform_3(%arg0: i32) -> (i32, i32) {
    %c0_i32 = arith.constant 0 : i32
    %c0_i32_0 = arith.constant 0 : i32
    %c0_i32_1 = arith.constant 0 : i32
    return %c0_i32, %c0_i32_0 : i32, i32
  }
  func.func @transform_4(%arg0: i32) -> (i32, i32) {
    %c0_i32 = arith.constant 0 : i32
    %c0_i32_0 = arith.constant 0 : i32
    %c0_i32_1 = arith.constant 0 : i32
    return %c0_i32, %c0_i32_0 : i32, i32
  }
  func.func @transform_5(%arg0: i32) -> (i32, i32) {
    %c0_i32 = arith.constant 0 : i32
    %c0_i32_0 = arith.constant 0 : i32
    %c0_i32_1 = arith.constant 0 : i32
    return %c0_i32, %c0_i32_0 : i32, i32
  }
  func.func @transform_6(%arg0: i32) -> (i32, i32) {
    %c0_i32 = arith.constant 0 : i32
    %c0_i32_0 = arith.constant 0 : i32
    %c0_i32_1 = arith.constant 0 : i32
    return %c0_i32, %c0_i32_0 : i32, i32
  }
  func.func @transform_7(%arg0: i32) -> (i32, i32) {
    %c0_i32 = arith.constant 0 : i32
    %c0_i32_0 = arith.constant 0 : i32
    %c0_i32_1 = arith.constant 0 : i32
    return %c0_i32, %c0_i32_0 : i32, i32
  }
}

</mosaic_0001>

<llo_original>
// kernel: cifarnet_forward.10
$region0: #{cifarnet_forward.10}
  #allocation0 [shape = 'u32[]', space=smem, size = 0x4, offset = 0x4, fixed_abs, tag = 'smem constant byte address 0x4 - core index']
  #allocation1 [shape = 'u32[72,128]{1,0:T(1,128)}', space=vmem, size = 0x9000, scoped, tag = 'internal scratch']
  %s0 = inlined_call_operand.vmem [shape: bf16[16,27], index: 0, kind: input, shape index: {}]
  %s1 = inlined_call_operand.vmem [shape: bf16[27,2048], index: 1, kind: input, shape index: {}]
  %s2 = inlined_call_operand.vmem [shape: f32[16,1], index: 2, kind: input, shape index: {}]
  %s3 = inlined_call_operand.vmem [shape: f32[16,1], index: 3, kind: input, shape index: {}]
  %s4 = inlined_call_operand.vmem [shape: bf16[16,2048], index: 4, kind: output, shape index: {}]
  %s5 = sld [smem:[#allocation0]]
  $region91: #{cifarnet_forward.10} parent=0
    _
  %s7 = ssub.s32 1, %s5
  %s8 = scalar_select 0, %s7, %s5
  $region1: #{cifarnet_forward.10} parent=0
    #allocation2 [shape = 'u8[65536]{0}', space=vmem, size = 0x10000, scoped, tag = 'input window, operand 1']
    #allocation3 [shape = 'u8[32768]{0}', space=vmem, size = 0x8000, scoped, tag = 'output window, operand 0']
    loop: start=0, step=1, limit=6
    $region2: #{cifarnet_forward.10} parent=1 // loop_pre_header
      _
    $region3: #{cifarnet_forward.10} parent=1 // loop_header
      %s10 = sphi 0, %s14
      %p11 = scmp.ge.s32.totalorder %s10, 6
      %s18 = sphi 0, %s18
      %s20 = sphi 0, %s18
      %s21 = sphi 0, %s20
      %s35 = sphi 0, %s21
      %s41 = sphi 0, %s43
      %s44 = sphi 0, %s41
      %s45 = sphi 0, %s44
      %s61 = sphi 0, %s45
      %s65 = sphi 0, %s65
      %s67 = sphi 0, %s65
      %s68 = sphi 0, %s67
      %s82 = sphi 0, %s68
      %s86 = sphi 0, %s86
      %s88 = sphi 0, %s86
      %s89 = sphi 0, %s88
      %s103 = sphi 0, %s89
      %s109 = sphi 0, %s111
      %s112 = sphi 0, %s109
      %s113 = sphi 0, %s112
      %s129 = sphi 0, %s113
    $region4: #{cifarnet_forward.10} parent=1 // loop_header_branch
      %13 = sbr.rel (%p11) target = $region8
    $region5: #{cifarnet_forward.10} parent=1 // loop_body
      %s15 = ssub.s32 %s10, 1
      %s16 = ssub.s32 %s10, 2
      %s17 = sadd.s32 %s10, 1
      %s19 = sadd.s32 %s18, 1
      %p22 = scmp.eq.s32.totalorder %s10, 3
      %p23 = scmp.ne.s32.totalorder %s18, %s20
      %p24 = scmp.eq.s32.totalorder %s10, 0
      %p25 = por %p23, %p24
      %p26 = scmp.ne.s32.totalorder %s18, %s20
      %p27 = scmp.eq.s32.totalorder %s15, 3
      %p28 = por %p26, %p27
      %p29 = scmp.ne.s32.totalorder %s20, %s21
      %p30 = scmp.eq.s32.totalorder %s15, 0
      %p31 = por %p29, %p30
      %p32 = scmp.ne.s32.totalorder %s20, %s21
      %p33 = scmp.eq.s32.totalorder %s16, 3
      %p34 = por %p32, %p33
      %p36 = scmp.ne.s32.totalorder %s21, %s35
      %p37 = scmp.eq.s32.totalorder %s16, 0
      %p38 = por %p36, %p37
      %s39 = ssub.s32 %s10, %s17
      %p40 = scmp.eq.s32.totalorder %s39, 0
      %s42 = sadd.s32 %s41, 1
      %s43 = scalar_select %p40, %s41, %s42
      %p46 = pneg %p40
      %p47 = scmp.eq.s32.totalorder %s10, 3
      %p48 = por %p46, %p47
      %p49 = scmp.ne.s32.totalorder %s41, %s44
      %p50 = scmp.eq.s32.totalorder %s10, 0
      %p51 = por %p49, %p50
      %p52 = scmp.ne.s32.totalorder %s41, %s44
      %p53 = scmp.eq.s32.totalorder %s15, 3
      %p54 = por %p52, %p53
      %p55 = scmp.ne.s32.totalorder %s44, %s45
      %p56 = scmp.eq.s32.totalorder %s15, 0
      %p57 = por %p55, %p56
      %p58 = scmp.ne.s32.totalorder %s44, %s45
      %p59 = scmp.eq.s32.totalorder %s16, 3
      %p60 = por %p58, %p59
      %p62 = scmp.ne.s32.totalorder %s45, %s61
      %p63 = scmp.eq.s32.totalorder %s16, 0
      %p64 = por %p62, %p63
      %s66 = sadd.s32 %s65, 1
      %p69 = scmp.eq.s32.totalorder %s10, 3
      %p70 = scmp.ne.s32.totalorder %s65, %s67
      %p71 = scmp.eq.s32.totalorder %s10, 0
      %p72 = por %p70, %p71
      %p73 = scmp.ne.s32.totalorder %s65, %s67
      %p74 = scmp.eq.s32.totalorder %s15, 3
      %p75 = por %p73, %p74
      %p76 = scmp.ne.s32.totalorder %s67, %s68
      %p77 = scmp.eq.s32.totalorder %s15, 0
      %p78 = por %p76, %p77
      %p79 = scmp.ne.s32.totalorder %s67, %s68
      %p80 = scmp.eq.s32.totalorder %s16, 3
      %p81 = por %p79, %p80
      %p83 = scmp.ne.s32.totalorder %s68, %s82
      %p84 = scmp.eq.s32.totalorder %s16, 0
      %p85 = por %p83, %p84
      %s87 = sadd.s32 %s86, 1
      %p90 = scmp.eq.s32.totalorder %s10, 3
      %p91 = scmp.ne.s32.totalorder %s86, %s88
      %p92 = scmp.eq.s32.totalorder %s10, 0
      %p93 = por %p91, %p92
      %p94 = scmp.ne.s32.totalorder %s86, %s88
      %p95 = scmp.eq.s32.totalorder %s15, 3
      %p96 = por %p94, %p95
      %p97 = scmp.ne.s32.totalorder %s88, %s89
      %p98 = scmp.eq.s32.totalorder %s15, 0
      %p99 = por %p97, %p98
      %p100 = scmp.ne.s32.totalorder %s88, %s89
      %p101 = scmp.eq.s32.totalorder %s16, 3
      %p102 = por %p100, %p101
      %p104 = scmp.ne.s32.totalorder %s89, %s103
      %p105 = scmp.eq.s32.totalorder %s16, 0
      %p106 = por %p104, %p105
      %s107 = ssub.s32 %s10, %s17
      %p108 = scmp.eq.s32.totalorder %s107, 0
      %s110 = sadd.s32 %s109, 1
      %s111 = scalar_select %p108, %s109, %s110
      %p114 = pneg %p108
      %p115 = scmp.eq.s32.totalorder %s10, 3
      %p116 = por %p114, %p115
      %p117 = scmp.ne.s32.totalorder %s109, %s112
      %p118 = scmp.eq.s32.totalorder %s10, 0
      %p119 = por %p117, %p118
      %p120 = scmp.ne.s32.totalorder %s109, %s112
      %p121 = scmp.eq.s32.totalorder %s15, 3
      %p122 = por %p120, %p121
      %p123 = scmp.ne.s32.totalorder %s112, %s113
      %p124 = scmp.eq.s32.totalorder %s15, 0
      %p125 = por %p123, %p124
      %p126 = scmp.ne.s32.totalorder %s112, %s113
      %p127 = scmp.eq.s32.totalorder %s16, 3
      %p128 = por %p126, %p127
      %p130 = scmp.ne.s32.totalorder %s113, %s129
      %p131 = scmp.eq.s32.totalorder %s16, 0
      %p132 = por %p130, %p131
      %p133 = scmp.le.s32.totalorder 1, %s10
      %p134 = scmp.lt.s32.totalorder %s10, 5
      %p135 = pnand %p133, %p134
      %p136 = pneg %p135
      // Predicated region
      $region9: #{cifarnet_forward.10} parent=5 // pred_check
        _
      $region10: #{cifarnet_forward.10} parent=5 // pred_check_branch
        %138 = sbr.rel (%p135) target = $region12
      $region11: #{cifarnet_forward.10} parent=5 // pred_region
        %s139 = ssub.s32 %s10, 1
        // Predicated region
        $region13: #{cifarnet_forward.10} parent=11 // pred_check
          %p140 = pneg %p31
        $region14: #{cifarnet_forward.10} parent=11 // pred_check_branch
          %142 = sbr.rel (%p140) target = $region16
        $region15: #{cifarnet_forward.10} parent=11 // pred_region
          _
        $region16: #{cifarnet_forward.10} parent=11 // pred_fallthru
          _
        // Predicated region
        $region17: #{cifarnet_forward.10} parent=11 // pred_check
          %p143 = pneg %p78
        $region18: #{cifarnet_forward.10} parent=11 // pred_check_branch
          %145 = sbr.rel (%p143) target = $region20
        $region19: #{cifarnet_forward.10} parent=11 // pred_region
          _
        $region20: #{cifarnet_forward.10} parent=11 // pred_fallthru
          _
        // Predicated region
        $region21: #{cifarnet_forward.10} parent=11 // pred_check
          %p146 = pneg %p99
        $region22: #{cifarnet_forward.10} parent=11 // pred_check_branch
          %148 = sbr.rel (%p146) target = $region24
        $region23: #{cifarnet_forward.10} parent=11 // pred_region
          _
        $region24: #{cifarnet_forward.10} parent=11 // pred_fallthru
          _
      $region12: #{cifarnet_forward.10} parent=5 // pred_fallthru
        _
      %p149 = scmp.lt.s32.totalorder %s10, 4
      // Predicated region
      $region25: #{cifarnet_forward.10} parent=5 // pred_check
        %p150 = pneg %p149
      $region26: #{cifarnet_forward.10} parent=5 // pred_check_branch
        %152 = sbr.rel (%p150) target = $region28
      $region27: #{cifarnet_forward.10} parent=5 // pred_region
        // Predicated region
        $region29: #{cifarnet_forward.10} parent=27 // pred_check
          %p153 = pneg %p51
        $region30: #{cifarnet_forward.10} parent=27 // pred_check_branch
          %155 = sbr.rel (%p153) target = $region32
        $region31: #{cifarnet_forward.10} parent=27 // pred_region
          %s156 = sand.u32 %s41, 1
          %s157 = sand.u32 %s41, 1
          %s158 = smul.addr %s157, 64
          %s159 = scalar_lea.vmem [#allocation2], %s158
          %s160 = smul.u32 4, %s10
          %s161 = smul.addr %s160, 4
          %s162 = scalar_lea.vmem %s1, %s161
          // Predicated region
          $region33: #{cifarnet_forward.10} parent=31 // pred_check
            _
          $region34: #{cifarnet_forward.10} parent=31 // pred_check_branch
            %164 = sbr.rel (0) target = $region36
          $region35: #{cifarnet_forward.10} parent=31 // pred_region
            // Predicated region
            $region37: #{cifarnet_forward.10} parent=35 // pred_check
              _
            $region38: #{cifarnet_forward.10} parent=35 // pred_check_branch
              %166 = sbr.rel (0) target = $region40
            $region39: #{cifarnet_forward.10} parent=35 // pred_region
              loop: start=0, step=1, limit=1
              $region41: #{cifarnet_forward.10} parent=39 // loop_pre_header
                _
              $region42: #{cifarnet_forward.10} parent=39 // loop_header
                %s168 = sphi 0, %s172
                %p169 = scmp.ge.s32.totalorder %s168, 1
                %s173 = sphi %s162, %s162
                %s174 = sphi %s159, %s159
              $region43: #{cifarnet_forward.10} parent=39 // loop_header_branch
                %171 = sbr.rel (%p169) target = $region47
              $region44: #{cifarnet_forward.10} parent=39 // loop_body
                %v175 = vld [vmem:[%s173] sm:$0xff]
                %176 = vst [vmem:[%s174] sm:$0xff] %v175
                %v177 = vld [vmem:[%s173 + $0x8] sm:$0xff]
                %178 = vst [vmem:[%s174 + $0x8] sm:$0xff] %v177
                %v179 = vld [vmem:[%s173 + $0x40] sm:$0xff]
                %180 = vst [vmem:[%s174 + $0x10] sm:$0xff] %v179
                %v181 = vld [vmem:[%s173 + $0x48] sm:$0xff]
                %182 = vst [vmem:[%s174 + $0x18] sm:$0xff] %v181
                %v183 = vld [vmem:[%s173 + $0x80] sm:$0xff]
                %184 = vst [vmem:[%s174 + $0x20] sm:$0xff] %v183
                %v185 = vld [vmem:[%s173 + $0x88] sm:$0xff]
                %186 = vst [vmem:[%s174 + $0x28] sm:$0xff] %v185
                %v187 = vld [vmem:[%s173 + $0xc0] sm:$0xff]
                %188 = vst [vmem:[%s174 + $0x30] sm:$0xff] %v187
                %v189 = vld [vmem:[%s173 + $0xc8] sm:$0xff]
                %190 = vst [vmem:[%s174 + $0x38] sm:$0xff] %v189
              $region45: #{cifarnet_forward.10} parent=39 // loop_footer
                %s172 = sadd.s32 1, %s168
              $region46: #{cifarnet_forward.10} parent=39 // loop_footer_branch
                %167 = sbr.rel target = $region42
              $region47: #{cifarnet_forward.10} parent=39 // loop_exit
                _
            $region40: #{cifarnet_forward.10} parent=35 // pred_fallthru
              _
            // Predicated region
            $region48: #{cifarnet_forward.10} parent=35 // pred_check
              _
            $region49: #{cifarnet_forward.10} parent=35 // pred_check_branch
              %192 = sbr.rel target = $region51
            $region50: #{cifarnet_forward.10} parent=35 // pred_region
              _
            $region51: #{cifarnet_forward.10} parent=35 // pred_fallthru
              _
          $region36: #{cifarnet_forward.10} parent=31 // pred_fallthru
            _
          %193 = vnop
        $region32: #{cifarnet_forward.10} parent=27 // pred_fallthru
          _
      $region28: #{cifarnet_forward.10} parent=5 // pred_fallthru
        _
      %p194 = scmp.le.s32.totalorder 1, %s10
      %p195 = scmp.lt.s32.totalorder %s10, 5
      %p196 = pnand %p194, %p195
      %p197 = pneg %p196
      // Predicated region
      $region52: #{cifarnet_forward.10} parent=5 // pred_check
        _
      $region53: #{cifarnet_forward.10} parent=5 // pred_check_branch
        %199 = sbr.rel (%p196) target = $region55
      $region54: #{cifarnet_forward.10} parent=5 // pred_region
        %s200 = ssub.s32 %s10, 1
        %s201 = sand.u32 %s44, 1
        %s202 = sand.u32 %s44, 1
        %s203 = smul.addr %s202, 64
        %s204 = scalar_lea.vmem [#allocation2], %s203
        // Predicated region
        $region56: #{cifarnet_forward.10} parent=54 // pred_check
          %p205 = pneg %p57
        $region57: #{cifarnet_forward.10} parent=54 // pred_check_branch
          %207 = sbr.rel (%p205) target = $region59
        $region58: #{cifarnet_forward.10} parent=54 // pred_region
          _
        $region59: #{cifarnet_forward.10} parent=54 // pred_fallthru
          _
        %p208 = pneg %p31
        %p209 = pneg %p28
        %s210 = sand.u32 %s44, 1
        %s211 = sand.u32 %s44, 1
        %s212 = smul.addr %s211, 64
        %s213 = scalar_lea.vmem [#allocation2], %s212
        %p214 = pneg %p57
        %p215 = pneg %p54
        %p216 = pneg %p78
        %p217 = pneg %p75
        %p218 = pneg %p99
        %p219 = pneg %p96
        %p220 = pneg %p125
        %p221 = pneg %p122
        %s222 = sand.u32 %s112, 1
        %s223 = sand.u32 %s112, 1
        %s224 = smul.addr %s223, 32
        %s225 = scalar_lea.vmem [#allocation3], %s224
        %s226 = smul.u32 4, %s15
        %s227 = smul.u32 4, %s15
        %v229 = vld [vmem:[%s0] sm:$0xf]
        %v230 = vld [vmem:[%s0 + $0x4] sm:$0xf]
        %v231 = vld [vmem:[%s204] sm:$0xff]
        %v232 = vld [vmem:[%s204 + $0x8] sm:$0xff]
        %v233 = vld [vmem:[%s204 + $0x10] sm:$0xff]
        %v234 = vld [vmem:[%s204 + $0x18] sm:$0xff]
        %v235 = vld [vmem:[%s204 + $0x20] sm:$0xff]
        %v236 = vld [vmem:[%s204 + $0x28] sm:$0xff]
        %v237 = vld [vmem:[%s204 + $0x30] sm:$0x33]
        %v238 = vld [vmem:[%s204 + $0x38] sm:$0x33]
        %v241 = vunpack.c.l.b16 %v229
        %v242 = vunpack.c.l.b16 %v230
        %v243 = vpack.c.b16 %v242, %v241
        %v252 = vunpack.c.l.b16 %v231
        %v253 = vunpack.c.h.b16 %v231
        %v254 = vunpack.c.l.b16 %v232
        %v255 = vunpack.c.h.b16 %v232
        %v256 = vunpack.c.l.b16 %v233
        %v257 = vunpack.c.h.b16 %v233
        %v258 = vunpack.c.l.b16 %v234
        %v259 = vunpack.c.h.b16 %v234
        %v260 = vunpack.c.l.b16 %v235
        %v261 = vunpack.c.h.b16 %v235
        %v262 = vunpack.c.l.b16 %v236
        %v263 = vunpack.c.h.b16 %v236
        %v264 = vunpack.c.l.b16 %v237
        %v265 = vunpack.c.h.b16 %v237
        %v266 = vunpack.c.l.b16 %v238
        %v267 = vunpack.c.h.b16 %v238
        %v268 = vpack.c.b16 %v256, %v252
        %v269 = vpack.c.b16 %v257, %v253
        %v270 = vpack.c.b16 %v258, %v254
        %v271 = vpack.c.b16 %v259, %v255
        %v272 = vpack.c.b16 %v264, %v260
        %v273 = vpack.c.b16 %v265, %v261
        %v274 = vpack.c.b16 %v266, %v262
        %v275 = vpack.c.b16 %v267, %v263
        %vm280 = vcmask 220160
        %v282 = vsel %vm280, %v243, 0
        %vm284 = vcmask 1044480
        %vm285 = vcmask 1045504
        %v286 = vsel %vm284, 4294967295, 65535
        %v287 = vsel %vm285, %v286, 0
        %v289 = vand.u32 %v272, %v287
        %v292 = vand.u32 %v273, %v287
        %v295 = vand.u32 %v274, %v287
        %v298 = vand.u32 %v275, %v287
        %300 = vmatpush.bf16.msra.mxu0 0
        %301 = vmatpush.bf16.msra.mxu0 0
        %302 = vmatpush.bf16.msra.mxu0 0
        %303 = vmatpush.bf16.msra.mxu0 0
        %304 = vmatpush.bf16.msra.mxu0 0
        %305 = vmatpush.bf16.msra.mxu0 0
        %306 = vmatpush.bf16.msra.mxu0 %v289
        %307 = vmatpush.bf16.msra.mxu0 %v268
        %308 = vmatmul.bf16.gmra.mxu0 %v282
        %v309 = vpop.f32.mrf.mxu0
        %v310 = vadd.f32 0.0, %v309
        %v311 = vpop.f32.mrf.mxu0
        %v312 = vadd.f32 0.0, %v311
        %313 = vdwg.mxu0
        %314 = vmatpush.bf16.msra.mxu0 0
        %315 = vmatpush.bf16.msra.mxu0 0
        %316 = vmatpush.bf16.msra.mxu0 0
        %317 = vmatpush.bf16.msra.mxu0 0
        %318 = vmatpush.bf16.msra.mxu0 0
        %319 = vmatpush.bf16.msra.mxu0 0
        %320 = vmatpush.bf16.msra.mxu0 %v292
        %321 = vmatpush.bf16.msra.mxu0 %v269
        %322 = vmatmul.bf16.gmra.mxu0 %v282
        %v323 = vpop.f32.mrf.mxu0
        %v324 = vadd.f32 0.0, %v323
        %v325 = vpop.f32.mrf.mxu0
        %v326 = vadd.f32 0.0, %v325
        %327 = vdwg.mxu0
        %328 = vmatpush.bf16.msra.mxu0 0
        %329 = vmatpush.bf16.msra.mxu0 0
        %330 = vmatpush.bf16.msra.mxu0 0
        %331 = vmatpush.bf16.msra.mxu0 0
        %332 = vmatpush.bf16.msra.mxu0 0
        %333 = vmatpush.bf16.msra.mxu0 0
        %334 = vmatpush.bf16.msra.mxu0 %v295
        %335 = vmatpush.bf16.msra.mxu0 %v270
        %336 = vmatmul.bf16.gmra.mxu0 %v282
        %v337 = vpop.f32.mrf.mxu0
        %v338 = vadd.f32 0.0, %v337
        %v339 = vpop.f32.mrf.mxu0
        %v340 = vadd.f32 0.0, %v339
        %341 = vdwg.mxu0
        %342 = vmatpush.bf16.msra.mxu0 0
        %343 = vmatpush.bf16.msra.mxu0 0
        %344 = vmatpush.bf16.msra.mxu0 0
        %345 = vmatpush.bf16.msra.mxu0 0
        %346 = vmatpush.bf16.msra.mxu0 0
        %347 = vmatpush.bf16.msra.mxu0 0
        %348 = vmatpush.bf16.msra.mxu0 %v298
        %349 = vmatpush.bf16.msra.mxu0 %v271
        %350 = vmatmul.bf16.gmra.mxu0 %v282
        %v351 = vpop.f32.mrf.mxu0
        %v352 = vadd.f32 0.0, %v351
        %v353 = vpop.f32.mrf.mxu0
        %v354 = vadd.f32 0.0, %v353
        %355 = vdwg.mxu0
        %v356 = vmax.f32 %v310, 0.0
        %v357 = vmax.f32 %v324, 0.0
        %v358 = vmax.f32 %v338, 0.0
        %v359 = vmax.f32 %v352, 0.0
        %v360 = vmax.f32 %v312, 0.0
        %v361 = vmax.f32 %v326, 0.0
        %v362 = vmax.f32 %v340, 0.0
        %v363 = vmax.f32 %v354, 0.0
        %v364 = vld [vmem:[%s2] sm:$0xff]
        %v365 = vld [vmem:[%s2 + $0x8] sm:$0xff]
        %367 = vset.pattern.permute.xlu0 0
        %368 = vperm.xlu0 %367, %v364
        %v369 = vpop.permute.xlu0 %368
        %372 = vset.pattern.permute.xlu0 0
        %373 = vperm.xlu0 %372, %v365
        %v374 = vpop.permute.xlu0 %373
        %v376 = vmul.f32 %v356, %v369
        %v377 = vmul.f32 %v357, %v369
        %v378 = vmul.f32 %v358, %v369
        %v379 = vmul.f32 %v359, %v369
        %v380 = vmul.f32 %v360, %v374
        %v381 = vmul.f32 %v361, %v374
        %v382 = vmul.f32 %v362, %v374
        %v383 = vmul.f32 %v363, %v374
        %v384 = vld [vmem:[%s3] sm:$0xff]
        %v385 = vld [vmem:[%s3 + $0x8] sm:$0xff]
        %387 = vset.pattern.permute.xlu0 0
        %388 = vperm.xlu0 %387, %v384
        %v389 = vpop.permute.xlu0 %388
        %392 = vset.pattern.permute.xlu0 0
        %393 = vperm.xlu0 %392, %v385
        %v394 = vpop.permute.xlu0 %393
        %v396 = vadd.f32 %v376, %v389
        %v397 = vadd.f32 %v377, %v389
        %v398 = vadd.f32 %v378, %v389
        %v399 = vadd.f32 %v379, %v389
        %v400 = vadd.f32 %v380, %v394
        %v401 = vadd.f32 %v381, %v394
        %v402 = vadd.f32 %v382, %v394
        %v403 = vadd.f32 %v383, %v394
        %v404 = vpack.c.bf16 %v397, %v396
        %v405 = vpack.c.bf16 %v399, %v398
        %v406 = vpack.c.bf16 %v401, %v400
        %v407 = vpack.c.bf16 %v403, %v402
        %408 = vst [vmem:[%s225] sm:$0xff] %v404
        %409 = vst [vmem:[%s225 + $0x8] sm:$0xff] %v405
        %410 = vst [vmem:[%s225 + $0x10] sm:$0xff] %v406
        %411 = vst [vmem:[%s225 + $0x18] sm:$0xff] %v407
        %s412 = sand.u32 %s112, 1
        %s413 = sand.u32 %s112, 1
        %s414 = smul.addr %s413, 32
        %s415 = scalar_lea.vmem [#allocation3], %s414
        // Predicated region
        $region60: #{cifarnet_forward.10} parent=54 // pred_check
          %p416 = pneg %p122
        $region61: #{cifarnet_forward.10} parent=54 // pred_check_branch
          %418 = sbr.rel (%p416) target = $region63
        $region62: #{cifarnet_forward.10} parent=54 // pred_region
          %s419 = smul.u32 4, %s15
          %s420 = smul.addr %s419, 4
          %s421 = scalar_lea.vmem %s4, %s420
          // Predicated region
          $region64: #{cifarnet_forward.10} parent=62 // pred_check
            _
          $region65: #{cifarnet_forward.10} parent=62 // pred_check_branch
            %423 = sbr.rel (0) target = $region67
          $region66: #{cifarnet_forward.10} parent=62 // pred_region
            // Predicated region
            $region68: #{cifarnet_forward.10} parent=66 // pred_check
              _
            $region69: #{cifarnet_forward.10} parent=66 // pred_check_branch
              %425 = sbr.rel (0) target = $region71
            $region70: #{cifarnet_forward.10} parent=66 // pred_region
              loop: start=0, step=1, limit=1
              $region72: #{cifarnet_forward.10} parent=70 // loop_pre_header
                _
              $region73: #{cifarnet_forward.10} parent=70 // loop_header
                %s427 = sphi 0, %s431
                %p428 = scmp.ge.s32.totalorder %s427, 1
                %s432 = sphi %s415, %s415
                %s433 = sphi %s421, %s421
              $region74: #{cifarnet_forward.10} parent=70 // loop_header_branch
                %430 = sbr.rel (%p428) target = $region78
              $region75: #{cifarnet_forward.10} parent=70 // loop_body
                %v434 = vld [vmem:[%s432] sm:$0xff]
                %435 = vst [vmem:[%s433] sm:$0xff] %v434
                %v436 = vld [vmem:[%s432 + $0x8] sm:$0xff]
                %437 = vst [vmem:[%s433 + $0x8] sm:$0xff] %v436
                %v438 = vld [vmem:[%s432 + $0x10] sm:$0xff]
                %439 = vst [vmem:[%s433 + $0x40] sm:$0xff] %v438
                %v440 = vld [vmem:[%s432 + $0x18] sm:$0xff]
                %441 = vst [vmem:[%s433 + $0x48] sm:$0xff] %v440
              $region76: #{cifarnet_forward.10} parent=70 // loop_footer
                %s431 = sadd.s32 1, %s427
              $region77: #{cifarnet_forward.10} parent=70 // loop_footer_branch
                %426 = sbr.rel target = $region73
              $region78: #{cifarnet_forward.10} parent=70 // loop_exit
                _
            $region71: #{cifarnet_forward.10} parent=66 // pred_fallthru
              _
            // Predicated region
            $region79: #{cifarnet_forward.10} parent=66 // pred_check
              _
            $region80: #{cifarnet_forward.10} parent=66 // pred_check_branch
              %443 = sbr.rel target = $region82
            $region81: #{cifarnet_forward.10} parent=66 // pred_region
              _
            $region82: #{cifarnet_forward.10} parent=66 // pred_fallthru
              _
          $region67: #{cifarnet_forward.10} parent=62 // pred_fallthru
            _
          %444 = vnop
        $region63: #{cifarnet_forward.10} parent=54 // pred_fallthru
          _
      $region55: #{cifarnet_forward.10} parent=5 // pred_fallthru
        _
      %p445 = scmp.le.s32.totalorder 2, %s10
      // Predicated region
      $region83: #{cifarnet_forward.10} parent=5 // pred_check
        %p446 = pneg %p445
      $region84: #{cifarnet_forward.10} parent=5 // pred_check_branch
        %448 = sbr.rel (%p446) target = $region86
      $region85: #{cifarnet_forward.10} parent=5 // pred_region
        %s449 = ssub.s32 %s10, 2
        // Predicated region
        $region87: #{cifarnet_forward.10} parent=85 // pred_check
          %p450 = pneg %p128
        $region88: #{cifarnet_forward.10} parent=85 // pred_check_branch
          %452 = sbr.rel (%p450) target = $region90
        $region89: #{cifarnet_forward.10} parent=85 // pred_region
          %s453 = sand.u32 %s113, 1
          %s454 = sand.u32 %s113, 1
          %s455 = smul.addr %s454, 32
          %s456 = scalar_lea.vmem [#allocation3], %s455
        $region90: #{cifarnet_forward.10} parent=85 // pred_fallthru
          _
      $region86: #{cifarnet_forward.10} parent=5 // pred_fallthru
        _
    $region6: #{cifarnet_forward.10} parent=1 // loop_footer
      %s14 = sadd.s32 1, %s10
    $region7: #{cifarnet_forward.10} parent=1 // loop_footer_branch
      %9 = sbr.rel target = $region3
    $region8: #{cifarnet_forward.10} parent=1 // loop_exit
      _

// kernel: cifarnet_forward.11
$region0: #{cifarnet_forward.11}
  #allocation0 [shape = 'u32[]', space=smem, size = 0x4, offset = 0x4, fixed_abs, tag = 'smem constant byte address 0x4 - core index']
  #allocation1 [shape = 'u32[72,128]{1,0:T(1,128)}', space=vmem, size = 0x9000, scoped, tag = 'internal scratch']
  %s0 = inlined_call_operand.vmem [shape: bf16[32,144], index: 0, kind: input, shape index: {}]
  %s1 = inlined_call_operand.vmem [shape: bf16[144,2048], index: 1, kind: input, shape index: {}]
  %s2 = inlined_call_operand.vmem [shape: f32[32,1], index: 2, kind: input, shape index: {}]
  %s3 = inlined_call_operand.vmem [shape: f32[32,1], index: 3, kind: input, shape index: {}]
  %s4 = inlined_call_operand.vmem [shape: bf16[32,2048], index: 4, kind: output, shape index: {}]
  %s5 = sld [smem:[#allocation0]]
  $region91: #{cifarnet_forward.11} parent=0
    _
  %s7 = ssub.s32 1, %s5
  %s8 = scalar_select 0, %s7, %s5
  $region1: #{cifarnet_forward.11} parent=0
    #allocation2 [shape = 'u8[294912]{0}', space=vmem, size = 0x48000, scoped, tag = 'input window, operand 1']
    #allocation3 [shape = 'u8[65536]{0}', space=vmem, size = 0x10000, scoped, tag = 'output window, operand 0']
    loop: start=0, step=1, limit=6
    $region2: #{cifarnet_forward.11} parent=1 // loop_pre_header
      _
    $region3: #{cifarnet_forward.11} parent=1 // loop_header
      %s10 = sphi 0, %s14
      %p11 = scmp.ge.s32.totalorder %s10, 6
      %s18 = sphi 0, %s18
      %s20 = sphi 0, %s18
      %s21 = sphi 0, %s20
      %s35 = sphi 0, %s21
      %s41 = sphi 0, %s43
      %s44 = sphi 0, %s41
      %s45 = sphi 0, %s44
      %s61 = sphi 0, %s45
      %s65 = sphi 0, %s65
      %s67 = sphi 0, %s65
      %s68 = sphi 0, %s67
      %s82 = sphi 0, %s68
      %s86 = sphi 0, %s86
      %s88 = sphi 0, %s86
      %s89 = sphi 0, %s88
      %s103 = sphi 0, %s89
      %s109 = sphi 0, %s111
      %s112 = sphi 0, %s109
      %s113 = sphi 0, %s112
      %s129 = sphi 0, %s113
    $region4: #{cifarnet_forward.11} parent=1 // loop_header_branch
      %13 = sbr.rel (%p11) target = $region8
    $region5: #{cifarnet_forward.11} parent=1 // loop_body
      %s15 = ssub.s32 %s10, 1
      %s16 = ssub.s32 %s10, 2
      %s17 = sadd.s32 %s10, 1
      %s19 = sadd.s32 %s18, 1
      %p22 = scmp.eq.s32.totalorder %s10, 3
      %p23 = scmp.ne.s32.totalorder %s18, %s20
      %p24 = scmp.eq.s32.totalorder %s10, 0
      %p25 = por %p23, %p24
      %p26 = scmp.ne.s32.totalorder %s18, %s20
      %p27 = scmp.eq.s32.totalorder %s15, 3
      %p28 = por %p26, %p27
      %p29 = scmp.ne.s32.totalorder %s20, %s21
      %p30 = scmp.eq.s32.totalorder %s15, 0
      %p31 = por %p29, %p30
      %p32 = scmp.ne.s32.totalorder %s20, %s21
      %p33 = scmp.eq.s32.totalorder %s16, 3
      %p34 = por %p32, %p33
      %p36 = scmp.ne.s32.totalorder %s21, %s35
      %p37 = scmp.eq.s32.totalorder %s16, 0
      %p38 = por %p36, %p37
      %s39 = ssub.s32 %s10, %s17
      %p40 = scmp.eq.s32.totalorder %s39, 0
      %s42 = sadd.s32 %s41, 1
      %s43 = scalar_select %p40, %s41, %s42
      %p46 = pneg %p40
      %p47 = scmp.eq.s32.totalorder %s10, 3
      %p48 = por %p46, %p47
      %p49 = scmp.ne.s32.totalorder %s41, %s44
      %p50 = scmp.eq.s32.totalorder %s10, 0
      %p51 = por %p49, %p50
      %p52 = scmp.ne.s32.totalorder %s41, %s44
      %p53 = scmp.eq.s32.totalorder %s15, 3
      %p54 = por %p52, %p53
      %p55 = scmp.ne.s32.totalorder %s44, %s45
      %p56 = scmp.eq.s32.totalorder %s15, 0
      %p57 = por %p55, %p56
      %p58 = scmp.ne.s32.totalorder %s44, %s45
      %p59 = scmp.eq.s32.totalorder %s16, 3
      %p60 = por %p58, %p59
      %p62 = scmp.ne.s32.totalorder %s45, %s61
      %p63 = scmp.eq.s32.totalorder %s16, 0
      %p64 = por %p62, %p63
      %s66 = sadd.s32 %s65, 1
      %p69 = scmp.eq.s32.totalorder %s10, 3
      %p70 = scmp.ne.s32.totalorder %s65, %s67
      %p71 = scmp.eq.s32.totalorder %s10, 0
      %p72 = por %p70, %p71
      %p73 = scmp.ne.s32.totalorder %s65, %s67
      %p74 = scmp.eq.s32.totalorder %s15, 3
      %p75 = por %p73, %p74
      %p76 = scmp.ne.s32.totalorder %s67, %s68
      %p77 = scmp.eq.s32.totalorder %s15, 0
      %p78 = por %p76, %p77
      %p79 = scmp.ne.s32.totalorder %s67, %s68
      %p80 = scmp.eq.s32.totalorder %s16, 3
      %p81 = por %p79, %p80
      %p83 = scmp.ne.s32.totalorder %s68, %s82
      %p84 = scmp.eq.s32.totalorder %s16, 0
      %p85 = por %p83, %p84
      %s87 = sadd.s32 %s86, 1
      %p90 = scmp.eq.s32.totalorder %s10, 3
      %p91 = scmp.ne.s32.totalorder %s86, %s88
      %p92 = scmp.eq.s32.totalorder %s10, 0
      %p93 = por %p91, %p92
      %p94 = scmp.ne.s32.totalorder %s86, %s88
      %p95 = scmp.eq.s32.totalorder %s15, 3
      %p96 = por %p94, %p95
      %p97 = scmp.ne.s32.totalorder %s88, %s89
      %p98 = scmp.eq.s32.totalorder %s15, 0
      %p99 = por %p97, %p98
      %p100 = scmp.ne.s32.totalorder %s88, %s89
      %p101 = scmp.eq.s32.totalorder %s16, 3
      %p102 = por %p100, %p101
      %p104 = scmp.ne.s32.totalorder %s89, %s103
      %p105 = scmp.eq.s32.totalorder %s16, 0
      %p106 = por %p104, %p105
      %s107 = ssub.s32 %s10, %s17
      %p108 = scmp.eq.s32.totalorder %s107, 0
      %s110 = sadd.s32 %s109, 1
      %s111 = scalar_select %p108, %s109, %s110
      %p114 = pneg %p108
      %p115 = scmp.eq.s32.totalorder %s10, 3
      %p116 = por %p114, %p115
      %p117 = scmp.ne.s32.totalorder %s109, %s112
      %p118 = scmp.eq.s32.totalorder %s10, 0
      %p119 = por %p117, %p118
      %p120 = scmp.ne.s32.totalorder %s109, %s112
      %p121 = scmp.eq.s32.totalorder %s15, 3
      %p122 = por %p120, %p121
      %p123 = scmp.ne.s32.totalorder %s112, %s113
      %p124 = scmp.eq.s32.totalorder %s15, 0
      %p125 = por %p123, %p124
      %p126 = scmp.ne.s32.totalorder %s112, %s113
      %p127 = scmp.eq.s32.totalorder %s16, 3
      %p128 = por %p126, %p127
      %p130 = scmp.ne.s32.totalorder %s113, %s129
      %p131 = scmp.eq.s32.totalorder %s16, 0
      %p132 = por %p130, %p131
      %p133 = scmp.le.s32.totalorder 1, %s10
      %p134 = scmp.lt.s32.totalorder %s10, 5
      %p135 = pnand %p133, %p134
      %p136 = pneg %p135
      // Predicated region
      $region9: #{cifarnet_forward.11} parent=5 // pred_check
        _
      $region10: #{cifarnet_forward.11} parent=5 // pred_check_branch
        %138 = sbr.rel (%p135) target = $region12
      $region11: #{cifarnet_forward.11} parent=5 // pred_region
        %s139 = ssub.s32 %s10, 1
        // Predicated region
        $region13: #{cifarnet_forward.11} parent=11 // pred_check
          %p140 = pneg %p31
        $region14: #{cifarnet_forward.11} parent=11 // pred_check_branch
          %142 = sbr.rel (%p140) target = $region16
        $region15: #{cifarnet_forward.11} parent=11 // pred_region
          _
        $region16: #{cifarnet_forward.11} parent=11 // pred_fallthru
          _
        // Predicated region
        $region17: #{cifarnet_forward.11} parent=11 // pred_check
          %p143 = pneg %p78
        $region18: #{cifarnet_forward.11} parent=11 // pred_check_branch
          %145 = sbr.rel (%p143) target = $region20
        $region19: #{cifarnet_forward.11} parent=11 // pred_region
          _
        $region20: #{cifarnet_forward.11} parent=11 // pred_fallthru
          _
        // Predicated region
        $region21: #{cifarnet_forward.11} parent=11 // pred_check
          %p146 = pneg %p99
        $region22: #{cifarnet_forward.11} parent=11 // pred_check_branch
          %148 = sbr.rel (%p146) target = $region24
        $region23: #{cifarnet_forward.11} parent=11 // pred_region
          _
        $region24: #{cifarnet_forward.11} parent=11 // pred_fallthru
          _
      $region12: #{cifarnet_forward.11} parent=5 // pred_fallthru
        _
      %p149 = scmp.lt.s32.totalorder %s10, 4
      // Predicated region
      $region25: #{cifarnet_forward.11} parent=5 // pred_check
        %p150 = pneg %p149
      $region26: #{cifarnet_forward.11} parent=5 // pred_check_branch
        %152 = sbr.rel (%p150) target = $region28
      $region27: #{cifarnet_forward.11} parent=5 // pred_region
        // Predicated region
        $region29: #{cifarnet_forward.11} parent=27 // pred_check
          %p153 = pneg %p51
        $region30: #{cifarnet_forward.11} parent=27 // pred_check_branch
          %155 = sbr.rel (%p153) target = $region32
        $region31: #{cifarnet_forward.11} parent=27 // pred_region
          %s156 = sand.u32 %s41, 1
          %s157 = sand.u32 %s41, 1
          %s158 = smul.addr %s157, 288
          %s159 = scalar_lea.vmem [#allocation2], %s158
          %s160 = smul.u32 4, %s10
          %s161 = smul.addr %s160, 4
          %s162 = scalar_lea.vmem %s1, %s161
          // Predicated region
          $region33: #{cifarnet_forward.11} parent=31 // pred_check
            _
          $region34: #{cifarnet_forward.11} parent=31 // pred_check_branch
            %164 = sbr.rel (0) target = $region36
          $region35: #{cifarnet_forward.11} parent=31 // pred_region
            // Predicated region
            $region37: #{cifarnet_forward.11} parent=35 // pred_check
              _
            $region38: #{cifarnet_forward.11} parent=35 // pred_check_branch
              %166 = sbr.rel (0) target = $region40
            $region39: #{cifarnet_forward.11} parent=35 // pred_region
              loop: start=0, step=1, limit=1
              $region41: #{cifarnet_forward.11} parent=39 // loop_pre_header
                _
              $region42: #{cifarnet_forward.11} parent=39 // loop_header
                %s168 = sphi 0, %s172
                %p169 = scmp.ge.s32.totalorder %s168, 1
                %s173 = sphi %s162, %s162
                %s174 = sphi %s159, %s159
              $region43: #{cifarnet_forward.11} parent=39 // loop_header_branch
                %171 = sbr.rel (%p169) target = $region47
              $region44: #{cifarnet_forward.11} parent=39 // loop_body
                %v175 = vld [vmem:[%s173] sm:$0xff]
                %176 = vst [vmem:[%s174] sm:$0xff] %v175
                %v177 = vld [vmem:[%s173 + $0x8] sm:$0xff]
                %178 = vst [vmem:[%s174 + $0x8] sm:$0xff] %v177
                %v179 = vld [vmem:[%s173 + $0x40] sm:$0xff]
                %180 = vst [vmem:[%s174 + $0x10] sm:$0xff] %v179
                %v181 = vld [vmem:[%s173 + $0x48] sm:$0xff]
                %182 = vst [vmem:[%s174 + $0x18] sm:$0xff] %v181
                %v183 = vld [vmem:[%s173 + $0x80] sm:$0xff]
                %184 = vst [vmem:[%s174 + $0x20] sm:$0xff] %v183
                %v185 = vld [vmem:[%s173 + $0x88] sm:$0xff]
                %186 = vst [vmem:[%s174 + $0x28] sm:$0xff] %v185
                %v187 = vld [vmem:[%s173 + $0xc0] sm:$0xff]
                %188 = vst [vmem:[%s174 + $0x30] sm:$0xff] %v187
                %v189 = vld [vmem:[%s173 + $0xc8] sm:$0xff]
                %190 = vst [vmem:[%s174 + $0x38] sm:$0xff] %v189
                %v191 = vld [vmem:[%s173 + $0x100] sm:$0xff]
                %192 = vst [vmem:[%s174 + $0x40] sm:$0xff] %v191
                %v193 = vld [vmem:[%s173 + $0x108] sm:$0xff]
                %194 = vst [vmem:[%s174 + $0x48] sm:$0xff] %v193
                %v195 = vld [vmem:[%s173 + $0x140] sm:$0xff]
                %196 = vst [vmem:[%s174 + $0x50] sm:$0xff] %v195
                %v197 = vld [vmem:[%s173 + $0x148] sm:$0xff]
                %198 = vst [vmem:[%s174 + $0x58] sm:$0xff] %v197
                %v199 = vld [vmem:[%s173 + $0x180] sm:$0xff]
                %200 = vst [vmem:[%s174 + $0x60] sm:$0xff] %v199
                %v201 = vld [vmem:[%s173 + $0x188] sm:$0xff]
                %202 = vst [vmem:[%s174 + $0x68] sm:$0xff] %v201
                %v203 = vld [vmem:[%s173 + $0x1c0] sm:$0xff]
                %204 = vst [vmem:[%s174 + $0x70] sm:$0xff] %v203
                %v205 = vld [vmem:[%s173 + $0x1c8] sm:$0xff]
                %206 = vst [vmem:[%s174 + $0x78] sm:$0xff] %v205
                %v207 = vld [vmem:[%s173 + $0x200] sm:$0xff]
                %208 = vst [vmem:[%s174 + $0x80] sm:$0xff] %v207
                %v209 = vld [vmem:[%s173 + $0x208] sm:$0xff]
                %210 = vst [vmem:[%s174 + $0x88] sm:$0xff] %v209
                %v211 = vld [vmem:[%s173 + $0x240] sm:$0xff]
                %212 = vst [vmem:[%s174 + $0x90] sm:$0xff] %v211
                %v213 = vld [vmem:[%s173 + $0x248] sm:$0xff]
                %214 = vst [vmem:[%s174 + $0x98] sm:$0xff] %v213
                %v215 = vld [vmem:[%s173 + $0x280] sm:$0xff]
                %216 = vst [vmem:[%s174 + $0xa0] sm:$0xff] %v215
                %v217 = vld [vmem:[%s173 + $0x288] sm:$0xff]
                %218 = vst [vmem:[%s174 + $0xa8] sm:$0xff] %v217
                %v219 = vld [vmem:[%s173 + $0x2c0] sm:$0xff]
                %220 = vst [vmem:[%s174 + $0xb0] sm:$0xff] %v219
                %v221 = vld [vmem:[%s173 + $0x2c8] sm:$0xff]
                %222 = vst [vmem:[%s174 + $0xb8] sm:$0xff] %v221
                %v223 = vld [vmem:[%s173 + $0x300] sm:$0xff]
                %224 = vst [vmem:[%s174 + $0xc0] sm:$0xff] %v223
                %v225 = vld [vmem:[%s173 + $0x308] sm:$0xff]
                %226 = vst [vmem:[%s174 + $0xc8] sm:$0xff] %v225
                %v227 = vld [vmem:[%s173 + $0x340] sm:$0xff]
                %228 = vst [vmem:[%s174 + $0xd0] sm:$0xff] %v227
                %v229 = vld [vmem:[%s173 + $0x348] sm:$0xff]
                %230 = vst [vmem:[%s174 + $0xd8] sm:$0xff] %v229
                %v231 = vld [vmem:[%s173 + $0x380] sm:$0xff]
                %232 = vst [vmem:[%s174 + $0xe0] sm:$0xff] %v231
                %v233 = vld [vmem:[%s173 + $0x388] sm:$0xff]
                %234 = vst [vmem:[%s174 + $0xe8] sm:$0xff] %v233
                %v235 = vld [vmem:[%s173 + $0x3c0] sm:$0xff]
                %236 = vst [vmem:[%s174 + $0xf0] sm:$0xff] %v235
                %v237 = vld [vmem:[%s173 + $0x3c8] sm:$0xff]
                %238 = vst [vmem:[%s174 + $0xf8] sm:$0xff] %v237
                %v239 = vld [vmem:[%s173 + $0x400] sm:$0xff]
                %240 = vst [vmem:[%s174 + $0x100] sm:$0xff] %v239
                %v241 = vld [vmem:[%s173 + $0x408] sm:$0xff]
                %242 = vst [vmem:[%s174 + $0x108] sm:$0xff] %v241
                %v243 = vld [vmem:[%s173 + $0x440] sm:$0xff]
                %244 = vst [vmem:[%s174 + $0x110] sm:$0xff] %v243
                %v245 = vld [vmem:[%s173 + $0x448] sm:$0xff]
                %246 = vst [vmem:[%s174 + $0x118] sm:$0xff] %v245
              $region45: #{cifarnet_forward.11} parent=39 // loop_footer
                %s172 = sadd.s32 1, %s168
              $region46: #{cifarnet_forward.11} parent=39 // loop_footer_branch
                %167 = sbr.rel target = $region42
              $region47: #{cifarnet_forward.11} parent=39 // loop_exit
                _
            $region40: #{cifarnet_forward.11} parent=35 // pred_fallthru
              _
            // Predicated region
            $region48: #{cifarnet_forward.11} parent=35 // pred_check
              _
            $region49: #{cifarnet_forward.11} parent=35 // pred_check_branch
              %248 = sbr.rel target = $region51
            $region50: #{cifarnet_forward.11} parent=35 // pred_region
              _
            $region51: #{cifarnet_forward.11} parent=35 // pred_fallthru
              _
          $region36: #{cifarnet_forward.11} parent=31 // pred_fallthru
            _
          %249 = vnop
        $region32: #{cifarnet_forward.11} parent=27 // pred_fallthru
          _
      $region28: #{cifarnet_forward.11} parent=5 // pred_fallthru
        _
      %p250 = scmp.le.s32.totalorder 1, %s10
      %p251 = scmp.lt.s32.totalorder %s10, 5
      %p252 = pnand %p250, %p251
      %p253 = pneg %p252
      // Predicated region
      $region52: #{cifarnet_forward.11} parent=5 // pred_check
        _
      $region53: #{cifarnet_forward.11} parent=5 // pred_check_branch
        %255 = sbr.rel (%p252) target = $region55
      $region54: #{cifarnet_forward.11} parent=5 // pred_region
        %s256 = ssub.s32 %s10, 1
        %s257 = sand.u32 %s44, 1
        %s258 = sand.u32 %s44, 1
        %s259 = smul.addr %s258, 288
        %s260 = scalar_lea.vmem [#allocation2], %s259
        // Predicated region
        $region56: #{cifarnet_forward.11} parent=54 // pred_check
          %p261 = pneg %p57
        $region57: #{cifarnet_forward.11} parent=54 // pred_check_branch
          %263 = sbr.rel (%p261) target = $region59
        $region58: #{cifarnet_forward.11} parent=54 // pred_region
          _
        $region59: #{cifarnet_forward.11} parent=54 // pred_fallthru
          _
        %p264 = pneg %p31
        %p265 = pneg %p28
        %s266 = sand.u32 %s44, 1
        %s267 = sand.u32 %s44, 1
        %s268 = smul.addr %s267, 288
        %s269 = scalar_lea.vmem [#allocation2], %s268
        %p270 = pneg %p57
        %p271 = pneg %p54
        %p272 = pneg %p78
        %p273 = pneg %p75
        %p274 = pneg %p99
        %p275 = pneg %p96
        %p276 = pneg %p125
        %p277 = pneg %p122
        %s278 = sand.u32 %s112, 1
        %s279 = sand.u32 %s112, 1
        %s280 = smul.addr %s279, 64
        %s281 = scalar_lea.vmem [#allocation3], %s280
        %s282 = smul.u32 4, %s15
        %s283 = smul.u32 4, %s15
        %v285 = vld [vmem:[%s0] sm:$0xff]
        %v286 = vld [vmem:[%s0 + $0x8] sm:$0xff]
        %v287 = vld [vmem:[%s0 + $0x10] sm:$0xff]
        %v288 = vld [vmem:[%s0 + $0x18] sm:$0xff]
        %v289 = vld [vmem:[%s260] sm:$0xff]
        %v290 = vld [vmem:[%s260 + $0x8] sm:$0xff]
        %v291 = vld [vmem:[%s260 + $0x10] sm:$0xff]
        %v292 = vld [vmem:[%s260 + $0x18] sm:$0xff]
        %v293 = vld [vmem:[%s260 + $0x20] sm:$0xff]
        %v294 = vld [vmem:[%s260 + $0x28] sm:$0xff]
        %v295 = vld [vmem:[%s260 + $0x30] sm:$0xff]
        %v296 = vld [vmem:[%s260 + $0x38] sm:$0xff]
        %v297 = vld [vmem:[%s260 + $0x40] sm:$0xff]
        %v298 = vld [vmem:[%s260 + $0x48] sm:$0xff]
        %v299 = vld [vmem:[%s260 + $0x50] sm:$0xff]
        %v300 = vld [vmem:[%s260 + $0x58] sm:$0xff]
        %v301 = vld [vmem:[%s260 + $0x60] sm:$0xff]
        %v302 = vld [vmem:[%s260 + $0x68] sm:$0xff]
        %v303 = vld [vmem:[%s260 + $0x70] sm:$0xff]
        %v304 = vld [vmem:[%s260 + $0x78] sm:$0xff]
        %v305 = vld [vmem:[%s260 + $0x80] sm:$0xff]
        %v306 = vld [vmem:[%s260 + $0x88] sm:$0xff]
        %v307 = vld [vmem:[%s260 + $0x90] sm:$0xff]
        %v308 = vld [vmem:[%s260 + $0x98] sm:$0xff]
        %v309 = vld [vmem:[%s260 + $0xa0] sm:$0xff]
        %v310 = vld [vmem:[%s260 + $0xa8] sm:$0xff]
        %v311 = vld [vmem:[%s260 + $0xb0] sm:$0xff]
        %v312 = vld [vmem:[%s260 + $0xb8] sm:$0xff]
        %v313 = vld [vmem:[%s260 + $0xc0] sm:$0xff]
        %v314 = vld [vmem:[%s260 + $0xc8] sm:$0xff]
        %v315 = vld [vmem:[%s260 + $0xd0] sm:$0xff]
        %v316 = vld [vmem:[%s260 + $0xd8] sm:$0xff]
        %v317 = vld [vmem:[%s260 + $0xe0] sm:$0xff]
        %v318 = vld [vmem:[%s260 + $0xe8] sm:$0xff]
        %v319 = vld [vmem:[%s260 + $0xf0] sm:$0xff]
        %v320 = vld [vmem:[%s260 + $0xf8] sm:$0xff]
        %v321 = vld [vmem:[%s260 + $0x100] sm:$0xff]
        %v322 = vld [vmem:[%s260 + $0x108] sm:$0xff]
        %v323 = vld [vmem:[%s260 + $0x110] sm:$0xff]
        %v324 = vld [vmem:[%s260 + $0x118] sm:$0xff]
        %v329 = vunpack.c.l.b16 %v285
        %v330 = vunpack.c.h.b16 %v285
        %v331 = vunpack.c.l.b16 %v286
        %v332 = vunpack.c.h.b16 %v286
        %v333 = vunpack.c.l.b16 %v287
        %v334 = vunpack.c.h.b16 %v287
        %v335 = vunpack.c.l.b16 %v288
        %v336 = vunpack.c.h.b16 %v288
        %v337 = vpack.c.b16 %v331, %v329
        %v338 = vpack.c.b16 %v332, %v330
        %v339 = vpack.c.b16 %v335, %v333
        %v340 = vpack.c.b16 %v336, %v334
        %v379 = vunpack.c.l.b16 %v289
        %v380 = vunpack.c.h.b16 %v289
        %v381 = vunpack.c.l.b16 %v290
        %v382 = vunpack.c.h.b16 %v290
        %v383 = vunpack.c.l.b16 %v291
        %v384 = vunpack.c.h.b16 %v291
        %v385 = vunpack.c.l.b16 %v292
        %v386 = vunpack.c.h.b16 %v292
        %v387 = vunpack.c.l.b16 %v293
        %v388 = vunpack.c.h.b16 %v293
        %v389 = vunpack.c.l.b16 %v294
        %v390 = vunpack.c.h.b16 %v294
        %v391 = vunpack.c.l.b16 %v295
        %v392 = vunpack.c.h.b16 %v295
        %v393 = vunpack.c.l.b16 %v296
        %v394 = vunpack.c.h.b16 %v296
        %v395 = vunpack.c.l.b16 %v297
        %v396 = vunpack.c.h.b16 %v297
        %v397 = vunpack.c.l.b16 %v298
        %v398 = vunpack.c.h.b16 %v298
        %v399 = vunpack.c.l.b16 %v299
        %v400 = vunpack.c.h.b16 %v299
        %v401 = vunpack.c.l.b16 %v300
        %v402 = vunpack.c.h.b16 %v300
        %v403 = vunpack.c.l.b16 %v301
        %v404 = vunpack.c.h.b16 %v301
        %v405 = vunpack.c.l.b16 %v302
        %v406 = vunpack.c.h.b16 %v302
        %v407 = vunpack.c.l.b16 %v303
        %v408 = vunpack.c.h.b16 %v303
        %v409 = vunpack.c.l.b16 %v304
        %v410 = vunpack.c.h.b16 %v304
        %v411 = vunpack.c.l.b16 %v305
        %v412 = vunpack.c.h.b16 %v305
        %v413 = vunpack.c.l.b16 %v306
        %v414 = vunpack.c.h.b16 %v306
        %v415 = vunpack.c.l.b16 %v307
        %v416 = vunpack.c.h.b16 %v307
        %v417 = vunpack.c.l.b16 %v308
        %v418 = vunpack.c.h.b16 %v308
        %v419 = vunpack.c.l.b16 %v309
        %v420 = vunpack.c.h.b16 %v309
        %v421 = vunpack.c.l.b16 %v310
        %v422 = vunpack.c.h.b16 %v310
        %v423 = vunpack.c.l.b16 %v311
        %v424 = vunpack.c.h.b16 %v311
        %v425 = vunpack.c.l.b16 %v312
        %v426 = vunpack.c.h.b16 %v312
        %v427 = vunpack.c.l.b16 %v313
        %v428 = vunpack.c.h.b16 %v313
        %v429 = vunpack.c.l.b16 %v314
        %v430 = vunpack.c.h.b16 %v314
        %v431 = vunpack.c.l.b16 %v315
        %v432 = vunpack.c.h.b16 %v315
        %v433 = vunpack.c.l.b16 %v316
        %v434 = vunpack.c.h.b16 %v316
        %v435 = vunpack.c.l.b16 %v317
        %v436 = vunpack.c.h.b16 %v317
        %v437 = vunpack.c.l.b16 %v318
        %v438 = vunpack.c.h.b16 %v318
        %v439 = vunpack.c.l.b16 %v319
        %v440 = vunpack.c.h.b16 %v319
        %v441 = vunpack.c.l.b16 %v320
        %v442 = vunpack.c.h.b16 %v320
        %v443 = vunpack.c.l.b16 %v321
        %v444 = vunpack.c.h.b16 %v321
        %v445 = vunpack.c.l.b16 %v322
        %v446 = vunpack.c.h.b16 %v322
        %v447 = vunpack.c.l.b16 %v323
        %v448 = vunpack.c.h.b16 %v323
        %v449 = vunpack.c.l.b16 %v324
        %v450 = vunpack.c.h.b16 %v324
        %v451 = vpack.c.b16 %v383, %v379
        %v452 = vpack.c.b16 %v384, %v380
        %v453 = vpack.c.b16 %v385, %v381
        %v454 = vpack.c.b16 %v386, %v382
        %v455 = vpack.c.b16 %v391, %v387
        %v456 = vpack.c.b16 %v392, %v388
        %v457 = vpack.c.b16 %v393, %v389
        %v458 = vpack.c.b16 %v394, %v390
        %v459 = vpack.c.b16 %v399, %v395
        %v460 = vpack.c.b16 %v400, %v396
        %v461 = vpack.c.b16 %v401, %v397
        %v462 = vpack.c.b16 %v402, %v398
        %v463 = vpack.c.b16 %v407, %v403
        %v464 = vpack.c.b16 %v408, %v404
        %v465 = vpack.c.b16 %v409, %v405
        %v466 = vpack.c.b16 %v410, %v406
        %v467 = vpack.c.b16 %v415, %v411
        %v468 = vpack.c.b16 %v416, %v412
        %v469 = vpack.c.b16 %v417, %v413
        %v470 = vpack.c.b16 %v418, %v414
        %v471 = vpack.c.b16 %v423, %v419
        %v472 = vpack.c.b16 %v424, %v420
        %v473 = vpack.c.b16 %v425, %v421
        %v474 = vpack.c.b16 %v426, %v422
        %v475 = vpack.c.b16 %v431, %v427
        %v476 = vpack.c.b16 %v432, %v428
        %v477 = vpack.c.b16 %v433, %v429
        %v478 = vpack.c.b16 %v434, %v430
        %v479 = vpack.c.b16 %v439, %v435
        %v480 = vpack.c.b16 %v440, %v436
        %v481 = vpack.c.b16 %v441, %v437
        %v482 = vpack.c.b16 %v442, %v438
        %v483 = vpack.c.b16 %v447, %v443
        %v484 = vpack.c.b16 %v448, %v444
        %v485 = vpack.c.b16 %v449, %v445
        %v486 = vpack.c.b16 %v450, %v446
        %vm523 = vcmask 130048
        %v525 = vsel %vm523, %v338, 0
        %v528 = vsel %vm523, %v340, 0
        %530 = vmatpush.bf16.msra.mxu0 %v479
        %531 = vmatpush.bf16.msra.mxu0 %v475
        %532 = vmatpush.bf16.msra.mxu0 %v471
        %533 = vmatpush.bf16.msra.mxu0 %v467
        %534 = vmatpush.bf16.msra.mxu0 %v463
        %535 = vmatpush.bf16.msra.mxu0 %v459
        %536 = vmatpush.bf16.msra.mxu0 %v455
        %537 = vmatpush.bf16.msra.mxu0 %v451
        %538 = vmatmul.bf16.gmra.mxu0 %v337
        %v539 = vpop.f32.mrf.mxu0
        %v540 = vadd.f32 0.0, %v539
        %v541 = vpop.f32.mrf.mxu0
        %v542 = vadd.f32 0.0, %v541
        %543 = vmatmul.bf16.gmra.mxu0 %v339
        %v544 = vpop.f32.mrf.mxu0
        %v545 = vadd.f32 0.0, %v544
        %v546 = vpop.f32.mrf.mxu0
        %v547 = vadd.f32 0.0, %v546
        %548 = vdwg.mxu0
        %549 = vmatpush.bf16.msra.mxu0 0
        %550 = vmatpush.bf16.msra.mxu0 0
        %551 = vmatpush.bf16.msra.mxu0 0
        %552 = vmatpush.bf16.msra.mxu0 0
        %553 = vmatpush.bf16.msra.mxu0 0
        %554 = vmatpush.bf16.msra.mxu0 0
        %555 = vmatpush.bf16.msra.mxu0 0
        %556 = vmatpush.bf16.msra.mxu0 %v483
        %557 = vmatmul.bf16.gmra.mxu0 %v525
        %v558 = vpop.f32.mrf.mxu0
        %v559 = vadd.f32 %v540, %v558
        %v560 = vpop.f32.mrf.mxu0
        %v561 = vadd.f32 %v542, %v560
        %562 = vmatmul.bf16.gmra.mxu0 %v528
        %v563 = vpop.f32.mrf.mxu0
        %v564 = vadd.f32 %v545, %v563
        %v565 = vpop.f32.mrf.mxu0
        %v566 = vadd.f32 %v547, %v565
        %567 = vdwg.mxu0
        %568 = vmatpush.bf16.msra.mxu0 %v480
        %569 = vmatpush.bf16.msra.mxu0 %v476
        %570 = vmatpush.bf16.msra.mxu0 %v472
        %571 = vmatpush.bf16.msra.mxu0 %v468
        %572 = vmatpush.bf16.msra.mxu0 %v464
        %573 = vmatpush.bf16.msra.mxu0 %v460
        %574 = vmatpush.bf16.msra.mxu0 %v456
        %575 = vmatpush.bf16.msra.mxu0 %v452
        %576 = vmatmul.bf16.gmra.mxu0 %v337
        %v577 = vpop.f32.mrf.mxu0
        %v578 = vadd.f32 0.0, %v577
        %v579 = vpop.f32.mrf.mxu0
        %v580 = vadd.f32 0.0, %v579
        %581 = vmatmul.bf16.gmra.mxu0 %v339
        %v582 = vpop.f32.mrf.mxu0
        %v583 = vadd.f32 0.0, %v582
        %v584 = vpop.f32.mrf.mxu0
        %v585 = vadd.f32 0.0, %v584
        %586 = vdwg.mxu0
        %587 = vmatpush.bf16.msra.mxu0 0
        %588 = vmatpush.bf16.msra.mxu0 0
        %589 = vmatpush.bf16.msra.mxu0 0
        %590 = vmatpush.bf16.msra.mxu0 0
        %591 = vmatpush.bf16.msra.mxu0 0
        %592 = vmatpush.bf16.msra.mxu0 0
        %593 = vmatpush.bf16.msra.mxu0 0
        %594 = vmatpush.bf16.msra.mxu0 %v484
        %595 = vmatmul.bf16.gmra.mxu0 %v525
        %v596 = vpop.f32.mrf.mxu0
        %v597 = vadd.f32 %v578, %v596
        %v598 = vpop.f32.mrf.mxu0
        %v599 = vadd.f32 %v580, %v598
        %600 = vmatmul.bf16.gmra.mxu0 %v528
        %v601 = vpop.f32.mrf.mxu0
        %v602 = vadd.f32 %v583, %v601
        %v603 = vpop.f32.mrf.mxu0
        %v604 = vadd.f32 %v585, %v603
        %605 = vdwg.mxu0
        %606 = vmatpush.bf16.msra.mxu0 %v481
        %607 = vmatpush.bf16.msra.mxu0 %v477
        %608 = vmatpush.bf16.msra.mxu0 %v473
        %609 = vmatpush.bf16.msra.mxu0 %v469
        %610 = vmatpush.bf16.msra.mxu0 %v465
        %611 = vmatpush.bf16.msra.mxu0 %v461
        %612 = vmatpush.bf16.msra.mxu0 %v457
        %613 = vmatpush.bf16.msra.mxu0 %v453
        %614 = vmatmul.bf16.gmra.mxu0 %v337
        %v615 = vpop.f32.mrf.mxu0
        %v616 = vadd.f32 0.0, %v615
        %v617 = vpop.f32.mrf.mxu0
        %v618 = vadd.f32 0.0, %v617
        %619 = vmatmul.bf16.gmra.mxu0 %v339
        %v620 = vpop.f32.mrf.mxu0
        %v621 = vadd.f32 0.0, %v620
        %v622 = vpop.f32.mrf.mxu0
        %v623 = vadd.f32 0.0, %v622
        %624 = vdwg.mxu0
        %625 = vmatpush.bf16.msra.mxu0 0
        %626 = vmatpush.bf16.msra.mxu0 0
        %627 = vmatpush.bf16.msra.mxu0 0
        %628 = vmatpush.bf16.msra.mxu0 0
        %629 = vmatpush.bf16.msra.mxu0 0
        %630 = vmatpush.bf16.msra.mxu0 0
        %631 = vmatpush.bf16.msra.mxu0 0
        %632 = vmatpush.bf16.msra.mxu0 %v485
        %633 = vmatmul.bf16.gmra.mxu0 %v525
        %v634 = vpop.f32.mrf.mxu0
        %v635 = vadd.f32 %v616, %v634
        %v636 = vpop.f32.mrf.mxu0
        %v637 = vadd.f32 %v618, %v636
        %638 = vmatmul.bf16.gmra.mxu0 %v528
        %v639 = vpop.f32.mrf.mxu0
        %v640 = vadd.f32 %v621, %v639
        %v641 = vpop.f32.mrf.mxu0
        %v642 = vadd.f32 %v623, %v641
        %643 = vdwg.mxu0
        %644 = vmatpush.bf16.msra.mxu0 %v482
        %645 = vmatpush.bf16.msra.mxu0 %v478
        %646 = vmatpush.bf16.msra.mxu0 %v474
        %647 = vmatpush.bf16.msra.mxu0 %v470
        %648 = vmatpush.bf16.msra.mxu0 %v466
        %649 = vmatpush.bf16.msra.mxu0 %v462
        %650 = vmatpush.bf16.msra.mxu0 %v458
        %651 = vmatpush.bf16.msra.mxu0 %v454
        %652 = vmatmul.bf16.gmra.mxu0 %v337
        %v653 = vpop.f32.mrf.mxu0
        %v654 = vadd.f32 0.0, %v653
        %v655 = vpop.f32.mrf.mxu0
        %v656 = vadd.f32 0.0, %v655
        %657 = vmatmul.bf16.gmra.mxu0 %v339
        %v658 = vpop.f32.mrf.mxu0
        %v659 = vadd.f32 0.0, %v658
        %v660 = vpop.f32.mrf.mxu0
        %v661 = vadd.f32 0.0, %v660
        %662 = vdwg.mxu0
        %663 = vmatpush.bf16.msra.mxu0 0
        %664 = vmatpush.bf16.msra.mxu0 0
        %665 = vmatpush.bf16.msra.mxu0 0
        %666 = vmatpush.bf16.msra.mxu0 0
        %667 = vmatpush.bf16.msra.mxu0 0
        %668 = vmatpush.bf16.msra.mxu0 0
        %669 = vmatpush.bf16.msra.mxu0 0
        %670 = vmatpush.bf16.msra.mxu0 %v486
        %671 = vmatmul.bf16.gmra.mxu0 %v525
        %v672 = vpop.f32.mrf.mxu0
        %v673 = vadd.f32 %v654, %v672
        %v674 = vpop.f32.mrf.mxu0
        %v675 = vadd.f32 %v656, %v674
        %676 = vmatmul.bf16.gmra.mxu0 %v528
        %v677 = vpop.f32.mrf.mxu0
        %v678 = vadd.f32 %v659, %v677
        %v679 = vpop.f32.mrf.mxu0
        %v680 = vadd.f32 %v661, %v679
        %681 = vdwg.mxu0
        %v682 = vmax.f32 %v559, 0.0
        %v683 = vmax.f32 %v597, 0.0
        %v684 = vmax.f32 %v635, 0.0
        %v685 = vmax.f32 %v673, 0.0
        %v686 = vmax.f32 %v561, 0.0
        %v687 = vmax.f32 %v599, 0.0
        %v688 = vmax.f32 %v637, 0.0
        %v689 = vmax.f32 %v675, 0.0
        %v690 = vmax.f32 %v564, 0.0
        %v691 = vmax.f32 %v602, 0.0
        %v692 = vmax.f32 %v640, 0.0
        %v693 = vmax.f32 %v678, 0.0
        %v694 = vmax.f32 %v566, 0.0
        %v695 = vmax.f32 %v604, 0.0
        %v696 = vmax.f32 %v642, 0.0
        %v697 = vmax.f32 %v680, 0.0
        %v698 = vld [vmem:[%s2] sm:$0xff]
        %v699 = vld [vmem:[%s2 + $0x8] sm:$0xff]
        %v700 = vld [vmem:[%s2 + $0x10] sm:$0xff]
        %v701 = vld [vmem:[%s2 + $0x18] sm:$0xff]
        %703 = vset.pattern.permute.xlu0 0
        %704 = vperm.xlu0 %703, %v698
        %v705 = vpop.permute.xlu0 %704
        %708 = vset.pattern.permute.xlu0 0
        %709 = vperm.xlu0 %708, %v699
        %v710 = vpop.permute.xlu0 %709
        %713 = vset.pattern.permute.xlu0 0
        %714 = vperm.xlu0 %713, %v700
        %v715 = vpop.permute.xlu0 %714
        %718 = vset.pattern.permute.xlu0 0
        %719 = vperm.xlu0 %718, %v701
        %v720 = vpop.permute.xlu0 %719
        %v722 = vmul.f32 %v682, %v705
        %v723 = vmul.f32 %v683, %v705
        %v724 = vmul.f32 %v684, %v705
        %v725 = vmul.f32 %v685, %v705
        %v726 = vmul.f32 %v686, %v710
        %v727 = vmul.f32 %v687, %v710
        %v728 = vmul.f32 %v688, %v710
        %v729 = vmul.f32 %v689, %v710
        %v730 = vmul.f32 %v690, %v715
        %v731 = vmul.f32 %v691, %v715
        %v732 = vmul.f32 %v692, %v715
        %v733 = vmul.f32 %v693, %v715
        %v734 = vmul.f32 %v694, %v720
        %v735 = vmul.f32 %v695, %v720
        %v736 = vmul.f32 %v696, %v720
        %v737 = vmul.f32 %v697, %v720
        %v738 = vld [vmem:[%s3] sm:$0xff]
        %v739 = vld [vmem:[%s3 + $0x8] sm:$0xff]
        %v740 = vld [vmem:[%s3 + $0x10] sm:$0xff]
        %v741 = vld [vmem:[%s3 + $0x18] sm:$0xff]
        %743 = vset.pattern.permute.xlu0 0
        %744 = vperm.xlu0 %743, %v738
        %v745 = vpop.permute.xlu0 %744
        %748 = vset.pattern.permute.xlu0 0
        %749 = vperm.xlu0 %748, %v739
        %v750 = vpop.permute.xlu0 %749
        %753 = vset.pattern.permute.xlu0 0
        %754 = vperm.xlu0 %753, %v740
        %v755 = vpop.permute.xlu0 %754
        %758 = vset.pattern.permute.xlu0 0
        %759 = vperm.xlu0 %758, %v741
        %v760 = vpop.permute.xlu0 %759
        %v762 = vadd.f32 %v722, %v745
        %v763 = vadd.f32 %v723, %v745
        %v764 = vadd.f32 %v724, %v745
        %v765 = vadd.f32 %v725, %v745
        %v766 = vadd.f32 %v726, %v750
        %v767 = vadd.f32 %v727, %v750
        %v768 = vadd.f32 %v728, %v750
        %v769 = vadd.f32 %v729, %v750
        %v770 = vadd.f32 %v730, %v755
        %v771 = vadd.f32 %v731, %v755
        %v772 = vadd.f32 %v732, %v755
        %v773 = vadd.f32 %v733, %v755
        %v774 = vadd.f32 %v734, %v760
        %v775 = vadd.f32 %v735, %v760
        %v776 = vadd.f32 %v736, %v760
        %v777 = vadd.f32 %v737, %v760
        %v778 = vpack.c.bf16 %v763, %v762
        %v779 = vpack.c.bf16 %v765, %v764
        %v780 = vpack.c.bf16 %v767, %v766
        %v781 = vpack.c.bf16 %v769, %v768
        %v782 = vpack.c.bf16 %v771, %v770
        %v783 = vpack.c.bf16 %v773, %v772
        %v784 = vpack.c.bf16 %v775, %v774
        %v785 = vpack.c.bf16 %v777, %v776
        %786 = vst [vmem:[%s281] sm:$0xff] %v778
        %787 = vst [vmem:[%s281 + $0x8] sm:$0xff] %v779
        %788 = vst [vmem:[%s281 + $0x10] sm:$0xff] %v780
        %789 = vst [vmem:[%s281 + $0x18] sm:$0xff] %v781
        %790 = vst [vmem:[%s281 + $0x20] sm:$0xff] %v782
        %791 = vst [vmem:[%s281 + $0x28] sm:$0xff] %v783
        %792 = vst [vmem:[%s281 + $0x30] sm:$0xff] %v784
        %793 = vst [vmem:[%s281 + $0x38] sm:$0xff] %v785
        %s794 = sand.u32 %s112, 1
        %s795 = sand.u32 %s112, 1
        %s796 = smul.addr %s795, 64
        %s797 = scalar_lea.vmem [#allocation3], %s796
        // Predicated region
        $region60: #{cifarnet_forward.11} parent=54 // pred_check
          %p798 = pneg %p122
        $region61: #{cifarnet_forward.11} parent=54 // pred_check_branch
          %800 = sbr.rel (%p798) target = $region63
        $region62: #{cifarnet_forward.11} parent=54 // pred_region
          %s801 = smul.u32 4, %s15
          %s802 = smul.addr %s801, 4
          %s803 = scalar_lea.vmem %s4, %s802
          // Predicated region
          $region64: #{cifarnet_forward.11} parent=62 // pred_check
            _
          $region65: #{cifarnet_forward.11} parent=62 // pred_check_branch
            %805 = sbr.rel (0) target = $region67
          $region66: #{cifarnet_forward.11} parent=62 // pred_region
            // Predicated region
            $region68: #{cifarnet_forward.11} parent=66 // pred_check
              _
            $region69: #{cifarnet_forward.11} parent=66 // pred_check_branch
              %807 = sbr.rel (0) target = $region71
            $region70: #{cifarnet_forward.11} parent=66 // pred_region
              loop: start=0, step=1, limit=1
              $region72: #{cifarnet_forward.11} parent=70 // loop_pre_header
                _
              $region73: #{cifarnet_forward.11} parent=70 // loop_header
                %s809 = sphi 0, %s813
                %p810 = scmp.ge.s32.totalorder %s809, 1
                %s814 = sphi %s797, %s797
                %s815 = sphi %s803, %s803
              $region74: #{cifarnet_forward.11} parent=70 // loop_header_branch
                %812 = sbr.rel (%p810) target = $region78
              $region75: #{cifarnet_forward.11} parent=70 // loop_body
                %v816 = vld [vmem:[%s814] sm:$0xff]
                %817 = vst [vmem:[%s815] sm:$0xff] %v816
                %v818 = vld [vmem:[%s814 + $0x8] sm:$0xff]
                %819 = vst [vmem:[%s815 + $0x8] sm:$0xff] %v818
                %v820 = vld [vmem:[%s814 + $0x10] sm:$0xff]
                %821 = vst [vmem:[%s815 + $0x40] sm:$0xff] %v820
                %v822 = vld [vmem:[%s814 + $0x18] sm:$0xff]
                %823 = vst [vmem:[%s815 + $0x48] sm:$0xff] %v822
                %v824 = vld [vmem:[%s814 + $0x20] sm:$0xff]
                %825 = vst [vmem:[%s815 + $0x80] sm:$0xff] %v824
                %v826 = vld [vmem:[%s814 + $0x28] sm:$0xff]
                %827 = vst [vmem:[%s815 + $0x88] sm:$0xff] %v826
                %v828 = vld [vmem:[%s814 + $0x30] sm:$0xff]
                %829 = vst [vmem:[%s815 + $0xc0] sm:$0xff] %v828
                %v830 = vld [vmem:[%s814 + $0x38] sm:$0xff]
                %831 = vst [vmem:[%s815 + $0xc8] sm:$0xff] %v830
              $region76: #{cifarnet_forward.11} parent=70 // loop_footer
                %s813 = sadd.s32 1, %s809
              $region77: #{cifarnet_forward.11} parent=70 // loop_footer_branch
                %808 = sbr.rel target = $region73
              $region78: #{cifarnet_forward.11} parent=70 // loop_exit
                _
            $region71: #{cifarnet_forward.11} parent=66 // pred_fallthru
              _
            // Predicated region
            $region79: #{cifarnet_forward.11} parent=66 // pred_check
              _
            $region80: #{cifarnet_forward.11} parent=66 // pred_check_branch
              %833 = sbr.rel target = $region82
            $region81: #{cifarnet_forward.11} parent=66 // pred_region
              _
            $region82: #{cifarnet_forward.11} parent=66 // pred_fallthru
              _
          $region67: #{cifarnet_forward.11} parent=62 // pred_fallthru
            _
          %834 = vnop
        $region63: #{cifarnet_forward.11} parent=54 // pred_fallthru
          _
      $region55: #{cifarnet_forward.11} parent=5 // pred_fallthru
        _
      %p835 = scmp.le.s32.totalorder 2, %s10
      // Predicated region
      $region83: #{cifarnet_forward.11} parent=5 // pred_check
        %p836 = pneg %p835
      $region84: #{cifarnet_forward.11} parent=5 // pred_check_branch
        %838 = sbr.rel (%p836) target = $region86
      $region85: #{cifarnet_forward.11} parent=5 // pred_region
        %s839 = ssub.s32 %s10, 2
        // Predicated region
        $region87: #{cifarnet_forward.11} parent=85 // pred_check
          %p840 = pneg %p128
        $region88: #{cifarnet_forward.11} parent=85 // pred_check_branch
          %842 = sbr.rel (%p840) target = $region90
        $region89: #{cifarnet_forward.11} parent=85 // pred_region
          %s843 = sand.u32 %s113, 1
          %s844 = sand.u32 %s113, 1
          %s845 = smul.addr %s844, 64
          %s846 = scalar_lea.vmem [#allocation3], %s845
        $region90: #{cifarnet_forward.11} parent=85 // pred_fallthru
          _
      $region86: #{cifarnet_forward.11} parent=5 // pred_fallthru
        _
    $region6: #{cifarnet_forward.11} parent=1 // loop_footer
      %s14 = sadd.s32 1, %s10
    $region7: #{cifarnet_forward.11} parent=1 // loop_footer_branch
      %9 = sbr.rel target = $region3
    $region8: #{cifarnet_forward.11} parent=1 // loop_exit
      _

// kernel: cifarnet_forward.12
$region0: #{cifarnet_forward.12}
  #allocation0 [shape = 'u32[]', space=smem, size = 0x4, offset = 0x4, fixed_abs, tag = 'smem constant byte address 0x4 - core index']
  #allocation1 [shape = 'u32[72,128]{1,0:T(1,128)}', space=vmem, size = 0x9000, scoped, tag = 'internal scratch']
  %s0 = inlined_call_operand.vmem [shape: bf16[16,288], index: 0, kind: input, shape index: {}]
  %s1 = inlined_call_operand.vmem [shape: bf16[288,512], index: 1, kind: input, shape index: {}]
  %s2 = inlined_call_operand.vmem [shape: f32[16,1], index: 2, kind: input, shape index: {}]
  %s3 = inlined_call_operand.vmem [shape: f32[16,1], index: 3, kind: input, shape index: {}]
  %s4 = inlined_call_operand.vmem [shape: bf16[16,512], index: 4, kind: output, shape index: {}]
  %s5 = sld [smem:[#allocation0]]
  $region26: #{cifarnet_forward.12} parent=0
    _
  %s7 = ssub.s32 1, %s5
  %s8 = scalar_select 0, %s7, %s5
  // Predicated region
  $region2: #{cifarnet_forward.12} parent=0 // pred_check
    _
  $region3: #{cifarnet_forward.12} parent=0 // pred_check_branch
    %10 = sbr.rel (0) target = $region5
  $region4: #{cifarnet_forward.12} parent=0 // pred_region
    _
  $region5: #{cifarnet_forward.12} parent=0 // pred_fallthru
    _
  // Predicated region
  $region6: #{cifarnet_forward.12} parent=0 // pred_check
    _
  $region7: #{cifarnet_forward.12} parent=0 // pred_check_branch
    %12 = sbr.rel (0) target = $region9
  $region8: #{cifarnet_forward.12} parent=0 // pred_region
    _
  $region9: #{cifarnet_forward.12} parent=0 // pred_fallthru
    _
  // Predicated region
  $region10: #{cifarnet_forward.12} parent=0 // pred_check
    _
  $region11: #{cifarnet_forward.12} parent=0 // pred_check_branch
    %14 = sbr.rel (0) target = $region13
  $region12: #{cifarnet_forward.12} parent=0 // pred_region
    _
  $region13: #{cifarnet_forward.12} parent=0 // pred_fallthru
    _
  // Predicated region
  $region14: #{cifarnet_forward.12} parent=0 // pred_check
    _
  $region15: #{cifarnet_forward.12} parent=0 // pred_check_branch
    %16 = sbr.rel (0) target = $region17
  $region16: #{cifarnet_forward.12} parent=0 // pred_region
    _
  $region17: #{cifarnet_forward.12} parent=0 // pred_fallthru
    _
  %v18 = vld [vmem:[%s0] sm:$0xff]
  %v19 = vld [vmem:[%s0 + $0x8] sm:$0xf]
  %v20 = vld [vmem:[%s0 + $0xc] sm:$0xff]
  %v21 = vld [vmem:[%s0 + $0x14] sm:$0xf]
  %v22 = vld [vmem:[%s1] sm:$0xff]
  %v23 = vld [vmem:[%s1 + $0x8] sm:$0xff]
  %v24 = vld [vmem:[%s1 + $0x10] sm:$0xff]
  %v25 = vld [vmem:[%s1 + $0x18] sm:$0xff]
  %v26 = vld [vmem:[%s1 + $0x20] sm:$0xff]
  %v27 = vld [vmem:[%s1 + $0x28] sm:$0xff]
  %v28 = vld [vmem:[%s1 + $0x30] sm:$0xff]
  %v29 = vld [vmem:[%s1 + $0x38] sm:$0xff]
  %v30 = vld [vmem:[%s1 + $0x40] sm:$0xff]
  %v31 = vld [vmem:[%s1 + $0x48] sm:$0xff]
  %v32 = vld [vmem:[%s1 + $0x50] sm:$0xff]
  %v33 = vld [vmem:[%s1 + $0x58] sm:$0xff]
  %v34 = vld [vmem:[%s1 + $0x60] sm:$0xff]
  %v35 = vld [vmem:[%s1 + $0x68] sm:$0xff]
  %v36 = vld [vmem:[%s1 + $0x70] sm:$0xff]
  %v37 = vld [vmem:[%s1 + $0x78] sm:$0xff]
  %v38 = vld [vmem:[%s1 + $0x80] sm:$0xff]
  %v39 = vld [vmem:[%s1 + $0x88] sm:$0xff]
  %v40 = vld [vmem:[%s1 + $0x90] sm:$0xff]
  %v41 = vld [vmem:[%s1 + $0x98] sm:$0xff]
  %v42 = vld [vmem:[%s1 + $0xa0] sm:$0xff]
  %v43 = vld [vmem:[%s1 + $0xa8] sm:$0xff]
  %v44 = vld [vmem:[%s1 + $0xb0] sm:$0xff]
  %v45 = vld [vmem:[%s1 + $0xb8] sm:$0xff]
  %v46 = vld [vmem:[%s1 + $0xc0] sm:$0xff]
  %v47 = vld [vmem:[%s1 + $0xc8] sm:$0xff]
  %v48 = vld [vmem:[%s1 + $0xd0] sm:$0xff]
  %v49 = vld [vmem:[%s1 + $0xd8] sm:$0xff]
  %v50 = vld [vmem:[%s1 + $0xe0] sm:$0xff]
  %v51 = vld [vmem:[%s1 + $0xe8] sm:$0xff]
  %v52 = vld [vmem:[%s1 + $0xf0] sm:$0xff]
  %v53 = vld [vmem:[%s1 + $0xf8] sm:$0xff]
  %v54 = vld [vmem:[%s1 + $0x100] sm:$0xff]
  %v55 = vld [vmem:[%s1 + $0x108] sm:$0xff]
  %v56 = vld [vmem:[%s1 + $0x110] sm:$0xff]
  %v57 = vld [vmem:[%s1 + $0x118] sm:$0xff]
  %v58 = vld [vmem:[%s1 + $0x120] sm:$0xff]
  %v59 = vld [vmem:[%s1 + $0x128] sm:$0xff]
  %v60 = vld [vmem:[%s1 + $0x130] sm:$0xff]
  %v61 = vld [vmem:[%s1 + $0x138] sm:$0xff]
  %v62 = vld [vmem:[%s1 + $0x140] sm:$0xff]
  %v63 = vld [vmem:[%s1 + $0x148] sm:$0xff]
  %v64 = vld [vmem:[%s1 + $0x150] sm:$0xff]
  %v65 = vld [vmem:[%s1 + $0x158] sm:$0xff]
  %v66 = vld [vmem:[%s1 + $0x160] sm:$0xff]
  %v67 = vld [vmem:[%s1 + $0x168] sm:$0xff]
  %v68 = vld [vmem:[%s1 + $0x170] sm:$0xff]
  %v69 = vld [vmem:[%s1 + $0x178] sm:$0xff]
  %v70 = vld [vmem:[%s1 + $0x180] sm:$0xff]
  %v71 = vld [vmem:[%s1 + $0x188] sm:$0xff]
  %v72 = vld [vmem:[%s1 + $0x190] sm:$0xff]
  %v73 = vld [vmem:[%s1 + $0x198] sm:$0xff]
  %v74 = vld [vmem:[%s1 + $0x1a0] sm:$0xff]
  %v75 = vld [vmem:[%s1 + $0x1a8] sm:$0xff]
  %v76 = vld [vmem:[%s1 + $0x1b0] sm:$0xff]
  %v77 = vld [vmem:[%s1 + $0x1b8] sm:$0xff]
  %v78 = vld [vmem:[%s1 + $0x1c0] sm:$0xff]
  %v79 = vld [vmem:[%s1 + $0x1c8] sm:$0xff]
  %v80 = vld [vmem:[%s1 + $0x1d0] sm:$0xff]
  %v81 = vld [vmem:[%s1 + $0x1d8] sm:$0xff]
  %v82 = vld [vmem:[%s1 + $0x1e0] sm:$0xff]
  %v83 = vld [vmem:[%s1 + $0x1e8] sm:$0xff]
  %v84 = vld [vmem:[%s1 + $0x1f0] sm:$0xff]
  %v85 = vld [vmem:[%s1 + $0x1f8] sm:$0xff]
  %v86 = vld [vmem:[%s1 + $0x200] sm:$0xff]
  %v87 = vld [vmem:[%s1 + $0x208] sm:$0xff]
  %v88 = vld [vmem:[%s1 + $0x210] sm:$0xff]
  %v89 = vld [vmem:[%s1 + $0x218] sm:$0xff]
  %v90 = vld [vmem:[%s1 + $0x220] sm:$0xff]
  %v91 = vld [vmem:[%s1 + $0x228] sm:$0xff]
  %v92 = vld [vmem:[%s1 + $0x230] sm:$0xff]
  %v93 = vld [vmem:[%s1 + $0x238] sm:$0xff]
  %v98 = vunpack.c.l.b16 %v18
  %v99 = vunpack.c.h.b16 %v18
  %v100 = vunpack.c.l.b16 %v19
  %v101 = vunpack.c.l.b16 %v20
  %v102 = vunpack.c.h.b16 %v20
  %v103 = vunpack.c.l.b16 %v21
  %v104 = vpack.c.b16 %v101, %v98
  %v105 = vpack.c.b16 %v102, %v99
  %v106 = vpack.c.b16 %v103, %v100
  %v181 = vunpack.c.l.b16 %v22
  %v182 = vunpack.c.h.b16 %v22
  %v183 = vunpack.c.l.b16 %v23
  %v184 = vunpack.c.h.b16 %v23
  %v185 = vunpack.c.l.b16 %v24
  %v186 = vunpack.c.h.b16 %v24
  %v187 = vunpack.c.l.b16 %v25
  %v188 = vunpack.c.h.b16 %v25
  %v189 = vunpack.c.l.b16 %v26
  %v190 = vunpack.c.h.b16 %v26
  %v191 = vunpack.c.l.b16 %v27
  %v192 = vunpack.c.h.b16 %v27
  %v193 = vunpack.c.l.b16 %v28
  %v194 = vunpack.c.h.b16 %v28
  %v195 = vunpack.c.l.b16 %v29
  %v196 = vunpack.c.h.b16 %v29
  %v197 = vunpack.c.l.b16 %v30
  %v198 = vunpack.c.h.b16 %v30
  %v199 = vunpack.c.l.b16 %v31
  %v200 = vunpack.c.h.b16 %v31
  %v201 = vunpack.c.l.b16 %v32
  %v202 = vunpack.c.h.b16 %v32
  %v203 = vunpack.c.l.b16 %v33
  %v204 = vunpack.c.h.b16 %v33
  %v205 = vunpack.c.l.b16 %v34
  %v206 = vunpack.c.h.b16 %v34
  %v207 = vunpack.c.l.b16 %v35
  %v208 = vunpack.c.h.b16 %v35
  %v209 = vunpack.c.l.b16 %v36
  %v210 = vunpack.c.h.b16 %v36
  %v211 = vunpack.c.l.b16 %v37
  %v212 = vunpack.c.h.b16 %v37
  %v213 = vunpack.c.l.b16 %v38
  %v214 = vunpack.c.h.b16 %v38
  %v215 = vunpack.c.l.b16 %v39
  %v216 = vunpack.c.h.b16 %v39
  %v217 = vunpack.c.l.b16 %v40
  %v218 = vunpack.c.h.b16 %v40
  %v219 = vunpack.c.l.b16 %v41
  %v220 = vunpack.c.h.b16 %v41
  %v221 = vunpack.c.l.b16 %v42
  %v222 = vunpack.c.h.b16 %v42
  %v223 = vunpack.c.l.b16 %v43
  %v224 = vunpack.c.h.b16 %v43
  %v225 = vunpack.c.l.b16 %v44
  %v226 = vunpack.c.h.b16 %v44
  %v227 = vunpack.c.l.b16 %v45
  %v228 = vunpack.c.h.b16 %v45
  %v229 = vunpack.c.l.b16 %v46
  %v230 = vunpack.c.h.b16 %v46
  %v231 = vunpack.c.l.b16 %v47
  %v232 = vunpack.c.h.b16 %v47
  %v233 = vunpack.c.l.b16 %v48
  %v234 = vunpack.c.h.b16 %v48
  %v235 = vunpack.c.l.b16 %v49
  %v236 = vunpack.c.h.b16 %v49
  %v237 = vunpack.c.l.b16 %v50
  %v238 = vunpack.c.h.b16 %v50
  %v239 = vunpack.c.l.b16 %v51
  %v240 = vunpack.c.h.b16 %v51
  %v241 = vunpack.c.l.b16 %v52
  %v242 = vunpack.c.h.b16 %v52
  %v243 = vunpack.c.l.b16 %v53
  %v244 = vunpack.c.h.b16 %v53
  %v245 = vunpack.c.l.b16 %v54
  %v246 = vunpack.c.h.b16 %v54
  %v247 = vunpack.c.l.b16 %v55
  %v248 = vunpack.c.h.b16 %v55
  %v249 = vunpack.c.l.b16 %v56
  %v250 = vunpack.c.h.b16 %v56
  %v251 = vunpack.c.l.b16 %v57
  %v252 = vunpack.c.h.b16 %v57
  %v253 = vunpack.c.l.b16 %v58
  %v254 = vunpack.c.h.b16 %v58
  %v255 = vunpack.c.l.b16 %v59
  %v256 = vunpack.c.h.b16 %v59
  %v257 = vunpack.c.l.b16 %v60
  %v258 = vunpack.c.h.b16 %v60
  %v259 = vunpack.c.l.b16 %v61
  %v260 = vunpack.c.h.b16 %v61
  %v261 = vunpack.c.l.b16 %v62
  %v262 = vunpack.c.h.b16 %v62
  %v263 = vunpack.c.l.b16 %v63
  %v264 = vunpack.c.h.b16 %v63
  %v265 = vunpack.c.l.b16 %v64
  %v266 = vunpack.c.h.b16 %v64
  %v267 = vunpack.c.l.b16 %v65
  %v268 = vunpack.c.h.b16 %v65
  %v269 = vunpack.c.l.b16 %v66
  %v270 = vunpack.c.h.b16 %v66
  %v271 = vunpack.c.l.b16 %v67
  %v272 = vunpack.c.h.b16 %v67
  %v273 = vunpack.c.l.b16 %v68
  %v274 = vunpack.c.h.b16 %v68
  %v275 = vunpack.c.l.b16 %v69
  %v276 = vunpack.c.h.b16 %v69
  %v277 = vunpack.c.l.b16 %v70
  %v278 = vunpack.c.h.b16 %v70
  %v279 = vunpack.c.l.b16 %v71
  %v280 = vunpack.c.h.b16 %v71
  %v281 = vunpack.c.l.b16 %v72
  %v282 = vunpack.c.h.b16 %v72
  %v283 = vunpack.c.l.b16 %v73
  %v284 = vunpack.c.h.b16 %v73
  %v285 = vunpack.c.l.b16 %v74
  %v286 = vunpack.c.h.b16 %v74
  %v287 = vunpack.c.l.b16 %v75
  %v288 = vunpack.c.h.b16 %v75
  %v289 = vunpack.c.l.b16 %v76
  %v290 = vunpack.c.h.b16 %v76
  %v291 = vunpack.c.l.b16 %v77
  %v292 = vunpack.c.h.b16 %v77
  %v293 = vunpack.c.l.b16 %v78
  %v294 = vunpack.c.h.b16 %v78
  %v295 = vunpack.c.l.b16 %v79
  %v296 = vunpack.c.h.b16 %v79
  %v297 = vunpack.c.l.b16 %v80
  %v298 = vunpack.c.h.b16 %v80
  %v299 = vunpack.c.l.b16 %v81
  %v300 = vunpack.c.h.b16 %v81
  %v301 = vunpack.c.l.b16 %v82
  %v302 = vunpack.c.h.b16 %v82
  %v303 = vunpack.c.l.b16 %v83
  %v304 = vunpack.c.h.b16 %v83
  %v305 = vunpack.c.l.b16 %v84
  %v306 = vunpack.c.h.b16 %v84
  %v307 = vunpack.c.l.b16 %v85
  %v308 = vunpack.c.h.b16 %v85
  %v309 = vunpack.c.l.b16 %v86
  %v310 = vunpack.c.h.b16 %v86
  %v311 = vunpack.c.l.b16 %v87
  %v312 = vunpack.c.h.b16 %v87
  %v313 = vunpack.c.l.b16 %v88
  %v314 = vunpack.c.h.b16 %v88
  %v315 = vunpack.c.l.b16 %v89
  %v316 = vunpack.c.h.b16 %v89
  %v317 = vunpack.c.l.b16 %v90
  %v318 = vunpack.c.h.b16 %v90
  %v319 = vunpack.c.l.b16 %v91
  %v320 = vunpack.c.h.b16 %v91
  %v321 = vunpack.c.l.b16 %v92
  %v322 = vunpack.c.h.b16 %v92
  %v323 = vunpack.c.l.b16 %v93
  %v324 = vunpack.c.h.b16 %v93
  %v325 = vpack.c.b16 %v185, %v181
  %v326 = vpack.c.b16 %v186, %v182
  %v327 = vpack.c.b16 %v187, %v183
  %v328 = vpack.c.b16 %v188, %v184
  %v329 = vpack.c.b16 %v193, %v189
  %v330 = vpack.c.b16 %v194, %v190
  %v331 = vpack.c.b16 %v195, %v191
  %v332 = vpack.c.b16 %v196, %v192
  %v333 = vpack.c.b16 %v201, %v197
  %v334 = vpack.c.b16 %v202, %v198
  %v335 = vpack.c.b16 %v203, %v199
  %v336 = vpack.c.b16 %v204, %v200
  %v337 = vpack.c.b16 %v209, %v205
  %v338 = vpack.c.b16 %v210, %v206
  %v339 = vpack.c.b16 %v211, %v207
  %v340 = vpack.c.b16 %v212, %v208
  %v341 = vpack.c.b16 %v217, %v213
  %v342 = vpack.c.b16 %v218, %v214
  %v343 = vpack.c.b16 %v219, %v215
  %v344 = vpack.c.b16 %v220, %v216
  %v345 = vpack.c.b16 %v225, %v221
  %v346 = vpack.c.b16 %v226, %v222
  %v347 = vpack.c.b16 %v227, %v223
  %v348 = vpack.c.b16 %v228, %v224
  %v349 = vpack.c.b16 %v233, %v229
  %v350 = vpack.c.b16 %v234, %v230
  %v351 = vpack.c.b16 %v235, %v231
  %v352 = vpack.c.b16 %v236, %v232
  %v353 = vpack.c.b16 %v241, %v237
  %v354 = vpack.c.b16 %v242, %v238
  %v355 = vpack.c.b16 %v243, %v239
  %v356 = vpack.c.b16 %v244, %v240
  %v357 = vpack.c.b16 %v249, %v245
  %v358 = vpack.c.b16 %v250, %v246
  %v359 = vpack.c.b16 %v251, %v247
  %v360 = vpack.c.b16 %v252, %v248
  %v361 = vpack.c.b16 %v257, %v253
  %v362 = vpack.c.b16 %v258, %v254
  %v363 = vpack.c.b16 %v259, %v255
  %v364 = vpack.c.b16 %v260, %v256
  %v365 = vpack.c.b16 %v265, %v261
  %v366 = vpack.c.b16 %v266, %v262
  %v367 = vpack.c.b16 %v267, %v263
  %v368 = vpack.c.b16 %v268, %v264
  %v369 = vpack.c.b16 %v273, %v269
  %v370 = vpack.c.b16 %v274, %v270
  %v371 = vpack.c.b16 %v275, %v271
  %v372 = vpack.c.b16 %v276, %v272
  %v373 = vpack.c.b16 %v281, %v277
  %v374 = vpack.c.b16 %v282, %v278
  %v375 = vpack.c.b16 %v283, %v279
  %v376 = vpack.c.b16 %v284, %v280
  %v377 = vpack.c.b16 %v289, %v285
  %v378 = vpack.c.b16 %v290, %v286
  %v379 = vpack.c.b16 %v291, %v287
  %v380 = vpack.c.b16 %v292, %v288
  %v381 = vpack.c.b16 %v297, %v293
  %v382 = vpack.c.b16 %v298, %v294
  %v383 = vpack.c.b16 %v299, %v295
  %v384 = vpack.c.b16 %v300, %v296
  %v385 = vpack.c.b16 %v305, %v301
  %v386 = vpack.c.b16 %v306, %v302
  %v387 = vpack.c.b16 %v307, %v303
  %v388 = vpack.c.b16 %v308, %v304
  %v389 = vpack.c.b16 %v313, %v309
  %v390 = vpack.c.b16 %v314, %v310
  %v391 = vpack.c.b16 %v315, %v311
  %v392 = vpack.c.b16 %v316, %v312
  %v393 = vpack.c.b16 %v321, %v317
  %v394 = vpack.c.b16 %v322, %v318
  %v395 = vpack.c.b16 %v323, %v319
  %v396 = vpack.c.b16 %v324, %v320
  %vm469 = vcmask 261120
  %v471 = vsel %vm469, %v106, 0
  %473 = vmatpush.bf16.msra.mxu0 %v353
  %474 = vmatpush.bf16.msra.mxu0 %v349
  %475 = vmatpush.bf16.msra.mxu0 %v345
  %476 = vmatpush.bf16.msra.mxu0 %v341
  %477 = vmatpush.bf16.msra.mxu0 %v337
  %478 = vmatpush.bf16.msra.mxu0 %v333
  %479 = vmatpush.bf16.msra.mxu0 %v329
  %480 = vmatpush.bf16.msra.mxu0 %v325
  %481 = vmatmul.bf16.gmra.mxu0 %v104
  %v482 = vpop.f32.mrf.mxu0
  %v483 = vadd.f32 0.0, %v482
  %v484 = vpop.f32.mrf.mxu0
  %v485 = vadd.f32 0.0, %v484
  %486 = vdwg.mxu0
  %487 = vmatpush.bf16.msra.mxu0 %v385
  %488 = vmatpush.bf16.msra.mxu0 %v381
  %489 = vmatpush.bf16.msra.mxu0 %v377
  %490 = vmatpush.bf16.msra.mxu0 %v373
  %491 = vmatpush.bf16.msra.mxu0 %v369
  %492 = vmatpush.bf16.msra.mxu0 %v365
  %493 = vmatpush.bf16.msra.mxu0 %v361
  %494 = vmatpush.bf16.msra.mxu0 %v357
  %495 = vmatmul.bf16.gmra.mxu0 %v105
  %v496 = vpop.f32.mrf.mxu0
  %v497 = vadd.f32 %v483, %v496
  %v498 = vpop.f32.mrf.mxu0
  %v499 = vadd.f32 %v485, %v498
  %500 = vdwg.mxu0
  %501 = vmatpush.bf16.msra.mxu0 0
  %502 = vmatpush.bf16.msra.mxu0 0
  %503 = vmatpush.bf16.msra.mxu0 0
  %504 = vmatpush.bf16.msra.mxu0 0
  %505 = vmatpush.bf16.msra.mxu0 0
  %506 = vmatpush.bf16.msra.mxu0 0
  %507 = vmatpush.bf16.msra.mxu0 %v393
  %508 = vmatpush.bf16.msra.mxu0 %v389
  %509 = vmatmul.bf16.gmra.mxu0 %v471
  %v510 = vpop.f32.mrf.mxu0
  %v511 = vadd.f32 %v497, %v510
  %v512 = vpop.f32.mrf.mxu0
  %v513 = vadd.f32 %v499, %v512
  %514 = vdwg.mxu0
  %515 = vmatpush.bf16.msra.mxu0 %v354
  %516 = vmatpush.bf16.msra.mxu0 %v350
  %517 = vmatpush.bf16.msra.mxu0 %v346
  %518 = vmatpush.bf16.msra.mxu0 %v342
  %519 = vmatpush.bf16.msra.mxu0 %v338
  %520 = vmatpush.bf16.msra.mxu0 %v334
  %521 = vmatpush.bf16.msra.mxu0 %v330
  %522 = vmatpush.bf16.msra.mxu0 %v326
  %523 = vmatmul.bf16.gmra.mxu0 %v104
  %v524 = vpop.f32.mrf.mxu0
  %v525 = vadd.f32 0.0, %v524
  %v526 = vpop.f32.mrf.mxu0
  %v527 = vadd.f32 0.0, %v526
  %528 = vdwg.mxu0
  %529 = vmatpush.bf16.msra.mxu0 %v386
  %530 = vmatpush.bf16.msra.mxu0 %v382
  %531 = vmatpush.bf16.msra.mxu0 %v378
  %532 = vmatpush.bf16.msra.mxu0 %v374
  %533 = vmatpush.bf16.msra.mxu0 %v370
  %534 = vmatpush.bf16.msra.mxu0 %v366
  %535 = vmatpush.bf16.msra.mxu0 %v362
  %536 = vmatpush.bf16.msra.mxu0 %v358
  %537 = vmatmul.bf16.gmra.mxu0 %v105
  %v538 = vpop.f32.mrf.mxu0
  %v539 = vadd.f32 %v525, %v538
  %v540 = vpop.f32.mrf.mxu0
  %v541 = vadd.f32 %v527, %v540
  %542 = vdwg.mxu0
  %543 = vmatpush.bf16.msra.mxu0 0
  %544 = vmatpush.bf16.msra.mxu0 0
  %545 = vmatpush.bf16.msra.mxu0 0
  %546 = vmatpush.bf16.msra.mxu0 0
  %547 = vmatpush.bf16.msra.mxu0 0
  %548 = vmatpush.bf16.msra.mxu0 0
  %549 = vmatpush.bf16.msra.mxu0 %v394
  %550 = vmatpush.bf16.msra.mxu0 %v390
  %551 = vmatmul.bf16.gmra.mxu0 %v471
  %v552 = vpop.f32.mrf.mxu0
  %v553 = vadd.f32 %v539, %v552
  %v554 = vpop.f32.mrf.mxu0
  %v555 = vadd.f32 %v541, %v554
  %556 = vdwg.mxu0
  %557 = vmatpush.bf16.msra.mxu0 %v355
  %558 = vmatpush.bf16.msra.mxu0 %v351
  %559 = vmatpush.bf16.msra.mxu0 %v347
  %560 = vmatpush.bf16.msra.mxu0 %v343
  %561 = vmatpush.bf16.msra.mxu0 %v339
  %562 = vmatpush.bf16.msra.mxu0 %v335
  %563 = vmatpush.bf16.msra.mxu0 %v331
  %564 = vmatpush.bf16.msra.mxu0 %v327
  %565 = vmatmul.bf16.gmra.mxu0 %v104
  %v566 = vpop.f32.mrf.mxu0
  %v567 = vadd.f32 0.0, %v566
  %v568 = vpop.f32.mrf.mxu0
  %v569 = vadd.f32 0.0, %v568
  %570 = vdwg.mxu0
  %571 = vmatpush.bf16.msra.mxu0 %v387
  %572 = vmatpush.bf16.msra.mxu0 %v383
  %573 = vmatpush.bf16.msra.mxu0 %v379
  %574 = vmatpush.bf16.msra.mxu0 %v375
  %575 = vmatpush.bf16.msra.mxu0 %v371
  %576 = vmatpush.bf16.msra.mxu0 %v367
  %577 = vmatpush.bf16.msra.mxu0 %v363
  %578 = vmatpush.bf16.msra.mxu0 %v359
  %579 = vmatmul.bf16.gmra.mxu0 %v105
  %v580 = vpop.f32.mrf.mxu0
  %v581 = vadd.f32 %v567, %v580
  %v582 = vpop.f32.mrf.mxu0
  %v583 = vadd.f32 %v569, %v582
  %584 = vdwg.mxu0
  %585 = vmatpush.bf16.msra.mxu0 0
  %586 = vmatpush.bf16.msra.mxu0 0
  %587 = vmatpush.bf16.msra.mxu0 0
  %588 = vmatpush.bf16.msra.mxu0 0
  %589 = vmatpush.bf16.msra.mxu0 0
  %590 = vmatpush.bf16.msra.mxu0 0
  %591 = vmatpush.bf16.msra.mxu0 %v395
  %592 = vmatpush.bf16.msra.mxu0 %v391
  %593 = vmatmul.bf16.gmra.mxu0 %v471
  %v594 = vpop.f32.mrf.mxu0
  %v595 = vadd.f32 %v581, %v594
  %v596 = vpop.f32.mrf.mxu0
  %v597 = vadd.f32 %v583, %v596
  %598 = vdwg.mxu0
  %599 = vmatpush.bf16.msra.mxu0 %v356
  %600 = vmatpush.bf16.msra.mxu0 %v352
  %601 = vmatpush.bf16.msra.mxu0 %v348
  %602 = vmatpush.bf16.msra.mxu0 %v344
  %603 = vmatpush.bf16.msra.mxu0 %v340
  %604 = vmatpush.bf16.msra.mxu0 %v336
  %605 = vmatpush.bf16.msra.mxu0 %v332
  %606 = vmatpush.bf16.msra.mxu0 %v328
  %607 = vmatmul.bf16.gmra.mxu0 %v104
  %v608 = vpop.f32.mrf.mxu0
  %v609 = vadd.f32 0.0, %v608
  %v610 = vpop.f32.mrf.mxu0
  %v611 = vadd.f32 0.0, %v610
  %612 = vdwg.mxu0
  %613 = vmatpush.bf16.msra.mxu0 %v388
  %614 = vmatpush.bf16.msra.mxu0 %v384
  %615 = vmatpush.bf16.msra.mxu0 %v380
  %616 = vmatpush.bf16.msra.mxu0 %v376
  %617 = vmatpush.bf16.msra.mxu0 %v372
  %618 = vmatpush.bf16.msra.mxu0 %v368
  %619 = vmatpush.bf16.msra.mxu0 %v364
  %620 = vmatpush.bf16.msra.mxu0 %v360
  %621 = vmatmul.bf16.gmra.mxu0 %v105
  %v622 = vpop.f32.mrf.mxu0
  %v623 = vadd.f32 %v609, %v622
  %v624 = vpop.f32.mrf.mxu0
  %v625 = vadd.f32 %v611, %v624
  %626 = vdwg.mxu0
  %627 = vmatpush.bf16.msra.mxu0 0
  %628 = vmatpush.bf16.msra.mxu0 0
  %629 = vmatpush.bf16.msra.mxu0 0
  %630 = vmatpush.bf16.msra.mxu0 0
  %631 = vmatpush.bf16.msra.mxu0 0
  %632 = vmatpush.bf16.msra.mxu0 0
  %633 = vmatpush.bf16.msra.mxu0 %v396
  %634 = vmatpush.bf16.msra.mxu0 %v392
  %635 = vmatmul.bf16.gmra.mxu0 %v471
  %v636 = vpop.f32.mrf.mxu0
  %v637 = vadd.f32 %v623, %v636
  %v638 = vpop.f32.mrf.mxu0
  %v639 = vadd.f32 %v625, %v638
  %640 = vdwg.mxu0
  %v641 = vld [vmem:[%s2] sm:$0xff]
  %v642 = vld [vmem:[%s2 + $0x8] sm:$0xff]
  %644 = vset.pattern.permute.xlu0 0
  %645 = vperm.xlu0 %644, %v641
  %v646 = vpop.permute.xlu0 %645
  %649 = vset.pattern.permute.xlu0 0
  %650 = vperm.xlu0 %649, %v642
  %v651 = vpop.permute.xlu0 %650
  %v653 = vmul.f32 %v511, %v646
  %v654 = vmul.f32 %v553, %v646
  %v655 = vmul.f32 %v595, %v646
  %v656 = vmul.f32 %v637, %v646
  %v657 = vmul.f32 %v513, %v651
  %v658 = vmul.f32 %v555, %v651
  %v659 = vmul.f32 %v597, %v651
  %v660 = vmul.f32 %v639, %v651
  %v661 = vld [vmem:[%s3] sm:$0xff]
  %v662 = vld [vmem:[%s3 + $0x8] sm:$0xff]
  %664 = vset.pattern.permute.xlu0 0
  %665 = vperm.xlu0 %664, %v661
  %v666 = vpop.permute.xlu0 %665
  %669 = vset.pattern.permute.xlu0 0
  %670 = vperm.xlu0 %669, %v662
  %v671 = vpop.permute.xlu0 %670
  %v673 = vadd.f32 %v653, %v666
  %v674 = vadd.f32 %v654, %v666
  %v675 = vadd.f32 %v655, %v666
  %v676 = vadd.f32 %v656, %v666
  %v677 = vadd.f32 %v657, %v671
  %v678 = vadd.f32 %v658, %v671
  %v679 = vadd.f32 %v659, %v671
  %v680 = vadd.f32 %v660, %v671
  %v681 = vpack.c.bf16 %v674, %v673
  %v682 = vpack.c.bf16 %v676, %v675
  %v683 = vpack.c.bf16 %v678, %v677
  %v684 = vpack.c.bf16 %v680, %v679
  %685 = vst [vmem:[%s4] sm:$0xff] %v681
  %686 = vst [vmem:[%s4 + $0x8] sm:$0xff] %v682
  %687 = vst [vmem:[%s4 + $0x10] sm:$0xff] %v683
  %688 = vst [vmem:[%s4 + $0x18] sm:$0xff] %v684
  // Predicated region
  $region18: #{cifarnet_forward.12} parent=0 // pred_check
    _
  $region19: #{cifarnet_forward.12} parent=0 // pred_check_branch
    %690 = sbr.rel (0) target = $region21
  $region20: #{cifarnet_forward.12} parent=0 // pred_region
    _
  $region21: #{cifarnet_forward.12} parent=0 // pred_fallthru
    _
  // Predicated region
  $region22: #{cifarnet_forward.12} parent=0 // pred_check
    _
  $region23: #{cifarnet_forward.12} parent=0 // pred_check_branch
    %692 = sbr.rel (0) target = $region25
  $region24: #{cifarnet_forward.12} parent=0 // pred_region
    _
  $region25: #{cifarnet_forward.12} parent=0 // pred_fallthru
    _

// kernel: cifarnet_forward.13
$region0: #{cifarnet_forward.13}
  #allocation0 [shape = 'u32[]', space=smem, size = 0x4, offset = 0x4, fixed_abs, tag = 'smem constant byte address 0x4 - core index']
  #allocation1 [shape = 'u32[72,128]{1,0:T(1,128)}', space=vmem, size = 0x9000, scoped, tag = 'internal scratch']
  %s0 = inlined_call_operand.vmem [shape: bf16[32,144], index: 0, kind: input, shape index: {}]
  %s1 = inlined_call_operand.vmem [shape: bf16[144,512], index: 1, kind: input, shape index: {}]
  %s2 = inlined_call_operand.vmem [shape: f32[32,1], index: 2, kind: input, shape index: {}]
  %s3 = inlined_call_operand.vmem [shape: f32[32,1], index: 3, kind: input, shape index: {}]
  %s4 = inlined_call_operand.vmem [shape: bf16[32,512], index: 4, kind: output, shape index: {}]
  %s5 = sld [smem:[#allocation0]]
  $region26: #{cifarnet_forward.13} parent=0
    _
  %s7 = ssub.s32 1, %s5
  %s8 = scalar_select 0, %s7, %s5
  // Predicated region
  $region2: #{cifarnet_forward.13} parent=0 // pred_check
    _
  $region3: #{cifarnet_forward.13} parent=0 // pred_check_branch
    %10 = sbr.rel (0) target = $region5
  $region4: #{cifarnet_forward.13} parent=0 // pred_region
    _
  $region5: #{cifarnet_forward.13} parent=0 // pred_fallthru
    _
  // Predicated region
  $region6: #{cifarnet_forward.13} parent=0 // pred_check
    _
  $region7: #{cifarnet_forward.13} parent=0 // pred_check_branch
    %12 = sbr.rel (0) target = $region9
  $region8: #{cifarnet_forward.13} parent=0 // pred_region
    _
  $region9: #{cifarnet_forward.13} parent=0 // pred_fallthru
    _
  // Predicated region
  $region10: #{cifarnet_forward.13} parent=0 // pred_check
    _
  $region11: #{cifarnet_forward.13} parent=0 // pred_check_branch
    %14 = sbr.rel (0) target = $region13
  $region12: #{cifarnet_forward.13} parent=0 // pred_region
    _
  $region13: #{cifarnet_forward.13} parent=0 // pred_fallthru
    _
  // Predicated region
  $region14: #{cifarnet_forward.13} parent=0 // pred_check
    _
  $region15: #{cifarnet_forward.13} parent=0 // pred_check_branch
    %16 = sbr.rel (0) target = $region17
  $region16: #{cifarnet_forward.13} parent=0 // pred_region
    _
  $region17: #{cifarnet_forward.13} parent=0 // pred_fallthru
    _
  %v18 = vld [vmem:[%s0] sm:$0xff]
  %v19 = vld [vmem:[%s0 + $0x8] sm:$0xff]
  %v20 = vld [vmem:[%s0 + $0x10] sm:$0xff]
  %v21 = vld [vmem:[%s0 + $0x18] sm:$0xff]
  %v22 = vld [vmem:[%s1] sm:$0xff]
  %v23 = vld [vmem:[%s1 + $0x8] sm:$0xff]
  %v24 = vld [vmem:[%s1 + $0x10] sm:$0xff]
  %v25 = vld [vmem:[%s1 + $0x18] sm:$0xff]
  %v26 = vld [vmem:[%s1 + $0x20] sm:$0xff]
  %v27 = vld [vmem:[%s1 + $0x28] sm:$0xff]
  %v28 = vld [vmem:[%s1 + $0x30] sm:$0xff]
  %v29 = vld [vmem:[%s1 + $0x38] sm:$0xff]
  %v30 = vld [vmem:[%s1 + $0x40] sm:$0xff]
  %v31 = vld [vmem:[%s1 + $0x48] sm:$0xff]
  %v32 = vld [vmem:[%s1 + $0x50] sm:$0xff]
  %v33 = vld [vmem:[%s1 + $0x58] sm:$0xff]
  %v34 = vld [vmem:[%s1 + $0x60] sm:$0xff]
  %v35 = vld [vmem:[%s1 + $0x68] sm:$0xff]
  %v36 = vld [vmem:[%s1 + $0x70] sm:$0xff]
  %v37 = vld [vmem:[%s1 + $0x78] sm:$0xff]
  %v38 = vld [vmem:[%s1 + $0x80] sm:$0xff]
  %v39 = vld [vmem:[%s1 + $0x88] sm:$0xff]
  %v40 = vld [vmem:[%s1 + $0x90] sm:$0xff]
  %v41 = vld [vmem:[%s1 + $0x98] sm:$0xff]
  %v42 = vld [vmem:[%s1 + $0xa0] sm:$0xff]
  %v43 = vld [vmem:[%s1 + $0xa8] sm:$0xff]
  %v44 = vld [vmem:[%s1 + $0xb0] sm:$0xff]
  %v45 = vld [vmem:[%s1 + $0xb8] sm:$0xff]
  %v46 = vld [vmem:[%s1 + $0xc0] sm:$0xff]
  %v47 = vld [vmem:[%s1 + $0xc8] sm:$0xff]
  %v48 = vld [vmem:[%s1 + $0xd0] sm:$0xff]
  %v49 = vld [vmem:[%s1 + $0xd8] sm:$0xff]
  %v50 = vld [vmem:[%s1 + $0xe0] sm:$0xff]
  %v51 = vld [vmem:[%s1 + $0xe8] sm:$0xff]
  %v52 = vld [vmem:[%s1 + $0xf0] sm:$0xff]
  %v53 = vld [vmem:[%s1 + $0xf8] sm:$0xff]
  %v54 = vld [vmem:[%s1 + $0x100] sm:$0xff]
  %v55 = vld [vmem:[%s1 + $0x108] sm:$0xff]
  %v56 = vld [vmem:[%s1 + $0x110] sm:$0xff]
  %v57 = vld [vmem:[%s1 + $0x118] sm:$0xff]
  %v62 = vunpack.c.l.b16 %v18
  %v63 = vunpack.c.h.b16 %v18
  %v64 = vunpack.c.l.b16 %v19
  %v65 = vunpack.c.h.b16 %v19
  %v66 = vunpack.c.l.b16 %v20
  %v67 = vunpack.c.h.b16 %v20
  %v68 = vunpack.c.l.b16 %v21
  %v69 = vunpack.c.h.b16 %v21
  %v70 = vpack.c.b16 %v64, %v62
  %v71 = vpack.c.b16 %v65, %v63
  %v72 = vpack.c.b16 %v68, %v66
  %v73 = vpack.c.b16 %v69, %v67
  %v112 = vunpack.c.l.b16 %v22
  %v113 = vunpack.c.h.b16 %v22
  %v114 = vunpack.c.l.b16 %v23
  %v115 = vunpack.c.h.b16 %v23
  %v116 = vunpack.c.l.b16 %v24
  %v117 = vunpack.c.h.b16 %v24
  %v118 = vunpack.c.l.b16 %v25
  %v119 = vunpack.c.h.b16 %v25
  %v120 = vunpack.c.l.b16 %v26
  %v121 = vunpack.c.h.b16 %v26
  %v122 = vunpack.c.l.b16 %v27
  %v123 = vunpack.c.h.b16 %v27
  %v124 = vunpack.c.l.b16 %v28
  %v125 = vunpack.c.h.b16 %v28
  %v126 = vunpack.c.l.b16 %v29
  %v127 = vunpack.c.h.b16 %v29
  %v128 = vunpack.c.l.b16 %v30
  %v129 = vunpack.c.h.b16 %v30
  %v130 = vunpack.c.l.b16 %v31
  %v131 = vunpack.c.h.b16 %v31
  %v132 = vunpack.c.l.b16 %v32
  %v133 = vunpack.c.h.b16 %v32
  %v134 = vunpack.c.l.b16 %v33
  %v135 = vunpack.c.h.b16 %v33
  %v136 = vunpack.c.l.b16 %v34
  %v137 = vunpack.c.h.b16 %v34
  %v138 = vunpack.c.l.b16 %v35
  %v139 = vunpack.c.h.b16 %v35
  %v140 = vunpack.c.l.b16 %v36
  %v141 = vunpack.c.h.b16 %v36
  %v142 = vunpack.c.l.b16 %v37
  %v143 = vunpack.c.h.b16 %v37
  %v144 = vunpack.c.l.b16 %v38
  %v145 = vunpack.c.h.b16 %v38
  %v146 = vunpack.c.l.b16 %v39
  %v147 = vunpack.c.h.b16 %v39
  %v148 = vunpack.c.l.b16 %v40
  %v149 = vunpack.c.h.b16 %v40
  %v150 = vunpack.c.l.b16 %v41
  %v151 = vunpack.c.h.b16 %v41
  %v152 = vunpack.c.l.b16 %v42
  %v153 = vunpack.c.h.b16 %v42
  %v154 = vunpack.c.l.b16 %v43
  %v155 = vunpack.c.h.b16 %v43
  %v156 = vunpack.c.l.b16 %v44
  %v157 = vunpack.c.h.b16 %v44
  %v158 = vunpack.c.l.b16 %v45
  %v159 = vunpack.c.h.b16 %v45
  %v160 = vunpack.c.l.b16 %v46
  %v161 = vunpack.c.h.b16 %v46
  %v162 = vunpack.c.l.b16 %v47
  %v163 = vunpack.c.h.b16 %v47
  %v164 = vunpack.c.l.b16 %v48
  %v165 = vunpack.c.h.b16 %v48
  %v166 = vunpack.c.l.b16 %v49
  %v167 = vunpack.c.h.b16 %v49
  %v168 = vunpack.c.l.b16 %v50
  %v169 = vunpack.c.h.b16 %v50
  %v170 = vunpack.c.l.b16 %v51
  %v171 = vunpack.c.h.b16 %v51
  %v172 = vunpack.c.l.b16 %v52
  %v173 = vunpack.c.h.b16 %v52
  %v174 = vunpack.c.l.b16 %v53
  %v175 = vunpack.c.h.b16 %v53
  %v176 = vunpack.c.l.b16 %v54
  %v177 = vunpack.c.h.b16 %v54
  %v178 = vunpack.c.l.b16 %v55
  %v179 = vunpack.c.h.b16 %v55
  %v180 = vunpack.c.l.b16 %v56
  %v181 = vunpack.c.h.b16 %v56
  %v182 = vunpack.c.l.b16 %v57
  %v183 = vunpack.c.h.b16 %v57
  %v184 = vpack.c.b16 %v116, %v112
  %v185 = vpack.c.b16 %v117, %v113
  %v186 = vpack.c.b16 %v118, %v114
  %v187 = vpack.c.b16 %v119, %v115
  %v188 = vpack.c.b16 %v124, %v120
  %v189 = vpack.c.b16 %v125, %v121
  %v190 = vpack.c.b16 %v126, %v122
  %v191 = vpack.c.b16 %v127, %v123
  %v192 = vpack.c.b16 %v132, %v128
  %v193 = vpack.c.b16 %v133, %v129
  %v194 = vpack.c.b16 %v134, %v130
  %v195 = vpack.c.b16 %v135, %v131
  %v196 = vpack.c.b16 %v140, %v136
  %v197 = vpack.c.b16 %v141, %v137
  %v198 = vpack.c.b16 %v142, %v138
  %v199 = vpack.c.b16 %v143, %v139
  %v200 = vpack.c.b16 %v148, %v144
  %v201 = vpack.c.b16 %v149, %v145
  %v202 = vpack.c.b16 %v150, %v146
  %v203 = vpack.c.b16 %v151, %v147
  %v204 = vpack.c.b16 %v156, %v152
  %v205 = vpack.c.b16 %v157, %v153
  %v206 = vpack.c.b16 %v158, %v154
  %v207 = vpack.c.b16 %v159, %v155
  %v208 = vpack.c.b16 %v164, %v160
  %v209 = vpack.c.b16 %v165, %v161
  %v210 = vpack.c.b16 %v166, %v162
  %v211 = vpack.c.b16 %v167, %v163
  %v212 = vpack.c.b16 %v172, %v168
  %v213 = vpack.c.b16 %v173, %v169
  %v214 = vpack.c.b16 %v174, %v170
  %v215 = vpack.c.b16 %v175, %v171
  %v216 = vpack.c.b16 %v180, %v176
  %v217 = vpack.c.b16 %v181, %v177
  %v218 = vpack.c.b16 %v182, %v178
  %v219 = vpack.c.b16 %v183, %v179
  %vm256 = vcmask 130048
  %v258 = vsel %vm256, %v71, 0
  %v261 = vsel %vm256, %v73, 0
  %263 = vmatpush.bf16.msra.mxu0 %v212
  %264 = vmatpush.bf16.msra.mxu0 %v208
  %265 = vmatpush.bf16.msra.mxu0 %v204
  %266 = vmatpush.bf16.msra.mxu0 %v200
  %267 = vmatpush.bf16.msra.mxu0 %v196
  %268 = vmatpush.bf16.msra.mxu0 %v192
  %269 = vmatpush.bf16.msra.mxu0 %v188
  %270 = vmatpush.bf16.msra.mxu0 %v184
  %271 = vmatmul.bf16.gmra.mxu0 %v70
  %v272 = vpop.f32.mrf.mxu0
  %v273 = vadd.f32 0.0, %v272
  %v274 = vpop.f32.mrf.mxu0
  %v275 = vadd.f32 0.0, %v274
  %276 = vmatmul.bf16.gmra.mxu0 %v72
  %v277 = vpop.f32.mrf.mxu0
  %v278 = vadd.f32 0.0, %v277
  %v279 = vpop.f32.mrf.mxu0
  %v280 = vadd.f32 0.0, %v279
  %281 = vdwg.mxu0
  %282 = vmatpush.bf16.msra.mxu0 0
  %283 = vmatpush.bf16.msra.mxu0 0
  %284 = vmatpush.bf16.msra.mxu0 0
  %285 = vmatpush.bf16.msra.mxu0 0
  %286 = vmatpush.bf16.msra.mxu0 0
  %287 = vmatpush.bf16.msra.mxu0 0
  %288 = vmatpush.bf16.msra.mxu0 0
  %289 = vmatpush.bf16.msra.mxu0 %v216
  %290 = vmatmul.bf16.gmra.mxu0 %v258
  %v291 = vpop.f32.mrf.mxu0
  %v292 = vadd.f32 %v273, %v291
  %v293 = vpop.f32.mrf.mxu0
  %v294 = vadd.f32 %v275, %v293
  %295 = vmatmul.bf16.gmra.mxu0 %v261
  %v296 = vpop.f32.mrf.mxu0
  %v297 = vadd.f32 %v278, %v296
  %v298 = vpop.f32.mrf.mxu0
  %v299 = vadd.f32 %v280, %v298
  %300 = vdwg.mxu0
  %301 = vmatpush.bf16.msra.mxu0 %v213
  %302 = vmatpush.bf16.msra.mxu0 %v209
  %303 = vmatpush.bf16.msra.mxu0 %v205
  %304 = vmatpush.bf16.msra.mxu0 %v201
  %305 = vmatpush.bf16.msra.mxu0 %v197
  %306 = vmatpush.bf16.msra.mxu0 %v193
  %307 = vmatpush.bf16.msra.mxu0 %v189
  %308 = vmatpush.bf16.msra.mxu0 %v185
  %309 = vmatmul.bf16.gmra.mxu0 %v70
  %v310 = vpop.f32.mrf.mxu0
  %v311 = vadd.f32 0.0, %v310
  %v312 = vpop.f32.mrf.mxu0
  %v313 = vadd.f32 0.0, %v312
  %314 = vmatmul.bf16.gmra.mxu0 %v72
  %v315 = vpop.f32.mrf.mxu0
  %v316 = vadd.f32 0.0, %v315
  %v317 = vpop.f32.mrf.mxu0
  %v318 = vadd.f32 0.0, %v317
  %319 = vdwg.mxu0
  %320 = vmatpush.bf16.msra.mxu0 0
  %321 = vmatpush.bf16.msra.mxu0 0
  %322 = vmatpush.bf16.msra.mxu0 0
  %323 = vmatpush.bf16.msra.mxu0 0
  %324 = vmatpush.bf16.msra.mxu0 0
  %325 = vmatpush.bf16.msra.mxu0 0
  %326 = vmatpush.bf16.msra.mxu0 0
  %327 = vmatpush.bf16.msra.mxu0 %v217
  %328 = vmatmul.bf16.gmra.mxu0 %v258
  %v329 = vpop.f32.mrf.mxu0
  %v330 = vadd.f32 %v311, %v329
  %v331 = vpop.f32.mrf.mxu0
  %v332 = vadd.f32 %v313, %v331
  %333 = vmatmul.bf16.gmra.mxu0 %v261
  %v334 = vpop.f32.mrf.mxu0
  %v335 = vadd.f32 %v316, %v334
  %v336 = vpop.f32.mrf.mxu0
  %v337 = vadd.f32 %v318, %v336
  %338 = vdwg.mxu0
  %339 = vmatpush.bf16.msra.mxu0 %v214
  %340 = vmatpush.bf16.msra.mxu0 %v210
  %341 = vmatpush.bf16.msra.mxu0 %v206
  %342 = vmatpush.bf16.msra.mxu0 %v202
  %343 = vmatpush.bf16.msra.mxu0 %v198
  %344 = vmatpush.bf16.msra.mxu0 %v194
  %345 = vmatpush.bf16.msra.mxu0 %v190
  %346 = vmatpush.bf16.msra.mxu0 %v186
  %347 = vmatmul.bf16.gmra.mxu0 %v70
  %v348 = vpop.f32.mrf.mxu0
  %v349 = vadd.f32 0.0, %v348
  %v350 = vpop.f32.mrf.mxu0
  %v351 = vadd.f32 0.0, %v350
  %352 = vmatmul.bf16.gmra.mxu0 %v72
  %v353 = vpop.f32.mrf.mxu0
  %v354 = vadd.f32 0.0, %v353
  %v355 = vpop.f32.mrf.mxu0
  %v356 = vadd.f32 0.0, %v355
  %357 = vdwg.mxu0
  %358 = vmatpush.bf16.msra.mxu0 0
  %359 = vmatpush.bf16.msra.mxu0 0
  %360 = vmatpush.bf16.msra.mxu0 0
  %361 = vmatpush.bf16.msra.mxu0 0
  %362 = vmatpush.bf16.msra.mxu0 0
  %363 = vmatpush.bf16.msra.mxu0 0
  %364 = vmatpush.bf16.msra.mxu0 0
  %365 = vmatpush.bf16.msra.mxu0 %v218
  %366 = vmatmul.bf16.gmra.mxu0 %v258
  %v367 = vpop.f32.mrf.mxu0
  %v368 = vadd.f32 %v349, %v367
  %v369 = vpop.f32.mrf.mxu0
  %v370 = vadd.f32 %v351, %v369
  %371 = vmatmul.bf16.gmra.mxu0 %v261
  %v372 = vpop.f32.mrf.mxu0
  %v373 = vadd.f32 %v354, %v372
  %v374 = vpop.f32.mrf.mxu0
  %v375 = vadd.f32 %v356, %v374
  %376 = vdwg.mxu0
  %377 = vmatpush.bf16.msra.mxu0 %v215
  %378 = vmatpush.bf16.msra.mxu0 %v211
  %379 = vmatpush.bf16.msra.mxu0 %v207
  %380 = vmatpush.bf16.msra.mxu0 %v203
  %381 = vmatpush.bf16.msra.mxu0 %v199
  %382 = vmatpush.bf16.msra.mxu0 %v195
  %383 = vmatpush.bf16.msra.mxu0 %v191
  %384 = vmatpush.bf16.msra.mxu0 %v187
  %385 = vmatmul.bf16.gmra.mxu0 %v70
  %v386 = vpop.f32.mrf.mxu0
  %v387 = vadd.f32 0.0, %v386
  %v388 = vpop.f32.mrf.mxu0
  %v389 = vadd.f32 0.0, %v388
  %390 = vmatmul.bf16.gmra.mxu0 %v72
  %v391 = vpop.f32.mrf.mxu0
  %v392 = vadd.f32 0.0, %v391
  %v393 = vpop.f32.mrf.mxu0
  %v394 = vadd.f32 0.0, %v393
  %395 = vdwg.mxu0
  %396 = vmatpush.bf16.msra.mxu0 0
  %397 = vmatpush.bf16.msra.mxu0 0
  %398 = vmatpush.bf16.msra.mxu0 0
  %399 = vmatpush.bf16.msra.mxu0 0
  %400 = vmatpush.bf16.msra.mxu0 0
  %401 = vmatpush.bf16.msra.mxu0 0
  %402 = vmatpush.bf16.msra.mxu0 0
  %403 = vmatpush.bf16.msra.mxu0 %v219
  %404 = vmatmul.bf16.gmra.mxu0 %v258
  %v405 = vpop.f32.mrf.mxu0
  %v406 = vadd.f32 %v387, %v405
  %v407 = vpop.f32.mrf.mxu0
  %v408 = vadd.f32 %v389, %v407
  %409 = vmatmul.bf16.gmra.mxu0 %v261
  %v410 = vpop.f32.mrf.mxu0
  %v411 = vadd.f32 %v392, %v410
  %v412 = vpop.f32.mrf.mxu0
  %v413 = vadd.f32 %v394, %v412
  %414 = vdwg.mxu0
  %v415 = vmax.f32 %v292, 0.0
  %v416 = vmax.f32 %v330, 0.0
  %v417 = vmax.f32 %v368, 0.0
  %v418 = vmax.f32 %v406, 0.0
  %v419 = vmax.f32 %v294, 0.0
  %v420 = vmax.f32 %v332, 0.0
  %v421 = vmax.f32 %v370, 0.0
  %v422 = vmax.f32 %v408, 0.0
  %v423 = vmax.f32 %v297, 0.0
  %v424 = vmax.f32 %v335, 0.0
  %v425 = vmax.f32 %v373, 0.0
  %v426 = vmax.f32 %v411, 0.0
  %v427 = vmax.f32 %v299, 0.0
  %v428 = vmax.f32 %v337, 0.0
  %v429 = vmax.f32 %v375, 0.0
  %v430 = vmax.f32 %v413, 0.0
  %v431 = vld [vmem:[%s2] sm:$0xff]
  %v432 = vld [vmem:[%s2 + $0x8] sm:$0xff]
  %v433 = vld [vmem:[%s2 + $0x10] sm:$0xff]
  %v434 = vld [vmem:[%s2 + $0x18] sm:$0xff]
  %436 = vset.pattern.permute.xlu0 0
  %437 = vperm.xlu0 %436, %v431
  %v438 = vpop.permute.xlu0 %437
  %441 = vset.pattern.permute.xlu0 0
  %442 = vperm.xlu0 %441, %v432
  %v443 = vpop.permute.xlu0 %442
  %446 = vset.pattern.permute.xlu0 0
  %447 = vperm.xlu0 %446, %v433
  %v448 = vpop.permute.xlu0 %447
  %451 = vset.pattern.permute.xlu0 0
  %452 = vperm.xlu0 %451, %v434
  %v453 = vpop.permute.xlu0 %452
  %v455 = vmul.f32 %v415, %v438
  %v456 = vmul.f32 %v416, %v438
  %v457 = vmul.f32 %v417, %v438
  %v458 = vmul.f32 %v418, %v438
  %v459 = vmul.f32 %v419, %v443
  %v460 = vmul.f32 %v420, %v443
  %v461 = vmul.f32 %v421, %v443
  %v462 = vmul.f32 %v422, %v443
  %v463 = vmul.f32 %v423, %v448
  %v464 = vmul.f32 %v424, %v448
  %v465 = vmul.f32 %v425, %v448
  %v466 = vmul.f32 %v426, %v448
  %v467 = vmul.f32 %v427, %v453
  %v468 = vmul.f32 %v428, %v453
  %v469 = vmul.f32 %v429, %v453
  %v470 = vmul.f32 %v430, %v453
  %v471 = vld [vmem:[%s3] sm:$0xff]
  %v472 = vld [vmem:[%s3 + $0x8] sm:$0xff]
  %v473 = vld [vmem:[%s3 + $0x10] sm:$0xff]
  %v474 = vld [vmem:[%s3 + $0x18] sm:$0xff]
  %476 = vset.pattern.permute.xlu0 0
  %477 = vperm.xlu0 %476, %v471
  %v478 = vpop.permute.xlu0 %477
  %481 = vset.pattern.permute.xlu0 0
  %482 = vperm.xlu0 %481, %v472
  %v483 = vpop.permute.xlu0 %482
  %486 = vset.pattern.permute.xlu0 0
  %487 = vperm.xlu0 %486, %v473
  %v488 = vpop.permute.xlu0 %487
  %491 = vset.pattern.permute.xlu0 0
  %492 = vperm.xlu0 %491, %v474
  %v493 = vpop.permute.xlu0 %492
  %v495 = vadd.f32 %v455, %v478
  %v496 = vadd.f32 %v456, %v478
  %v497 = vadd.f32 %v457, %v478
  %v498 = vadd.f32 %v458, %v478
  %v499 = vadd.f32 %v459, %v483
  %v500 = vadd.f32 %v460, %v483
  %v501 = vadd.f32 %v461, %v483
  %v502 = vadd.f32 %v462, %v483
  %v503 = vadd.f32 %v463, %v488
  %v504 = vadd.f32 %v464, %v488
  %v505 = vadd.f32 %v465, %v488
  %v506 = vadd.f32 %v466, %v488
  %v507 = vadd.f32 %v467, %v493
  %v508 = vadd.f32 %v468, %v493
  %v509 = vadd.f32 %v469, %v493
  %v510 = vadd.f32 %v470, %v493
  %v511 = vpack.c.bf16 %v496, %v495
  %v512 = vpack.c.bf16 %v498, %v497
  %v513 = vpack.c.bf16 %v500, %v499
  %v514 = vpack.c.bf16 %v502, %v501
  %v515 = vpack.c.bf16 %v504, %v503
  %v516 = vpack.c.bf16 %v506, %v505
  %v517 = vpack.c.bf16 %v508, %v507
  %v518 = vpack.c.bf16 %v510, %v509
  %519 = vst [vmem:[%s4] sm:$0xff] %v511
  %520 = vst [vmem:[%s4 + $0x8] sm:$0xff] %v512
  %521 = vst [vmem:[%s4 + $0x10] sm:$0xff] %v513
  %522 = vst [vmem:[%s4 + $0x18] sm:$0xff] %v514
  %523 = vst [vmem:[%s4 + $0x20] sm:$0xff] %v515
  %524 = vst [vmem:[%s4 + $0x28] sm:$0xff] %v516
  %525 = vst [vmem:[%s4 + $0x30] sm:$0xff] %v517
  %526 = vst [vmem:[%s4 + $0x38] sm:$0xff] %v518
  // Predicated region
  $region18: #{cifarnet_forward.13} parent=0 // pred_check
    _
  $region19: #{cifarnet_forward.13} parent=0 // pred_check_branch
    %528 = sbr.rel (0) target = $region21
  $region20: #{cifarnet_forward.13} parent=0 // pred_region
    _
  $region21: #{cifarnet_forward.13} parent=0 // pred_fallthru
    _
  // Predicated region
  $region22: #{cifarnet_forward.13} parent=0 // pred_check
    _
  $region23: #{cifarnet_forward.13} parent=0 // pred_check_branch
    %530 = sbr.rel (0) target = $region25
  $region24: #{cifarnet_forward.13} parent=0 // pred_region
    _
  $region25: #{cifarnet_forward.13} parent=0 // pred_fallthru
    _

// kernel: cifarnet_forward.14
$region0: #{cifarnet_forward.14}
  #allocation0 [shape = 'u32[]', space=smem, size = 0x4, offset = 0x4, fixed_abs, tag = 'smem constant byte address 0x4 - core index']
  #allocation1 [shape = 'u32[72,128]{1,0:T(1,128)}', space=vmem, size = 0x9000, scoped, tag = 'internal scratch']
  %s0 = inlined_call_operand.vmem [shape: bf16[64,288], index: 0, kind: input, shape index: {}]
  %s1 = inlined_call_operand.vmem [shape: bf16[288,512], index: 1, kind: input, shape index: {}]
  %s2 = inlined_call_operand.vmem [shape: f32[64,1], index: 2, kind: input, shape index: {}]
  %s3 = inlined_call_operand.vmem [shape: f32[64,1], index: 3, kind: input, shape index: {}]
  %s4 = inlined_call_operand.vmem [shape: bf16[64,512], index: 4, kind: output, shape index: {}]
  %s5 = sld [smem:[#allocation0]]
  $region26: #{cifarnet_forward.14} parent=0
    _
  %s7 = ssub.s32 1, %s5
  %s8 = scalar_select 0, %s7, %s5
  // Predicated region
  $region2: #{cifarnet_forward.14} parent=0 // pred_check
    _
  $region3: #{cifarnet_forward.14} parent=0 // pred_check_branch
    %10 = sbr.rel (0) target = $region5
  $region4: #{cifarnet_forward.14} parent=0 // pred_region
    _
  $region5: #{cifarnet_forward.14} parent=0 // pred_fallthru
    _
  // Predicated region
  $region6: #{cifarnet_forward.14} parent=0 // pred_check
    _
  $region7: #{cifarnet_forward.14} parent=0 // pred_check_branch
    %12 = sbr.rel (0) target = $region9
  $region8: #{cifarnet_forward.14} parent=0 // pred_region
    _
  $region9: #{cifarnet_forward.14} parent=0 // pred_fallthru
    _
  // Predicated region
  $region10: #{cifarnet_forward.14} parent=0 // pred_check
    _
  $region11: #{cifarnet_forward.14} parent=0 // pred_check_branch
    %14 = sbr.rel (0) target = $region13
  $region12: #{cifarnet_forward.14} parent=0 // pred_region
    _
  $region13: #{cifarnet_forward.14} parent=0 // pred_fallthru
    _
  // Predicated region
  $region14: #{cifarnet_forward.14} parent=0 // pred_check
    _
  $region15: #{cifarnet_forward.14} parent=0 // pred_check_branch
    %16 = sbr.rel (0) target = $region17
  $region16: #{cifarnet_forward.14} parent=0 // pred_region
    _
  $region17: #{cifarnet_forward.14} parent=0 // pred_fallthru
    _
  %v18 = vld [vmem:[%s0] sm:$0xff]
  %v19 = vld [vmem:[%s0 + $0x8] sm:$0xf]
  %v20 = vld [vmem:[%s0 + $0xc] sm:$0xff]
  %v21 = vld [vmem:[%s0 + $0x14] sm:$0xf]
  %v22 = vld [vmem:[%s0 + $0x18] sm:$0xff]
  %v23 = vld [vmem:[%s0 + $0x20] sm:$0xf]
  %v24 = vld [vmem:[%s0 + $0x24] sm:$0xff]
  %v25 = vld [vmem:[%s0 + $0x2c] sm:$0xf]
  %v26 = vld [vmem:[%s0 + $0x30] sm:$0xff]
  %v27 = vld [vmem:[%s0 + $0x38] sm:$0xf]
  %v28 = vld [vmem:[%s0 + $0x3c] sm:$0xff]
  %v29 = vld [vmem:[%s0 + $0x44] sm:$0xf]
  %v30 = vld [vmem:[%s0 + $0x48] sm:$0xff]
  %v31 = vld [vmem:[%s0 + $0x50] sm:$0xf]
  %v32 = vld [vmem:[%s0 + $0x54] sm:$0xff]
  %v33 = vld [vmem:[%s0 + $0x5c] sm:$0xf]
  %v34 = vld [vmem:[%s1] sm:$0xff]
  %v35 = vld [vmem:[%s1 + $0x8] sm:$0xff]
  %v36 = vld [vmem:[%s1 + $0x10] sm:$0xff]
  %v37 = vld [vmem:[%s1 + $0x18] sm:$0xff]
  %v38 = vld [vmem:[%s1 + $0x20] sm:$0xff]
  %v39 = vld [vmem:[%s1 + $0x28] sm:$0xff]
  %v40 = vld [vmem:[%s1 + $0x30] sm:$0xff]
  %v41 = vld [vmem:[%s1 + $0x38] sm:$0xff]
  %v42 = vld [vmem:[%s1 + $0x40] sm:$0xff]
  %v43 = vld [vmem:[%s1 + $0x48] sm:$0xff]
  %v44 = vld [vmem:[%s1 + $0x50] sm:$0xff]
  %v45 = vld [vmem:[%s1 + $0x58] sm:$0xff]
  %v46 = vld [vmem:[%s1 + $0x60] sm:$0xff]
  %v47 = vld [vmem:[%s1 + $0x68] sm:$0xff]
  %v48 = vld [vmem:[%s1 + $0x70] sm:$0xff]
  %v49 = vld [vmem:[%s1 + $0x78] sm:$0xff]
  %v50 = vld [vmem:[%s1 + $0x80] sm:$0xff]
  %v51 = vld [vmem:[%s1 + $0x88] sm:$0xff]
  %v52 = vld [vmem:[%s1 + $0x90] sm:$0xff]
  %v53 = vld [vmem:[%s1 + $0x98] sm:$0xff]
  %v54 = vld [vmem:[%s1 + $0xa0] sm:$0xff]
  %v55 = vld [vmem:[%s1 + $0xa8] sm:$0xff]
  %v56 = vld [vmem:[%s1 + $0xb0] sm:$0xff]
  %v57 = vld [vmem:[%s1 + $0xb8] sm:$0xff]
  %v58 = vld [vmem:[%s1 + $0xc0] sm:$0xff]
  %v59 = vld [vmem:[%s1 + $0xc8] sm:$0xff]
  %v60 = vld [vmem:[%s1 + $0xd0] sm:$0xff]
  %v61 = vld [vmem:[%s1 + $0xd8] sm:$0xff]
  %v62 = vld [vmem:[%s1 + $0xe0] sm:$0xff]
  %v63 = vld [vmem:[%s1 + $0xe8] sm:$0xff]
  %v64 = vld [vmem:[%s1 + $0xf0] sm:$0xff]
  %v65 = vld [vmem:[%s1 + $0xf8] sm:$0xff]
  %v66 = vld [vmem:[%s1 + $0x100] sm:$0xff]
  %v67 = vld [vmem:[%s1 + $0x108] sm:$0xff]
  %v68 = vld [vmem:[%s1 + $0x110] sm:$0xff]
  %v69 = vld [vmem:[%s1 + $0x118] sm:$0xff]
  %v70 = vld [vmem:[%s1 + $0x120] sm:$0xff]
  %v71 = vld [vmem:[%s1 + $0x128] sm:$0xff]
  %v72 = vld [vmem:[%s1 + $0x130] sm:$0xff]
  %v73 = vld [vmem:[%s1 + $0x138] sm:$0xff]
  %v74 = vld [vmem:[%s1 + $0x140] sm:$0xff]
  %v75 = vld [vmem:[%s1 + $0x148] sm:$0xff]
  %v76 = vld [vmem:[%s1 + $0x150] sm:$0xff]
  %v77 = vld [vmem:[%s1 + $0x158] sm:$0xff]
  %v78 = vld [vmem:[%s1 + $0x160] sm:$0xff]
  %v79 = vld [vmem:[%s1 + $0x168] sm:$0xff]
  %v80 = vld [vmem:[%s1 + $0x170] sm:$0xff]
  %v81 = vld [vmem:[%s1 + $0x178] sm:$0xff]
  %v82 = vld [vmem:[%s1 + $0x180] sm:$0xff]
  %v83 = vld [vmem:[%s1 + $0x188] sm:$0xff]
  %v84 = vld [vmem:[%s1 + $0x190] sm:$0xff]
  %v85 = vld [vmem:[%s1 + $0x198] sm:$0xff]
  %v86 = vld [vmem:[%s1 + $0x1a0] sm:$0xff]
  %v87 = vld [vmem:[%s1 + $0x1a8] sm:$0xff]
  %v88 = vld [vmem:[%s1 + $0x1b0] sm:$0xff]
  %v89 = vld [vmem:[%s1 + $0x1b8] sm:$0xff]
  %v90 = vld [vmem:[%s1 + $0x1c0] sm:$0xff]
  %v91 = vld [vmem:[%s1 + $0x1c8] sm:$0xff]
  %v92 = vld [vmem:[%s1 + $0x1d0] sm:$0xff]
  %v93 = vld [vmem:[%s1 + $0x1d8] sm:$0xff]
  %v94 = vld [vmem:[%s1 + $0x1e0] sm:$0xff]
  %v95 = vld [vmem:[%s1 + $0x1e8] sm:$0xff]
  %v96 = vld [vmem:[%s1 + $0x1f0] sm:$0xff]
  %v97 = vld [vmem:[%s1 + $0x1f8] sm:$0xff]
  %v98 = vld [vmem:[%s1 + $0x200] sm:$0xff]
  %v99 = vld [vmem:[%s1 + $0x208] sm:$0xff]
  %v100 = vld [vmem:[%s1 + $0x210] sm:$0xff]
  %v101 = vld [vmem:[%s1 + $0x218] sm:$0xff]
  %v102 = vld [vmem:[%s1 + $0x220] sm:$0xff]
  %v103 = vld [vmem:[%s1 + $0x228] sm:$0xff]
  %v104 = vld [vmem:[%s1 + $0x230] sm:$0xff]
  %v105 = vld [vmem:[%s1 + $0x238] sm:$0xff]
  %v122 = vunpack.c.l.b16 %v18
  %v123 = vunpack.c.h.b16 %v18
  %v124 = vunpack.c.l.b16 %v19
  %v125 = vunpack.c.l.b16 %v20
  %v126 = vunpack.c.h.b16 %v20
  %v127 = vunpack.c.l.b16 %v21
  %v128 = vunpack.c.l.b16 %v22
  %v129 = vunpack.c.h.b16 %v22
  %v130 = vunpack.c.l.b16 %v23
  %v131 = vunpack.c.l.b16 %v24
  %v132 = vunpack.c.h.b16 %v24
  %v133 = vunpack.c.l.b16 %v25
  %v134 = vunpack.c.l.b16 %v26
  %v135 = vunpack.c.h.b16 %v26
  %v136 = vunpack.c.l.b16 %v27
  %v137 = vunpack.c.l.b16 %v28
  %v138 = vunpack.c.h.b16 %v28
  %v139 = vunpack.c.l.b16 %v29
  %v140 = vunpack.c.l.b16 %v30
  %v141 = vunpack.c.h.b16 %v30
  %v142 = vunpack.c.l.b16 %v31
  %v143 = vunpack.c.l.b16 %v32
  %v144 = vunpack.c.h.b16 %v32
  %v145 = vunpack.c.l.b16 %v33
  %v146 = vpack.c.b16 %v125, %v122
  %v147 = vpack.c.b16 %v126, %v123
  %v148 = vpack.c.b16 %v127, %v124
  %v149 = vpack.c.b16 %v131, %v128
  %v150 = vpack.c.b16 %v132, %v129
  %v151 = vpack.c.b16 %v133, %v130
  %v152 = vpack.c.b16 %v137, %v134
  %v153 = vpack.c.b16 %v138, %v135
  %v154 = vpack.c.b16 %v139, %v136
  %v155 = vpack.c.b16 %v143, %v140
  %v156 = vpack.c.b16 %v144, %v141
  %v157 = vpack.c.b16 %v145, %v142
  %v238 = vunpack.c.l.b16 %v34
  %v239 = vunpack.c.h.b16 %v34
  %v240 = vunpack.c.l.b16 %v35
  %v241 = vunpack.c.h.b16 %v35
  %v242 = vunpack.c.l.b16 %v36
  %v243 = vunpack.c.h.b16 %v36
  %v244 = vunpack.c.l.b16 %v37
  %v245 = vunpack.c.h.b16 %v37
  %v246 = vunpack.c.l.b16 %v38
  %v247 = vunpack.c.h.b16 %v38
  %v248 = vunpack.c.l.b16 %v39
  %v249 = vunpack.c.h.b16 %v39
  %v250 = vunpack.c.l.b16 %v40
  %v251 = vunpack.c.h.b16 %v40
  %v252 = vunpack.c.l.b16 %v41
  %v253 = vunpack.c.h.b16 %v41
  %v254 = vunpack.c.l.b16 %v42
  %v255 = vunpack.c.h.b16 %v42
  %v256 = vunpack.c.l.b16 %v43
  %v257 = vunpack.c.h.b16 %v43
  %v258 = vunpack.c.l.b16 %v44
  %v259 = vunpack.c.h.b16 %v44
  %v260 = vunpack.c.l.b16 %v45
  %v261 = vunpack.c.h.b16 %v45
  %v262 = vunpack.c.l.b16 %v46
  %v263 = vunpack.c.h.b16 %v46
  %v264 = vunpack.c.l.b16 %v47
  %v265 = vunpack.c.h.b16 %v47
  %v266 = vunpack.c.l.b16 %v48
  %v267 = vunpack.c.h.b16 %v48
  %v268 = vunpack.c.l.b16 %v49
  %v269 = vunpack.c.h.b16 %v49
  %v270 = vunpack.c.l.b16 %v50
  %v271 = vunpack.c.h.b16 %v50
  %v272 = vunpack.c.l.b16 %v51
  %v273 = vunpack.c.h.b16 %v51
  %v274 = vunpack.c.l.b16 %v52
  %v275 = vunpack.c.h.b16 %v52
  %v276 = vunpack.c.l.b16 %v53
  %v277 = vunpack.c.h.b16 %v53
  %v278 = vunpack.c.l.b16 %v54
  %v279 = vunpack.c.h.b16 %v54
  %v280 = vunpack.c.l.b16 %v55
  %v281 = vunpack.c.h.b16 %v55
  %v282 = vunpack.c.l.b16 %v56
  %v283 = vunpack.c.h.b16 %v56
  %v284 = vunpack.c.l.b16 %v57
  %v285 = vunpack.c.h.b16 %v57
  %v286 = vunpack.c.l.b16 %v58
  %v287 = vunpack.c.h.b16 %v58
  %v288 = vunpack.c.l.b16 %v59
  %v289 = vunpack.c.h.b16 %v59
  %v290 = vunpack.c.l.b16 %v60
  %v291 = vunpack.c.h.b16 %v60
  %v292 = vunpack.c.l.b16 %v61
  %v293 = vunpack.c.h.b16 %v61
  %v294 = vunpack.c.l.b16 %v62
  %v295 = vunpack.c.h.b16 %v62
  %v296 = vunpack.c.l.b16 %v63
  %v297 = vunpack.c.h.b16 %v63
  %v298 = vunpack.c.l.b16 %v64
  %v299 = vunpack.c.h.b16 %v64
  %v300 = vunpack.c.l.b16 %v65
  %v301 = vunpack.c.h.b16 %v65
  %v302 = vunpack.c.l.b16 %v66
  %v303 = vunpack.c.h.b16 %v66
  %v304 = vunpack.c.l.b16 %v67
  %v305 = vunpack.c.h.b16 %v67
  %v306 = vunpack.c.l.b16 %v68
  %v307 = vunpack.c.h.b16 %v68
  %v308 = vunpack.c.l.b16 %v69
  %v309 = vunpack.c.h.b16 %v69
  %v310 = vunpack.c.l.b16 %v70
  %v311 = vunpack.c.h.b16 %v70
  %v312 = vunpack.c.l.b16 %v71
  %v313 = vunpack.c.h.b16 %v71
  %v314 = vunpack.c.l.b16 %v72
  %v315 = vunpack.c.h.b16 %v72
  %v316 = vunpack.c.l.b16 %v73
  %v317 = vunpack.c.h.b16 %v73
  %v318 = vunpack.c.l.b16 %v74
  %v319 = vunpack.c.h.b16 %v74
  %v320 = vunpack.c.l.b16 %v75
  %v321 = vunpack.c.h.b16 %v75
  %v322 = vunpack.c.l.b16 %v76
  %v323 = vunpack.c.h.b16 %v76
  %v324 = vunpack.c.l.b16 %v77
  %v325 = vunpack.c.h.b16 %v77
  %v326 = vunpack.c.l.b16 %v78
  %v327 = vunpack.c.h.b16 %v78
  %v328 = vunpack.c.l.b16 %v79
  %v329 = vunpack.c.h.b16 %v79
  %v330 = vunpack.c.l.b16 %v80
  %v331 = vunpack.c.h.b16 %v80
  %v332 = vunpack.c.l.b16 %v81
  %v333 = vunpack.c.h.b16 %v81
  %v334 = vunpack.c.l.b16 %v82
  %v335 = vunpack.c.h.b16 %v82
  %v336 = vunpack.c.l.b16 %v83
  %v337 = vunpack.c.h.b16 %v83
  %v338 = vunpack.c.l.b16 %v84
  %v339 = vunpack.c.h.b16 %v84
  %v340 = vunpack.c.l.b16 %v85
  %v341 = vunpack.c.h.b16 %v85
  %v342 = vunpack.c.l.b16 %v86
  %v343 = vunpack.c.h.b16 %v86
  %v344 = vunpack.c.l.b16 %v87
  %v345 = vunpack.c.h.b16 %v87
  %v346 = vunpack.c.l.b16 %v88
  %v347 = vunpack.c.h.b16 %v88
  %v348 = vunpack.c.l.b16 %v89
  %v349 = vunpack.c.h.b16 %v89
  %v350 = vunpack.c.l.b16 %v90
  %v351 = vunpack.c.h.b16 %v90
  %v352 = vunpack.c.l.b16 %v91
  %v353 = vunpack.c.h.b16 %v91
  %v354 = vunpack.c.l.b16 %v92
  %v355 = vunpack.c.h.b16 %v92
  %v356 = vunpack.c.l.b16 %v93
  %v357 = vunpack.c.h.b16 %v93
  %v358 = vunpack.c.l.b16 %v94
  %v359 = vunpack.c.h.b16 %v94
  %v360 = vunpack.c.l.b16 %v95
  %v361 = vunpack.c.h.b16 %v95
  %v362 = vunpack.c.l.b16 %v96
  %v363 = vunpack.c.h.b16 %v96
  %v364 = vunpack.c.l.b16 %v97
  %v365 = vunpack.c.h.b16 %v97
  %v366 = vunpack.c.l.b16 %v98
  %v367 = vunpack.c.h.b16 %v98
  %v368 = vunpack.c.l.b16 %v99
  %v369 = vunpack.c.h.b16 %v99
  %v370 = vunpack.c.l.b16 %v100
  %v371 = vunpack.c.h.b16 %v100
  %v372 = vunpack.c.l.b16 %v101
  %v373 = vunpack.c.h.b16 %v101
  %v374 = vunpack.c.l.b16 %v102
  %v375 = vunpack.c.h.b16 %v102
  %v376 = vunpack.c.l.b16 %v103
  %v377 = vunpack.c.h.b16 %v103
  %v378 = vunpack.c.l.b16 %v104
  %v379 = vunpack.c.h.b16 %v104
  %v380 = vunpack.c.l.b16 %v105
  %v381 = vunpack.c.h.b16 %v105
  %v382 = vpack.c.b16 %v242, %v238
  %v383 = vpack.c.b16 %v243, %v239
  %v384 = vpack.c.b16 %v244, %v240
  %v385 = vpack.c.b16 %v245, %v241
  %v386 = vpack.c.b16 %v250, %v246
  %v387 = vpack.c.b16 %v251, %v247
  %v388 = vpack.c.b16 %v252, %v248
  %v389 = vpack.c.b16 %v253, %v249
  %v390 = vpack.c.b16 %v258, %v254
  %v391 = vpack.c.b16 %v259, %v255
  %v392 = vpack.c.b16 %v260, %v256
  %v393 = vpack.c.b16 %v261, %v257
  %v394 = vpack.c.b16 %v266, %v262
  %v395 = vpack.c.b16 %v267, %v263
  %v396 = vpack.c.b16 %v268, %v264
  %v397 = vpack.c.b16 %v269, %v265
  %v398 = vpack.c.b16 %v274, %v270
  %v399 = vpack.c.b16 %v275, %v271
  %v400 = vpack.c.b16 %v276, %v272
  %v401 = vpack.c.b16 %v277, %v273
  %v402 = vpack.c.b16 %v282, %v278
  %v403 = vpack.c.b16 %v283, %v279
  %v404 = vpack.c.b16 %v284, %v280
  %v405 = vpack.c.b16 %v285, %v281
  %v406 = vpack.c.b16 %v290, %v286
  %v407 = vpack.c.b16 %v291, %v287
  %v408 = vpack.c.b16 %v292, %v288
  %v409 = vpack.c.b16 %v293, %v289
  %v410 = vpack.c.b16 %v298, %v294
  %v411 = vpack.c.b16 %v299, %v295
  %v412 = vpack.c.b16 %v300, %v296
  %v413 = vpack.c.b16 %v301, %v297
  %v414 = vpack.c.b16 %v306, %v302
  %v415 = vpack.c.b16 %v307, %v303
  %v416 = vpack.c.b16 %v308, %v304
  %v417 = vpack.c.b16 %v309, %v305
  %v418 = vpack.c.b16 %v314, %v310
  %v419 = vpack.c.b16 %v315, %v311
  %v420 = vpack.c.b16 %v316, %v312
  %v421 = vpack.c.b16 %v317, %v313
  %v422 = vpack.c.b16 %v322, %v318
  %v423 = vpack.c.b16 %v323, %v319
  %v424 = vpack.c.b16 %v324, %v320
  %v425 = vpack.c.b16 %v325, %v321
  %v426 = vpack.c.b16 %v330, %v326
  %v427 = vpack.c.b16 %v331, %v327
  %v428 = vpack.c.b16 %v332, %v328
  %v429 = vpack.c.b16 %v333, %v329
  %v430 = vpack.c.b16 %v338, %v334
  %v431 = vpack.c.b16 %v339, %v335
  %v432 = vpack.c.b16 %v340, %v336
  %v433 = vpack.c.b16 %v341, %v337
  %v434 = vpack.c.b16 %v346, %v342
  %v435 = vpack.c.b16 %v347, %v343
  %v436 = vpack.c.b16 %v348, %v344
  %v437 = vpack.c.b16 %v349, %v345
  %v438 = vpack.c.b16 %v354, %v350
  %v439 = vpack.c.b16 %v355, %v351
  %v440 = vpack.c.b16 %v356, %v352
  %v441 = vpack.c.b16 %v357, %v353
  %v442 = vpack.c.b16 %v362, %v358
  %v443 = vpack.c.b16 %v363, %v359
  %v444 = vpack.c.b16 %v364, %v360
  %v445 = vpack.c.b16 %v365, %v361
  %v446 = vpack.c.b16 %v370, %v366
  %v447 = vpack.c.b16 %v371, %v367
  %v448 = vpack.c.b16 %v372, %v368
  %v449 = vpack.c.b16 %v373, %v369
  %v450 = vpack.c.b16 %v378, %v374
  %v451 = vpack.c.b16 %v379, %v375
  %v452 = vpack.c.b16 %v380, %v376
  %v453 = vpack.c.b16 %v381, %v377
  %vm526 = vcmask 261120
  %v528 = vsel %vm526, %v148, 0
  %v531 = vsel %vm526, %v151, 0
  %v534 = vsel %vm526, %v154, 0
  %v537 = vsel %vm526, %v157, 0
  %539 = vmatpush.bf16.msra.mxu0 %v410
  %540 = vmatpush.bf16.msra.mxu0 %v406
  %541 = vmatpush.bf16.msra.mxu0 %v402
  %542 = vmatpush.bf16.msra.mxu0 %v398
  %543 = vmatpush.bf16.msra.mxu0 %v394
  %544 = vmatpush.bf16.msra.mxu0 %v390
  %545 = vmatpush.bf16.msra.mxu0 %v386
  %546 = vmatpush.bf16.msra.mxu0 %v382
  %547 = vmatmul.bf16.gmra.mxu0 %v146
  %v548 = vpop.f32.mrf.mxu0
  %v549 = vadd.f32 0.0, %v548
  %v550 = vpop.f32.mrf.mxu0
  %v551 = vadd.f32 0.0, %v550
  %552 = vmatmul.bf16.gmra.mxu0 %v149
  %v553 = vpop.f32.mrf.mxu0
  %v554 = vadd.f32 0.0, %v553
  %v555 = vpop.f32.mrf.mxu0
  %v556 = vadd.f32 0.0, %v555
  %557 = vmatmul.bf16.gmra.mxu0 %v152
  %v558 = vpop.f32.mrf.mxu0
  %v559 = vadd.f32 0.0, %v558
  %v560 = vpop.f32.mrf.mxu0
  %v561 = vadd.f32 0.0, %v560
  %562 = vmatmul.bf16.gmra.mxu0 %v155
  %v563 = vpop.f32.mrf.mxu0
  %v564 = vadd.f32 0.0, %v563
  %v565 = vpop.f32.mrf.mxu0
  %v566 = vadd.f32 0.0, %v565
  %567 = vdwg.mxu0
  %568 = vmatpush.bf16.msra.mxu0 %v442
  %569 = vmatpush.bf16.msra.mxu0 %v438
  %570 = vmatpush.bf16.msra.mxu0 %v434
  %571 = vmatpush.bf16.msra.mxu0 %v430
  %572 = vmatpush.bf16.msra.mxu0 %v426
  %573 = vmatpush.bf16.msra.mxu0 %v422
  %574 = vmatpush.bf16.msra.mxu0 %v418
  %575 = vmatpush.bf16.msra.mxu0 %v414
  %576 = vmatmul.bf16.gmra.mxu0 %v147
  %v577 = vpop.f32.mrf.mxu0
  %v578 = vadd.f32 %v549, %v577
  %v579 = vpop.f32.mrf.mxu0
  %v580 = vadd.f32 %v551, %v579
  %581 = vmatmul.bf16.gmra.mxu0 %v150
  %v582 = vpop.f32.mrf.mxu0
  %v583 = vadd.f32 %v554, %v582
  %v584 = vpop.f32.mrf.mxu0
  %v585 = vadd.f32 %v556, %v584
  %586 = vmatmul.bf16.gmra.mxu0 %v153
  %v587 = vpop.f32.mrf.mxu0
  %v588 = vadd.f32 %v559, %v587
  %v589 = vpop.f32.mrf.mxu0
  %v590 = vadd.f32 %v561, %v589
  %591 = vmatmul.bf16.gmra.mxu0 %v156
  %v592 = vpop.f32.mrf.mxu0
  %v593 = vadd.f32 %v564, %v592
  %v594 = vpop.f32.mrf.mxu0
  %v595 = vadd.f32 %v566, %v594
  %596 = vdwg.mxu0
  %597 = vmatpush.bf16.msra.mxu0 0
  %598 = vmatpush.bf16.msra.mxu0 0
  %599 = vmatpush.bf16.msra.mxu0 0
  %600 = vmatpush.bf16.msra.mxu0 0
  %601 = vmatpush.bf16.msra.mxu0 0
  %602 = vmatpush.bf16.msra.mxu0 0
  %603 = vmatpush.bf16.msra.mxu0 %v450
  %604 = vmatpush.bf16.msra.mxu0 %v446
  %605 = vmatmul.bf16.gmra.mxu0 %v528
  %v606 = vpop.f32.mrf.mxu0
  %v607 = vadd.f32 %v578, %v606
  %v608 = vpop.f32.mrf.mxu0
  %v609 = vadd.f32 %v580, %v608
  %610 = vmatmul.bf16.gmra.mxu0 %v531
  %v611 = vpop.f32.mrf.mxu0
  %v612 = vadd.f32 %v583, %v611
  %v613 = vpop.f32.mrf.mxu0
  %v614 = vadd.f32 %v585, %v613
  %615 = vmatmul.bf16.gmra.mxu0 %v534
  %v616 = vpop.f32.mrf.mxu0
  %v617 = vadd.f32 %v588, %v616
  %v618 = vpop.f32.mrf.mxu0
  %v619 = vadd.f32 %v590, %v618
  %620 = vmatmul.bf16.gmra.mxu0 %v537
  %v621 = vpop.f32.mrf.mxu0
  %v622 = vadd.f32 %v593, %v621
  %v623 = vpop.f32.mrf.mxu0
  %v624 = vadd.f32 %v595, %v623
  %625 = vdwg.mxu0
  %626 = vmatpush.bf16.msra.mxu0 %v411
  %627 = vmatpush.bf16.msra.mxu0 %v407
  %628 = vmatpush.bf16.msra.mxu0 %v403
  %629 = vmatpush.bf16.msra.mxu0 %v399
  %630 = vmatpush.bf16.msra.mxu0 %v395
  %631 = vmatpush.bf16.msra.mxu0 %v391
  %632 = vmatpush.bf16.msra.mxu0 %v387
  %633 = vmatpush.bf16.msra.mxu0 %v383
  %634 = vmatmul.bf16.gmra.mxu0 %v146
  %v635 = vpop.f32.mrf.mxu0
  %v636 = vadd.f32 0.0, %v635
  %v637 = vpop.f32.mrf.mxu0
  %v638 = vadd.f32 0.0, %v637
  %639 = vmatmul.bf16.gmra.mxu0 %v149
  %v640 = vpop.f32.mrf.mxu0
  %v641 = vadd.f32 0.0, %v640
  %v642 = vpop.f32.mrf.mxu0
  %v643 = vadd.f32 0.0, %v642
  %644 = vmatmul.bf16.gmra.mxu0 %v152
  %v645 = vpop.f32.mrf.mxu0
  %v646 = vadd.f32 0.0, %v645
  %v647 = vpop.f32.mrf.mxu0
  %v648 = vadd.f32 0.0, %v647
  %649 = vmatmul.bf16.gmra.mxu0 %v155
  %v650 = vpop.f32.mrf.mxu0
  %v651 = vadd.f32 0.0, %v650
  %v652 = vpop.f32.mrf.mxu0
  %v653 = vadd.f32 0.0, %v652
  %654 = vdwg.mxu0
  %655 = vmatpush.bf16.msra.mxu0 %v443
  %656 = vmatpush.bf16.msra.mxu0 %v439
  %657 = vmatpush.bf16.msra.mxu0 %v435
  %658 = vmatpush.bf16.msra.mxu0 %v431
  %659 = vmatpush.bf16.msra.mxu0 %v427
  %660 = vmatpush.bf16.msra.mxu0 %v423
  %661 = vmatpush.bf16.msra.mxu0 %v419
  %662 = vmatpush.bf16.msra.mxu0 %v415
  %663 = vmatmul.bf16.gmra.mxu0 %v147
  %v664 = vpop.f32.mrf.mxu0
  %v665 = vadd.f32 %v636, %v664
  %v666 = vpop.f32.mrf.mxu0
  %v667 = vadd.f32 %v638, %v666
  %668 = vmatmul.bf16.gmra.mxu0 %v150
  %v669 = vpop.f32.mrf.mxu0
  %v670 = vadd.f32 %v641, %v669
  %v671 = vpop.f32.mrf.mxu0
  %v672 = vadd.f32 %v643, %v671
  %673 = vmatmul.bf16.gmra.mxu0 %v153
  %v674 = vpop.f32.mrf.mxu0
  %v675 = vadd.f32 %v646, %v674
  %v676 = vpop.f32.mrf.mxu0
  %v677 = vadd.f32 %v648, %v676
  %678 = vmatmul.bf16.gmra.mxu0 %v156
  %v679 = vpop.f32.mrf.mxu0
  %v680 = vadd.f32 %v651, %v679
  %v681 = vpop.f32.mrf.mxu0
  %v682 = vadd.f32 %v653, %v681
  %683 = vdwg.mxu0
  %684 = vmatpush.bf16.msra.mxu0 0
  %685 = vmatpush.bf16.msra.mxu0 0
  %686 = vmatpush.bf16.msra.mxu0 0
  %687 = vmatpush.bf16.msra.mxu0 0
  %688 = vmatpush.bf16.msra.mxu0 0
  %689 = vmatpush.bf16.msra.mxu0 0
  %690 = vmatpush.bf16.msra.mxu0 %v451
  %691 = vmatpush.bf16.msra.mxu0 %v447
  %692 = vmatmul.bf16.gmra.mxu0 %v528
  %v693 = vpop.f32.mrf.mxu0
  %v694 = vadd.f32 %v665, %v693
  %v695 = vpop.f32.mrf.mxu0
  %v696 = vadd.f32 %v667, %v695
  %697 = vmatmul.bf16.gmra.mxu0 %v531
  %v698 = vpop.f32.mrf.mxu0
  %v699 = vadd.f32 %v670, %v698
  %v700 = vpop.f32.mrf.mxu0
  %v701 = vadd.f32 %v672, %v700
  %702 = vmatmul.bf16.gmra.mxu0 %v534
  %v703 = vpop.f32.mrf.mxu0
  %v704 = vadd.f32 %v675, %v703
  %v705 = vpop.f32.mrf.mxu0
  %v706 = vadd.f32 %v677, %v705
  %707 = vmatmul.bf16.gmra.mxu0 %v537
  %v708 = vpop.f32.mrf.mxu0
  %v709 = vadd.f32 %v680, %v708
  %v710 = vpop.f32.mrf.mxu0
  %v711 = vadd.f32 %v682, %v710
  %712 = vdwg.mxu0
  %713 = vmatpush.bf16.msra.mxu0 %v412
  %714 = vmatpush.bf16.msra.mxu0 %v408
  %715 = vmatpush.bf16.msra.mxu0 %v404
  %716 = vmatpush.bf16.msra.mxu0 %v400
  %717 = vmatpush.bf16.msra.mxu0 %v396
  %718 = vmatpush.bf16.msra.mxu0 %v392
  %719 = vmatpush.bf16.msra.mxu0 %v388
  %720 = vmatpush.bf16.msra.mxu0 %v384
  %721 = vmatmul.bf16.gmra.mxu0 %v146
  %v722 = vpop.f32.mrf.mxu0
  %v723 = vadd.f32 0.0, %v722
  %v724 = vpop.f32.mrf.mxu0
  %v725 = vadd.f32 0.0, %v724
  %726 = vmatmul.bf16.gmra.mxu0 %v149
  %v727 = vpop.f32.mrf.mxu0
  %v728 = vadd.f32 0.0, %v727
  %v729 = vpop.f32.mrf.mxu0
  %v730 = vadd.f32 0.0, %v729
  %731 = vmatmul.bf16.gmra.mxu0 %v152
  %v732 = vpop.f32.mrf.mxu0
  %v733 = vadd.f32 0.0, %v732
  %v734 = vpop.f32.mrf.mxu0
  %v735 = vadd.f32 0.0, %v734
  %736 = vmatmul.bf16.gmra.mxu0 %v155
  %v737 = vpop.f32.mrf.mxu0
  %v738 = vadd.f32 0.0, %v737
  %v739 = vpop.f32.mrf.mxu0
  %v740 = vadd.f32 0.0, %v739
  %741 = vdwg.mxu0
  %742 = vmatpush.bf16.msra.mxu0 %v444
  %743 = vmatpush.bf16.msra.mxu0 %v440
  %744 = vmatpush.bf16.msra.mxu0 %v436
  %745 = vmatpush.bf16.msra.mxu0 %v432
  %746 = vmatpush.bf16.msra.mxu0 %v428
  %747 = vmatpush.bf16.msra.mxu0 %v424
  %748 = vmatpush.bf16.msra.mxu0 %v420
  %749 = vmatpush.bf16.msra.mxu0 %v416
  %750 = vmatmul.bf16.gmra.mxu0 %v147
  %v751 = vpop.f32.mrf.mxu0
  %v752 = vadd.f32 %v723, %v751
  %v753 = vpop.f32.mrf.mxu0
  %v754 = vadd.f32 %v725, %v753
  %755 = vmatmul.bf16.gmra.mxu0 %v150
  %v756 = vpop.f32.mrf.mxu0
  %v757 = vadd.f32 %v728, %v756
  %v758 = vpop.f32.mrf.mxu0
  %v759 = vadd.f32 %v730, %v758
  %760 = vmatmul.bf16.gmra.mxu0 %v153
  %v761 = vpop.f32.mrf.mxu0
  %v762 = vadd.f32 %v733, %v761
  %v763 = vpop.f32.mrf.mxu0
  %v764 = vadd.f32 %v735, %v763
  %765 = vmatmul.bf16.gmra.mxu0 %v156
  %v766 = vpop.f32.mrf.mxu0
  %v767 = vadd.f32 %v738, %v766
  %v768 = vpop.f32.mrf.mxu0
  %v769 = vadd.f32 %v740, %v768
  %770 = vdwg.mxu0
  %771 = vmatpush.bf16.msra.mxu0 0
  %772 = vmatpush.bf16.msra.mxu0 0
  %773 = vmatpush.bf16.msra.mxu0 0
  %774 = vmatpush.bf16.msra.mxu0 0
  %775 = vmatpush.bf16.msra.mxu0 0
  %776 = vmatpush.bf16.msra.mxu0 0
  %777 = vmatpush.bf16.msra.mxu0 %v452
  %778 = vmatpush.bf16.msra.mxu0 %v448
  %779 = vmatmul.bf16.gmra.mxu0 %v528
  %v780 = vpop.f32.mrf.mxu0
  %v781 = vadd.f32 %v752, %v780
  %v782 = vpop.f32.mrf.mxu0
  %v783 = vadd.f32 %v754, %v782
  %784 = vmatmul.bf16.gmra.mxu0 %v531
  %v785 = vpop.f32.mrf.mxu0
  %v786 = vadd.f32 %v757, %v785
  %v787 = vpop.f32.mrf.mxu0
  %v788 = vadd.f32 %v759, %v787
  %789 = vmatmul.bf16.gmra.mxu0 %v534
  %v790 = vpop.f32.mrf.mxu0
  %v791 = vadd.f32 %v762, %v790
  %v792 = vpop.f32.mrf.mxu0
  %v793 = vadd.f32 %v764, %v792
  %794 = vmatmul.bf16.gmra.mxu0 %v537
  %v795 = vpop.f32.mrf.mxu0
  %v796 = vadd.f32 %v767, %v795
  %v797 = vpop.f32.mrf.mxu0
  %v798 = vadd.f32 %v769, %v797
  %799 = vdwg.mxu0
  %800 = vmatpush.bf16.msra.mxu0 %v413
  %801 = vmatpush.bf16.msra.mxu0 %v409
  %802 = vmatpush.bf16.msra.mxu0 %v405
  %803 = vmatpush.bf16.msra.mxu0 %v401
  %804 = vmatpush.bf16.msra.mxu0 %v397
  %805 = vmatpush.bf16.msra.mxu0 %v393
  %806 = vmatpush.bf16.msra.mxu0 %v389
  %807 = vmatpush.bf16.msra.mxu0 %v385
  %808 = vmatmul.bf16.gmra.mxu0 %v146
  %v809 = vpop.f32.mrf.mxu0
  %v810 = vadd.f32 0.0, %v809
  %v811 = vpop.f32.mrf.mxu0
  %v812 = vadd.f32 0.0, %v811
  %813 = vmatmul.bf16.gmra.mxu0 %v149
  %v814 = vpop.f32.mrf.mxu0
  %v815 = vadd.f32 0.0, %v814
  %v816 = vpop.f32.mrf.mxu0
  %v817 = vadd.f32 0.0, %v816
  %818 = vmatmul.bf16.gmra.mxu0 %v152
  %v819 = vpop.f32.mrf.mxu0
  %v820 = vadd.f32 0.0, %v819
  %v821 = vpop.f32.mrf.mxu0
  %v822 = vadd.f32 0.0, %v821
  %823 = vmatmul.bf16.gmra.mxu0 %v155
  %v824 = vpop.f32.mrf.mxu0
  %v825 = vadd.f32 0.0, %v824
  %v826 = vpop.f32.mrf.mxu0
  %v827 = vadd.f32 0.0, %v826
  %828 = vdwg.mxu0
  %829 = vmatpush.bf16.msra.mxu0 %v445
  %830 = vmatpush.bf16.msra.mxu0 %v441
  %831 = vmatpush.bf16.msra.mxu0 %v437
  %832 = vmatpush.bf16.msra.mxu0 %v433
  %833 = vmatpush.bf16.msra.mxu0 %v429
  %834 = vmatpush.bf16.msra.mxu0 %v425
  %835 = vmatpush.bf16.msra.mxu0 %v421
  %836 = vmatpush.bf16.msra.mxu0 %v417
  %837 = vmatmul.bf16.gmra.mxu0 %v147
  %v838 = vpop.f32.mrf.mxu0
  %v839 = vadd.f32 %v810, %v838
  %v840 = vpop.f32.mrf.mxu0
  %v841 = vadd.f32 %v812, %v840
  %842 = vmatmul.bf16.gmra.mxu0 %v150
  %v843 = vpop.f32.mrf.mxu0
  %v844 = vadd.f32 %v815, %v843
  %v845 = vpop.f32.mrf.mxu0
  %v846 = vadd.f32 %v817, %v845
  %847 = vmatmul.bf16.gmra.mxu0 %v153
  %v848 = vpop.f32.mrf.mxu0
  %v849 = vadd.f32 %v820, %v848
  %v850 = vpop.f32.mrf.mxu0
  %v851 = vadd.f32 %v822, %v850
  %852 = vmatmul.bf16.gmra.mxu0 %v156
  %v853 = vpop.f32.mrf.mxu0
  %v854 = vadd.f32 %v825, %v853
  %v855 = vpop.f32.mrf.mxu0
  %v856 = vadd.f32 %v827, %v855
  %857 = vdwg.mxu0
  %858 = vmatpush.bf16.msra.mxu0 0
  %859 = vmatpush.bf16.msra.mxu0 0
  %860 = vmatpush.bf16.msra.mxu0 0
  %861 = vmatpush.bf16.msra.mxu0 0
  %862 = vmatpush.bf16.msra.mxu0 0
  %863 = vmatpush.bf16.msra.mxu0 0
  %864 = vmatpush.bf16.msra.mxu0 %v453
  %865 = vmatpush.bf16.msra.mxu0 %v449
  %866 = vmatmul.bf16.gmra.mxu0 %v528
  %v867 = vpop.f32.mrf.mxu0
  %v868 = vadd.f32 %v839, %v867
  %v869 = vpop.f32.mrf.mxu0
  %v870 = vadd.f32 %v841, %v869
  %871 = vmatmul.bf16.gmra.mxu0 %v531
  %v872 = vpop.f32.mrf.mxu0
  %v873 = vadd.f32 %v844, %v872
  %v874 = vpop.f32.mrf.mxu0
  %v875 = vadd.f32 %v846, %v874
  %876 = vmatmul.bf16.gmra.mxu0 %v534
  %v877 = vpop.f32.mrf.mxu0
  %v878 = vadd.f32 %v849, %v877
  %v879 = vpop.f32.mrf.mxu0
  %v880 = vadd.f32 %v851, %v879
  %881 = vmatmul.bf16.gmra.mxu0 %v537
  %v882 = vpop.f32.mrf.mxu0
  %v883 = vadd.f32 %v854, %v882
  %v884 = vpop.f32.mrf.mxu0
  %v885 = vadd.f32 %v856, %v884
  %886 = vdwg.mxu0
  %v887 = vmax.f32 %v607, 0.0
  %v888 = vmax.f32 %v694, 0.0
  %v889 = vmax.f32 %v781, 0.0
  %v890 = vmax.f32 %v868, 0.0
  %v891 = vmax.f32 %v609, 0.0
  %v892 = vmax.f32 %v696, 0.0
  %v893 = vmax.f32 %v783, 0.0
  %v894 = vmax.f32 %v870, 0.0
  %v895 = vmax.f32 %v612, 0.0
  %v896 = vmax.f32 %v699, 0.0
  %v897 = vmax.f32 %v786, 0.0
  %v898 = vmax.f32 %v873, 0.0
  %v899 = vmax.f32 %v614, 0.0
  %v900 = vmax.f32 %v701, 0.0
  %v901 = vmax.f32 %v788, 0.0
  %v902 = vmax.f32 %v875, 0.0
  %v903 = vmax.f32 %v617, 0.0
  %v904 = vmax.f32 %v704, 0.0
  %v905 = vmax.f32 %v791, 0.0
  %v906 = vmax.f32 %v878, 0.0
  %v907 = vmax.f32 %v619, 0.0
  %v908 = vmax.f32 %v706, 0.0
  %v909 = vmax.f32 %v793, 0.0
  %v910 = vmax.f32 %v880, 0.0
  %v911 = vmax.f32 %v622, 0.0
  %v912 = vmax.f32 %v709, 0.0
  %v913 = vmax.f32 %v796, 0.0
  %v914 = vmax.f32 %v883, 0.0
  %v915 = vmax.f32 %v624, 0.0
  %v916 = vmax.f32 %v711, 0.0
  %v917 = vmax.f32 %v798, 0.0
  %v918 = vmax.f32 %v885, 0.0
  %v919 = vld [vmem:[%s2] sm:$0xff]
  %v920 = vld [vmem:[%s2 + $0x8] sm:$0xff]
  %v921 = vld [vmem:[%s2 + $0x10] sm:$0xff]
  %v922 = vld [vmem:[%s2 + $0x18] sm:$0xff]
  %v923 = vld [vmem:[%s2 + $0x20] sm:$0xff]
  %v924 = vld [vmem:[%s2 + $0x28] sm:$0xff]
  %v925 = vld [vmem:[%s2 + $0x30] sm:$0xff]
  %v926 = vld [vmem:[%s2 + $0x38] sm:$0xff]
  %928 = vset.pattern.permute.xlu0 0
  %929 = vperm.xlu0 %928, %v919
  %v930 = vpop.permute.xlu0 %929
  %933 = vset.pattern.permute.xlu0 0
  %934 = vperm.xlu0 %933, %v920
  %v935 = vpop.permute.xlu0 %934
  %938 = vset.pattern.permute.xlu0 0
  %939 = vperm.xlu0 %938, %v921
  %v940 = vpop.permute.xlu0 %939
  %943 = vset.pattern.permute.xlu0 0
  %944 = vperm.xlu0 %943, %v922
  %v945 = vpop.permute.xlu0 %944
  %948 = vset.pattern.permute.xlu0 0
  %949 = vperm.xlu0 %948, %v923
  %v950 = vpop.permute.xlu0 %949
  %953 = vset.pattern.permute.xlu0 0
  %954 = vperm.xlu0 %953, %v924
  %v955 = vpop.permute.xlu0 %954
  %958 = vset.pattern.permute.xlu0 0
  %959 = vperm.xlu0 %958, %v925
  %v960 = vpop.permute.xlu0 %959
  %963 = vset.pattern.permute.xlu0 0
  %964 = vperm.xlu0 %963, %v926
  %v965 = vpop.permute.xlu0 %964
  %v967 = vmul.f32 %v887, %v930
  %v968 = vmul.f32 %v888, %v930
  %v969 = vmul.f32 %v889, %v930
  %v970 = vmul.f32 %v890, %v930
  %v971 = vmul.f32 %v891, %v935
  %v972 = vmul.f32 %v892, %v935
  %v973 = vmul.f32 %v893, %v935
  %v974 = vmul.f32 %v894, %v935
  %v975 = vmul.f32 %v895, %v940
  %v976 = vmul.f32 %v896, %v940
  %v977 = vmul.f32 %v897, %v940
  %v978 = vmul.f32 %v898, %v940
  %v979 = vmul.f32 %v899, %v945
  %v980 = vmul.f32 %v900, %v945
  %v981 = vmul.f32 %v901, %v945
  %v982 = vmul.f32 %v902, %v945
  %v983 = vmul.f32 %v903, %v950
  %v984 = vmul.f32 %v904, %v950
  %v985 = vmul.f32 %v905, %v950
  %v986 = vmul.f32 %v906, %v950
  %v987 = vmul.f32 %v907, %v955
  %v988 = vmul.f32 %v908, %v955
  %v989 = vmul.f32 %v909, %v955
  %v990 = vmul.f32 %v910, %v955
  %v991 = vmul.f32 %v911, %v960
  %v992 = vmul.f32 %v912, %v960
  %v993 = vmul.f32 %v913, %v960
  %v994 = vmul.f32 %v914, %v960
  %v995 = vmul.f32 %v915, %v965
  %v996 = vmul.f32 %v916, %v965
  %v997 = vmul.f32 %v917, %v965
  %v998 = vmul.f32 %v918, %v965
  %v999 = vld [vmem:[%s3] sm:$0xff]
  %v1000 = vld [vmem:[%s3 + $0x8] sm:$0xff]
  %v1001 = vld [vmem:[%s3 + $0x10] sm:$0xff]
  %v1002 = vld [vmem:[%s3 + $0x18] sm:$0xff]
  %v1003 = vld [vmem:[%s3 + $0x20] sm:$0xff]
  %v1004 = vld [vmem:[%s3 + $0x28] sm:$0xff]
  %v1005 = vld [vmem:[%s3 + $0x30] sm:$0xff]
  %v1006 = vld [vmem:[%s3 + $0x38] sm:$0xff]
  %1008 = vset.pattern.permute.xlu0 0
  %1009 = vperm.xlu0 %1008, %v999
  %v1010 = vpop.permute.xlu0 %1009
  %1013 = vset.pattern.permute.xlu0 0
  %1014 = vperm.xlu0 %1013, %v1000
  %v1015 = vpop.permute.xlu0 %1014
  %1018 = vset.pattern.permute.xlu0 0
  %1019 = vperm.xlu0 %1018, %v1001
  %v1020 = vpop.permute.xlu0 %1019
  %1023 = vset.pattern.permute.xlu0 0
  %1024 = vperm.xlu0 %1023, %v1002
  %v1025 = vpop.permute.xlu0 %1024
  %1028 = vset.pattern.permute.xlu0 0
  %1029 = vperm.xlu0 %1028, %v1003
  %v1030 = vpop.permute.xlu0 %1029
  %1033 = vset.pattern.permute.xlu0 0
  %1034 = vperm.xlu0 %1033, %v1004
  %v1035 = vpop.permute.xlu0 %1034
  %1038 = vset.pattern.permute.xlu0 0
  %1039 = vperm.xlu0 %1038, %v1005
  %v1040 = vpop.permute.xlu0 %1039
  %1043 = vset.pattern.permute.xlu0 0
  %1044 = vperm.xlu0 %1043, %v1006
  %v1045 = vpop.permute.xlu0 %1044
  %v1047 = vadd.f32 %v967, %v1010
  %v1048 = vadd.f32 %v968, %v1010
  %v1049 = vadd.f32 %v969, %v1010
  %v1050 = vadd.f32 %v970, %v1010
  %v1051 = vadd.f32 %v971, %v1015
  %v1052 = vadd.f32 %v972, %v1015
  %v1053 = vadd.f32 %v973, %v1015
  %v1054 = vadd.f32 %v974, %v1015
  %v1055 = vadd.f32 %v975, %v1020
  %v1056 = vadd.f32 %v976, %v1020
  %v1057 = vadd.f32 %v977, %v1020
  %v1058 = vadd.f32 %v978, %v1020
  %v1059 = vadd.f32 %v979, %v1025
  %v1060 = vadd.f32 %v980, %v1025
  %v1061 = vadd.f32 %v981, %v1025
  %v1062 = vadd.f32 %v982, %v1025
  %v1063 = vadd.f32 %v983, %v1030
  %v1064 = vadd.f32 %v984, %v1030
  %v1065 = vadd.f32 %v985, %v1030
  %v1066 = vadd.f32 %v986, %v1030
  %v1067 = vadd.f32 %v987, %v1035
  %v1068 = vadd.f32 %v988, %v1035
  %v1069 = vadd.f32 %v989, %v1035
  %v1070 = vadd.f32 %v990, %v1035
  %v1071 = vadd.f32 %v991, %v1040
  %v1072 = vadd.f32 %v992, %v1040
  %v1073 = vadd.f32 %v993, %v1040
  %v1074 = vadd.f32 %v994, %v1040
  %v1075 = vadd.f32 %v995, %v1045
  %v1076 = vadd.f32 %v996, %v1045
  %v1077 = vadd.f32 %v997, %v1045
  %v1078 = vadd.f32 %v998, %v1045
  %v1079 = vpack.c.bf16 %v1048, %v1047
  %v1080 = vpack.c.bf16 %v1050, %v1049
  %v1081 = vpack.c.bf16 %v1052, %v1051
  %v1082 = vpack.c.bf16 %v1054, %v1053
  %v1083 = vpack.c.bf16 %v1056, %v1055
  %v1084 = vpack.c.bf16 %v1058, %v1057
  %v1085 = vpack.c.bf16 %v1060, %v1059
  %v1086 = vpack.c.bf16 %v1062, %v1061
  %v1087 = vpack.c.bf16 %v1064, %v1063
  %v1088 = vpack.c.bf16 %v1066, %v1065
  %v1089 = vpack.c.bf16 %v1068, %v1067
  %v1090 = vpack.c.bf16 %v1070, %v1069
  %v1091 = vpack.c.bf16 %v1072, %v1071
  %v1092 = vpack.c.bf16 %v1074, %v1073
  %v1093 = vpack.c.bf16 %v1076, %v1075
  %v1094 = vpack.c.bf16 %v1078, %v1077
  %1095 = vst [vmem:[%s4] sm:$0xff] %v1079
  %1096 = vst [vmem:[%s4 + $0x8] sm:$0xff] %v1080
  %1097 = vst [vmem:[%s4 + $0x10] sm:$0xff] %v1081
  %1098 = vst [vmem:[%s4 + $0x18] sm:$0xff] %v1082
  %1099 = vst [vmem:[%s4 + $0x20] sm:$0xff] %v1083
  %1100 = vst [vmem:[%s4 + $0x28] sm:$0xff] %v1084
  %1101 = vst [vmem:[%s4 + $0x30] sm:$0xff] %v1085
  %1102 = vst [vmem:[%s4 + $0x38] sm:$0xff] %v1086
  %1103 = vst [vmem:[%s4 + $0x40] sm:$0xff] %v1087
  %1104 = vst [vmem:[%s4 + $0x48] sm:$0xff] %v1088
  %1105 = vst [vmem:[%s4 + $0x50] sm:$0xff] %v1089
  %1106 = vst [vmem:[%s4 + $0x58] sm:$0xff] %v1090
  %1107 = vst [vmem:[%s4 + $0x60] sm:$0xff] %v1091
  %1108 = vst [vmem:[%s4 + $0x68] sm:$0xff] %v1092
  %1109 = vst [vmem:[%s4 + $0x70] sm:$0xff] %v1093
  %1110 = vst [vmem:[%s4 + $0x78] sm:$0xff] %v1094
  // Predicated region
  $region18: #{cifarnet_forward.14} parent=0 // pred_check
    _
  $region19: #{cifarnet_forward.14} parent=0 // pred_check_branch
    %1112 = sbr.rel (0) target = $region21
  $region20: #{cifarnet_forward.14} parent=0 // pred_region
    _
  $region21: #{cifarnet_forward.14} parent=0 // pred_fallthru
    _
  // Predicated region
  $region22: #{cifarnet_forward.14} parent=0 // pred_check
    _
  $region23: #{cifarnet_forward.14} parent=0 // pred_check_branch
    %1114 = sbr.rel (0) target = $region25
  $region24: #{cifarnet_forward.14} parent=0 // pred_region
    _
  $region25: #{cifarnet_forward.14} parent=0 // pred_fallthru
    _

// kernel: cifarnet_forward.15
$region0: #{cifarnet_forward.15}
  #allocation0 [shape = 'u32[]', space=smem, size = 0x4, offset = 0x4, fixed_abs, tag = 'smem constant byte address 0x4 - core index']
  #allocation1 [shape = 'u32[72,128]{1,0:T(1,128)}', space=vmem, size = 0x9000, scoped, tag = 'internal scratch']
  %s0 = inlined_call_operand.vmem [shape: bf16[16,576], index: 0, kind: input, shape index: {}]
  %s1 = inlined_call_operand.vmem [shape: bf16[576,162], index: 1, kind: input, shape index: {}]
  %s2 = inlined_call_operand.vmem [shape: f32[16,1], index: 2, kind: input, shape index: {}]
  %s3 = inlined_call_operand.vmem [shape: f32[16,1], index: 3, kind: input, shape index: {}]
  %s4 = inlined_call_operand.vmem [shape: bf16[16,162], index: 4, kind: output, shape index: {}]
  %s5 = sld [smem:[#allocation0]]
  $region26: #{cifarnet_forward.15} parent=0
    _
  %s7 = ssub.s32 1, %s5
  %s8 = scalar_select 0, %s7, %s5
  // Predicated region
  $region2: #{cifarnet_forward.15} parent=0 // pred_check
    _
  $region3: #{cifarnet_forward.15} parent=0 // pred_check_branch
    %10 = sbr.rel (0) target = $region5
  $region4: #{cifarnet_forward.15} parent=0 // pred_region
    _
  $region5: #{cifarnet_forward.15} parent=0 // pred_fallthru
    _
  // Predicated region
  $region6: #{cifarnet_forward.15} parent=0 // pred_check
    _
  $region7: #{cifarnet_forward.15} parent=0 // pred_check_branch
    %12 = sbr.rel (0) target = $region9
  $region8: #{cifarnet_forward.15} parent=0 // pred_region
    _
  $region9: #{cifarnet_forward.15} parent=0 // pred_fallthru
    _
  // Predicated region
  $region10: #{cifarnet_forward.15} parent=0 // pred_check
    _
  $region11: #{cifarnet_forward.15} parent=0 // pred_check_branch
    %14 = sbr.rel (0) target = $region13
  $region12: #{cifarnet_forward.15} parent=0 // pred_region
    _
  $region13: #{cifarnet_forward.15} parent=0 // pred_fallthru
    _
  // Predicated region
  $region14: #{cifarnet_forward.15} parent=0 // pred_check
    _
  $region15: #{cifarnet_forward.15} parent=0 // pred_check_branch
    %16 = sbr.rel (0) target = $region17
  $region16: #{cifarnet_forward.15} parent=0 // pred_region
    _
  $region17: #{cifarnet_forward.15} parent=0 // pred_fallthru
    _
  %v18 = vld [vmem:[%s0] sm:$0xff]
  %v19 = vld [vmem:[%s0 + $0x8] sm:$0xff]
  %v20 = vld [vmem:[%s0 + $0x10] sm:$0xf]
  %v21 = vld [vmem:[%s0 + $0x14] sm:$0xff]
  %v22 = vld [vmem:[%s0 + $0x1c] sm:$0xff]
  %v23 = vld [vmem:[%s0 + $0x24] sm:$0xf]
  %v24 = vld [vmem:[%s1] sm:$0xff]
  %v25 = vld [vmem:[%s1 + $0x8] sm:$0xff]
  %v26 = vld [vmem:[%s1 + $0x10] sm:$0xff]
  %v27 = vld [vmem:[%s1 + $0x18] sm:$0xff]
  %v28 = vld [vmem:[%s1 + $0x20] sm:$0xff]
  %v29 = vld [vmem:[%s1 + $0x28] sm:$0xff]
  %v30 = vld [vmem:[%s1 + $0x30] sm:$0xff]
  %v31 = vld [vmem:[%s1 + $0x38] sm:$0xff]
  %v32 = vld [vmem:[%s1 + $0x40] sm:$0xff]
  %v33 = vld [vmem:[%s1 + $0x48] sm:$0xff]
  %v34 = vld [vmem:[%s1 + $0x50] sm:$0xff]
  %v35 = vld [vmem:[%s1 + $0x58] sm:$0xff]
  %v36 = vld [vmem:[%s1 + $0x60] sm:$0xff]
  %v37 = vld [vmem:[%s1 + $0x68] sm:$0xff]
  %v38 = vld [vmem:[%s1 + $0x70] sm:$0xff]
  %v39 = vld [vmem:[%s1 + $0x78] sm:$0xff]
  %v40 = vld [vmem:[%s1 + $0x80] sm:$0xff]
  %v41 = vld [vmem:[%s1 + $0x88] sm:$0xff]
  %v42 = vld [vmem:[%s1 + $0x90] sm:$0xff]
  %v43 = vld [vmem:[%s1 + $0x98] sm:$0xff]
  %v44 = vld [vmem:[%s1 + $0xa0] sm:$0xff]
  %v45 = vld [vmem:[%s1 + $0xa8] sm:$0xff]
  %v46 = vld [vmem:[%s1 + $0xb0] sm:$0xff]
  %v47 = vld [vmem:[%s1 + $0xb8] sm:$0xff]
  %v48 = vld [vmem:[%s1 + $0xc0] sm:$0xff]
  %v49 = vld [vmem:[%s1 + $0xc8] sm:$0xff]
  %v50 = vld [vmem:[%s1 + $0xd0] sm:$0xff]
  %v51 = vld [vmem:[%s1 + $0xd8] sm:$0xff]
  %v52 = vld [vmem:[%s1 + $0xe0] sm:$0xff]
  %v53 = vld [vmem:[%s1 + $0xe8] sm:$0xff]
  %v54 = vld [vmem:[%s1 + $0xf0] sm:$0xff]
  %v55 = vld [vmem:[%s1 + $0xf8] sm:$0xff]
  %v56 = vld [vmem:[%s1 + $0x100] sm:$0xff]
  %v57 = vld [vmem:[%s1 + $0x108] sm:$0xff]
  %v58 = vld [vmem:[%s1 + $0x110] sm:$0xff]
  %v59 = vld [vmem:[%s1 + $0x118] sm:$0xff]
  %v60 = vld [vmem:[%s1 + $0x120] sm:$0xff]
  %v61 = vld [vmem:[%s1 + $0x128] sm:$0xff]
  %v62 = vld [vmem:[%s1 + $0x130] sm:$0xff]
  %v63 = vld [vmem:[%s1 + $0x138] sm:$0xff]
  %v64 = vld [vmem:[%s1 + $0x140] sm:$0xff]
  %v65 = vld [vmem:[%s1 + $0x148] sm:$0xff]
  %v66 = vld [vmem:[%s1 + $0x150] sm:$0xff]
  %v67 = vld [vmem:[%s1 + $0x158] sm:$0xff]
  %v68 = vld [vmem:[%s1 + $0x160] sm:$0xff]
  %v69 = vld [vmem:[%s1 + $0x168] sm:$0xff]
  %v70 = vld [vmem:[%s1 + $0x170] sm:$0xff]
  %v71 = vld [vmem:[%s1 + $0x178] sm:$0xff]
  %v72 = vld [vmem:[%s1 + $0x180] sm:$0xff]
  %v73 = vld [vmem:[%s1 + $0x188] sm:$0xff]
  %v74 = vld [vmem:[%s1 + $0x190] sm:$0xff]
  %v75 = vld [vmem:[%s1 + $0x198] sm:$0xff]
  %v76 = vld [vmem:[%s1 + $0x1a0] sm:$0xff]
  %v77 = vld [vmem:[%s1 + $0x1a8] sm:$0xff]
  %v78 = vld [vmem:[%s1 + $0x1b0] sm:$0xff]
  %v79 = vld [vmem:[%s1 + $0x1b8] sm:$0xff]
  %v80 = vld [vmem:[%s1 + $0x1c0] sm:$0xff]
  %v81 = vld [vmem:[%s1 + $0x1c8] sm:$0xff]
  %v82 = vld [vmem:[%s1 + $0x1d0] sm:$0xff]
  %v83 = vld [vmem:[%s1 + $0x1d8] sm:$0xff]
  %v84 = vld [vmem:[%s1 + $0x1e0] sm:$0xff]
  %v85 = vld [vmem:[%s1 + $0x1e8] sm:$0xff]
  %v86 = vld [vmem:[%s1 + $0x1f0] sm:$0xff]
  %v87 = vld [vmem:[%s1 + $0x1f8] sm:$0xff]
  %v88 = vld [vmem:[%s1 + $0x200] sm:$0xff]
  %v89 = vld [vmem:[%s1 + $0x208] sm:$0xff]
  %v90 = vld [vmem:[%s1 + $0x210] sm:$0xff]
  %v91 = vld [vmem:[%s1 + $0x218] sm:$0xff]
  %v92 = vld [vmem:[%s1 + $0x220] sm:$0xff]
  %v93 = vld [vmem:[%s1 + $0x228] sm:$0xff]
  %v94 = vld [vmem:[%s1 + $0x230] sm:$0xff]
  %v95 = vld [vmem:[%s1 + $0x238] sm:$0xff]
  %v102 = vunpack.c.l.b16 %v18
  %v103 = vunpack.c.h.b16 %v18
  %v104 = vunpack.c.l.b16 %v19
  %v105 = vunpack.c.h.b16 %v19
  %v106 = vunpack.c.l.b16 %v20
  %v107 = vunpack.c.l.b16 %v21
  %v108 = vunpack.c.h.b16 %v21
  %v109 = vunpack.c.l.b16 %v22
  %v110 = vunpack.c.h.b16 %v22
  %v111 = vunpack.c.l.b16 %v23
  %v112 = vpack.c.b16 %v107, %v102
  %v113 = vpack.c.b16 %v108, %v103
  %v114 = vpack.c.b16 %v109, %v104
  %v115 = vpack.c.b16 %v110, %v105
  %v116 = vpack.c.b16 %v111, %v106
  %v193 = vunpack.c.l.b16 %v24
  %v194 = vunpack.c.h.b16 %v24
  %v195 = vunpack.c.l.b16 %v25
  %v196 = vunpack.c.h.b16 %v25
  %v197 = vunpack.c.l.b16 %v26
  %v198 = vunpack.c.h.b16 %v26
  %v199 = vunpack.c.l.b16 %v27
  %v200 = vunpack.c.h.b16 %v27
  %v201 = vunpack.c.l.b16 %v28
  %v202 = vunpack.c.h.b16 %v28
  %v203 = vunpack.c.l.b16 %v29
  %v204 = vunpack.c.h.b16 %v29
  %v205 = vunpack.c.l.b16 %v30
  %v206 = vunpack.c.h.b16 %v30
  %v207 = vunpack.c.l.b16 %v31
  %v208 = vunpack.c.h.b16 %v31
  %v209 = vunpack.c.l.b16 %v32
  %v210 = vunpack.c.h.b16 %v32
  %v211 = vunpack.c.l.b16 %v33
  %v212 = vunpack.c.h.b16 %v33
  %v213 = vunpack.c.l.b16 %v34
  %v214 = vunpack.c.h.b16 %v34
  %v215 = vunpack.c.l.b16 %v35
  %v216 = vunpack.c.h.b16 %v35
  %v217 = vunpack.c.l.b16 %v36
  %v218 = vunpack.c.h.b16 %v36
  %v219 = vunpack.c.l.b16 %v37
  %v220 = vunpack.c.h.b16 %v37
  %v221 = vunpack.c.l.b16 %v38
  %v222 = vunpack.c.h.b16 %v38
  %v223 = vunpack.c.l.b16 %v39
  %v224 = vunpack.c.h.b16 %v39
  %v225 = vunpack.c.l.b16 %v40
  %v226 = vunpack.c.h.b16 %v40
  %v227 = vunpack.c.l.b16 %v41
  %v228 = vunpack.c.h.b16 %v41
  %v229 = vunpack.c.l.b16 %v42
  %v230 = vunpack.c.h.b16 %v42
  %v231 = vunpack.c.l.b16 %v43
  %v232 = vunpack.c.h.b16 %v43
  %v233 = vunpack.c.l.b16 %v44
  %v234 = vunpack.c.h.b16 %v44
  %v235 = vunpack.c.l.b16 %v45
  %v236 = vunpack.c.h.b16 %v45
  %v237 = vunpack.c.l.b16 %v46
  %v238 = vunpack.c.h.b16 %v46
  %v239 = vunpack.c.l.b16 %v47
  %v240 = vunpack.c.h.b16 %v47
  %v241 = vunpack.c.l.b16 %v48
  %v242 = vunpack.c.h.b16 %v48
  %v243 = vunpack.c.l.b16 %v49
  %v244 = vunpack.c.h.b16 %v49
  %v245 = vunpack.c.l.b16 %v50
  %v246 = vunpack.c.h.b16 %v50
  %v247 = vunpack.c.l.b16 %v51
  %v248 = vunpack.c.h.b16 %v51
  %v249 = vunpack.c.l.b16 %v52
  %v250 = vunpack.c.h.b16 %v52
  %v251 = vunpack.c.l.b16 %v53
  %v252 = vunpack.c.h.b16 %v53
  %v253 = vunpack.c.l.b16 %v54
  %v254 = vunpack.c.h.b16 %v54
  %v255 = vunpack.c.l.b16 %v55
  %v256 = vunpack.c.h.b16 %v55
  %v257 = vunpack.c.l.b16 %v56
  %v258 = vunpack.c.h.b16 %v56
  %v259 = vunpack.c.l.b16 %v57
  %v260 = vunpack.c.h.b16 %v57
  %v261 = vunpack.c.l.b16 %v58
  %v262 = vunpack.c.h.b16 %v58
  %v263 = vunpack.c.l.b16 %v59
  %v264 = vunpack.c.h.b16 %v59
  %v265 = vunpack.c.l.b16 %v60
  %v266 = vunpack.c.h.b16 %v60
  %v267 = vunpack.c.l.b16 %v61
  %v268 = vunpack.c.h.b16 %v61
  %v269 = vunpack.c.l.b16 %v62
  %v270 = vunpack.c.h.b16 %v62
  %v271 = vunpack.c.l.b16 %v63
  %v272 = vunpack.c.h.b16 %v63
  %v273 = vunpack.c.l.b16 %v64
  %v274 = vunpack.c.h.b16 %v64
  %v275 = vunpack.c.l.b16 %v65
  %v276 = vunpack.c.h.b16 %v65
  %v277 = vunpack.c.l.b16 %v66
  %v278 = vunpack.c.h.b16 %v66
  %v279 = vunpack.c.l.b16 %v67
  %v280 = vunpack.c.h.b16 %v67
  %v281 = vunpack.c.l.b16 %v68
  %v282 = vunpack.c.h.b16 %v68
  %v283 = vunpack.c.l.b16 %v69
  %v284 = vunpack.c.h.b16 %v69
  %v285 = vunpack.c.l.b16 %v70
  %v286 = vunpack.c.h.b16 %v70
  %v287 = vunpack.c.l.b16 %v71
  %v288 = vunpack.c.h.b16 %v71
  %v289 = vunpack.c.l.b16 %v72
  %v290 = vunpack.c.h.b16 %v72
  %v291 = vunpack.c.l.b16 %v73
  %v292 = vunpack.c.h.b16 %v73
  %v293 = vunpack.c.l.b16 %v74
  %v294 = vunpack.c.h.b16 %v74
  %v295 = vunpack.c.l.b16 %v75
  %v296 = vunpack.c.h.b16 %v75
  %v297 = vunpack.c.l.b16 %v76
  %v298 = vunpack.c.h.b16 %v76
  %v299 = vunpack.c.l.b16 %v77
  %v300 = vunpack.c.h.b16 %v77
  %v301 = vunpack.c.l.b16 %v78
  %v302 = vunpack.c.h.b16 %v78
  %v303 = vunpack.c.l.b16 %v79
  %v304 = vunpack.c.h.b16 %v79
  %v305 = vunpack.c.l.b16 %v80
  %v306 = vunpack.c.h.b16 %v80
  %v307 = vunpack.c.l.b16 %v81
  %v308 = vunpack.c.h.b16 %v81
  %v309 = vunpack.c.l.b16 %v82
  %v310 = vunpack.c.h.b16 %v82
  %v311 = vunpack.c.l.b16 %v83
  %v312 = vunpack.c.h.b16 %v83
  %v313 = vunpack.c.l.b16 %v84
  %v314 = vunpack.c.h.b16 %v84
  %v315 = vunpack.c.l.b16 %v85
  %v316 = vunpack.c.h.b16 %v85
  %v317 = vunpack.c.l.b16 %v86
  %v318 = vunpack.c.h.b16 %v86
  %v319 = vunpack.c.l.b16 %v87
  %v320 = vunpack.c.h.b16 %v87
  %v321 = vunpack.c.l.b16 %v88
  %v322 = vunpack.c.h.b16 %v88
  %v323 = vunpack.c.l.b16 %v89
  %v324 = vunpack.c.h.b16 %v89
  %v325 = vunpack.c.l.b16 %v90
  %v326 = vunpack.c.h.b16 %v90
  %v327 = vunpack.c.l.b16 %v91
  %v328 = vunpack.c.h.b16 %v91
  %v329 = vunpack.c.l.b16 %v92
  %v330 = vunpack.c.h.b16 %v92
  %v331 = vunpack.c.l.b16 %v93
  %v332 = vunpack.c.h.b16 %v93
  %v333 = vunpack.c.l.b16 %v94
  %v334 = vunpack.c.h.b16 %v94
  %v335 = vunpack.c.l.b16 %v95
  %v336 = vunpack.c.h.b16 %v95
  %v337 = vpack.c.b16 %v195, %v193
  %v338 = vpack.c.b16 %v196, %v194
  %v339 = vpack.c.b16 %v199, %v197
  %v340 = vpack.c.b16 %v200, %v198
  %v341 = vpack.c.b16 %v203, %v201
  %v342 = vpack.c.b16 %v204, %v202
  %v343 = vpack.c.b16 %v207, %v205
  %v344 = vpack.c.b16 %v208, %v206
  %v345 = vpack.c.b16 %v211, %v209
  %v346 = vpack.c.b16 %v212, %v210
  %v347 = vpack.c.b16 %v215, %v213
  %v348 = vpack.c.b16 %v216, %v214
  %v349 = vpack.c.b16 %v219, %v217
  %v350 = vpack.c.b16 %v220, %v218
  %v351 = vpack.c.b16 %v223, %v221
  %v352 = vpack.c.b16 %v224, %v222
  %v353 = vpack.c.b16 %v227, %v225
  %v354 = vpack.c.b16 %v228, %v226
  %v355 = vpack.c.b16 %v231, %v229
  %v356 = vpack.c.b16 %v232, %v230
  %v357 = vpack.c.b16 %v235, %v233
  %v358 = vpack.c.b16 %v236, %v234
  %v359 = vpack.c.b16 %v239, %v237
  %v360 = vpack.c.b16 %v240, %v238
  %v361 = vpack.c.b16 %v243, %v241
  %v362 = vpack.c.b16 %v244, %v242
  %v363 = vpack.c.b16 %v247, %v245
  %v364 = vpack.c.b16 %v248, %v246
  %v365 = vpack.c.b16 %v251, %v249
  %v366 = vpack.c.b16 %v252, %v250
  %v367 = vpack.c.b16 %v255, %v253
  %v368 = vpack.c.b16 %v256, %v254
  %v369 = vpack.c.b16 %v259, %v257
  %v370 = vpack.c.b16 %v260, %v258
  %v371 = vpack.c.b16 %v263, %v261
  %v372 = vpack.c.b16 %v264, %v262
  %v373 = vpack.c.b16 %v267, %v265
  %v374 = vpack.c.b16 %v268, %v266
  %v375 = vpack.c.b16 %v271, %v269
  %v376 = vpack.c.b16 %v272, %v270
  %v377 = vpack.c.b16 %v275, %v273
  %v378 = vpack.c.b16 %v276, %v274
  %v379 = vpack.c.b16 %v279, %v277
  %v380 = vpack.c.b16 %v280, %v278
  %v381 = vpack.c.b16 %v283, %v281
  %v382 = vpack.c.b16 %v284, %v282
  %v383 = vpack.c.b16 %v287, %v285
  %v384 = vpack.c.b16 %v288, %v286
  %v385 = vpack.c.b16 %v291, %v289
  %v386 = vpack.c.b16 %v292, %v290
  %v387 = vpack.c.b16 %v295, %v293
  %v388 = vpack.c.b16 %v296, %v294
  %v389 = vpack.c.b16 %v299, %v297
  %v390 = vpack.c.b16 %v300, %v298
  %v391 = vpack.c.b16 %v303, %v301
  %v392 = vpack.c.b16 %v304, %v302
  %v393 = vpack.c.b16 %v307, %v305
  %v394 = vpack.c.b16 %v308, %v306
  %v395 = vpack.c.b16 %v311, %v309
  %v396 = vpack.c.b16 %v312, %v310
  %v397 = vpack.c.b16 %v315, %v313
  %v398 = vpack.c.b16 %v316, %v314
  %v399 = vpack.c.b16 %v319, %v317
  %v400 = vpack.c.b16 %v320, %v318
  %v401 = vpack.c.b16 %v323, %v321
  %v402 = vpack.c.b16 %v324, %v322
  %v403 = vpack.c.b16 %v327, %v325
  %v404 = vpack.c.b16 %v328, %v326
  %v405 = vpack.c.b16 %v331, %v329
  %v406 = vpack.c.b16 %v332, %v330
  %v407 = vpack.c.b16 %v335, %v333
  %v408 = vpack.c.b16 %v336, %v334
  %vm481 = vcmask 523264
  %v483 = vsel %vm481, %v116, 0
  %485 = vmatpush.bf16.msra.mxu0 %v351
  %486 = vmatpush.bf16.msra.mxu0 %v349
  %487 = vmatpush.bf16.msra.mxu0 %v347
  %488 = vmatpush.bf16.msra.mxu0 %v345
  %489 = vmatpush.bf16.msra.mxu0 %v343
  %490 = vmatpush.bf16.msra.mxu0 %v341
  %491 = vmatpush.bf16.msra.mxu0 %v339
  %492 = vmatpush.bf16.msra.mxu0 %v337
  %493 = vmatmul.bf16.gmra.mxu0 %v112
  %v494 = vpop.f32.mrf.mxu0
  %v495 = vadd.f32 0.0, %v494
  %v496 = vpop.f32.mrf.mxu0
  %v497 = vadd.f32 0.0, %v496
  %498 = vdwg.mxu0
  %499 = vmatpush.bf16.msra.mxu0 %v367
  %500 = vmatpush.bf16.msra.mxu0 %v365
  %501 = vmatpush.bf16.msra.mxu0 %v363
  %502 = vmatpush.bf16.msra.mxu0 %v361
  %503 = vmatpush.bf16.msra.mxu0 %v359
  %504 = vmatpush.bf16.msra.mxu0 %v357
  %505 = vmatpush.bf16.msra.mxu0 %v355
  %506 = vmatpush.bf16.msra.mxu0 %v353
  %507 = vmatmul.bf16.gmra.mxu0 %v113
  %v508 = vpop.f32.mrf.mxu0
  %v509 = vadd.f32 %v495, %v508
  %v510 = vpop.f32.mrf.mxu0
  %v511 = vadd.f32 %v497, %v510
  %512 = vdwg.mxu0
  %513 = vmatpush.bf16.msra.mxu0 %v383
  %514 = vmatpush.bf16.msra.mxu0 %v381
  %515 = vmatpush.bf16.msra.mxu0 %v379
  %516 = vmatpush.bf16.msra.mxu0 %v377
  %517 = vmatpush.bf16.msra.mxu0 %v375
  %518 = vmatpush.bf16.msra.mxu0 %v373
  %519 = vmatpush.bf16.msra.mxu0 %v371
  %520 = vmatpush.bf16.msra.mxu0 %v369
  %521 = vmatmul.bf16.gmra.mxu0 %v114
  %v522 = vpop.f32.mrf.mxu0
  %v523 = vadd.f32 %v509, %v522
  %v524 = vpop.f32.mrf.mxu0
  %v525 = vadd.f32 %v511, %v524
  %526 = vdwg.mxu0
  %527 = vmatpush.bf16.msra.mxu0 %v399
  %528 = vmatpush.bf16.msra.mxu0 %v397
  %529 = vmatpush.bf16.msra.mxu0 %v395
  %530 = vmatpush.bf16.msra.mxu0 %v393
  %531 = vmatpush.bf16.msra.mxu0 %v391
  %532 = vmatpush.bf16.msra.mxu0 %v389
  %533 = vmatpush.bf16.msra.mxu0 %v387
  %534 = vmatpush.bf16.msra.mxu0 %v385
  %535 = vmatmul.bf16.gmra.mxu0 %v115
  %v536 = vpop.f32.mrf.mxu0
  %v537 = vadd.f32 %v523, %v536
  %v538 = vpop.f32.mrf.mxu0
  %v539 = vadd.f32 %v525, %v538
  %540 = vdwg.mxu0
  %541 = vmatpush.bf16.msra.mxu0 0
  %542 = vmatpush.bf16.msra.mxu0 0
  %543 = vmatpush.bf16.msra.mxu0 0
  %544 = vmatpush.bf16.msra.mxu0 0
  %545 = vmatpush.bf16.msra.mxu0 %v407
  %546 = vmatpush.bf16.msra.mxu0 %v405
  %547 = vmatpush.bf16.msra.mxu0 %v403
  %548 = vmatpush.bf16.msra.mxu0 %v401
  %549 = vmatmul.bf16.gmra.mxu0 %v483
  %v550 = vpop.f32.mrf.mxu0
  %v551 = vadd.f32 %v537, %v550
  %v552 = vpop.f32.mrf.mxu0
  %v553 = vadd.f32 %v539, %v552
  %554 = vdwg.mxu0
  %555 = vmatpush.bf16.msra.mxu0 %v352
  %556 = vmatpush.bf16.msra.mxu0 %v350
  %557 = vmatpush.bf16.msra.mxu0 %v348
  %558 = vmatpush.bf16.msra.mxu0 %v346
  %559 = vmatpush.bf16.msra.mxu0 %v344
  %560 = vmatpush.bf16.msra.mxu0 %v342
  %561 = vmatpush.bf16.msra.mxu0 %v340
  %562 = vmatpush.bf16.msra.mxu0 %v338
  %563 = vmatmul.bf16.gmra.mxu0 %v112
  %v564 = vpop.f32.mrf.mxu0
  %v565 = vadd.f32 0.0, %v564
  %v566 = vpop.f32.mrf.mxu0
  %v567 = vadd.f32 0.0, %v566
  %568 = vdwg.mxu0
  %569 = vmatpush.bf16.msra.mxu0 %v368
  %570 = vmatpush.bf16.msra.mxu0 %v366
  %571 = vmatpush.bf16.msra.mxu0 %v364
  %572 = vmatpush.bf16.msra.mxu0 %v362
  %573 = vmatpush.bf16.msra.mxu0 %v360
  %574 = vmatpush.bf16.msra.mxu0 %v358
  %575 = vmatpush.bf16.msra.mxu0 %v356
  %576 = vmatpush.bf16.msra.mxu0 %v354
  %577 = vmatmul.bf16.gmra.mxu0 %v113
  %v578 = vpop.f32.mrf.mxu0
  %v579 = vadd.f32 %v565, %v578
  %v580 = vpop.f32.mrf.mxu0
  %v581 = vadd.f32 %v567, %v580
  %582 = vdwg.mxu0
  %583 = vmatpush.bf16.msra.mxu0 %v384
  %584 = vmatpush.bf16.msra.mxu0 %v382
  %585 = vmatpush.bf16.msra.mxu0 %v380
  %586 = vmatpush.bf16.msra.mxu0 %v378
  %587 = vmatpush.bf16.msra.mxu0 %v376
  %588 = vmatpush.bf16.msra.mxu0 %v374
  %589 = vmatpush.bf16.msra.mxu0 %v372
  %590 = vmatpush.bf16.msra.mxu0 %v370
  %591 = vmatmul.bf16.gmra.mxu0 %v114
  %v592 = vpop.f32.mrf.mxu0
  %v593 = vadd.f32 %v579, %v592
  %v594 = vpop.f32.mrf.mxu0
  %v595 = vadd.f32 %v581, %v594
  %596 = vdwg.mxu0
  %597 = vmatpush.bf16.msra.mxu0 %v400
  %598 = vmatpush.bf16.msra.mxu0 %v398
  %599 = vmatpush.bf16.msra.mxu0 %v396
  %600 = vmatpush.bf16.msra.mxu0 %v394
  %601 = vmatpush.bf16.msra.mxu0 %v392
  %602 = vmatpush.bf16.msra.mxu0 %v390
  %603 = vmatpush.bf16.msra.mxu0 %v388
  %604 = vmatpush.bf16.msra.mxu0 %v386
  %605 = vmatmul.bf16.gmra.mxu0 %v115
  %v606 = vpop.f32.mrf.mxu0
  %v607 = vadd.f32 %v593, %v606
  %v608 = vpop.f32.mrf.mxu0
  %v609 = vadd.f32 %v595, %v608
  %610 = vdwg.mxu0
  %611 = vmatpush.bf16.msra.mxu0 0
  %612 = vmatpush.bf16.msra.mxu0 0
  %613 = vmatpush.bf16.msra.mxu0 0
  %614 = vmatpush.bf16.msra.mxu0 0
  %615 = vmatpush.bf16.msra.mxu0 %v408
  %616 = vmatpush.bf16.msra.mxu0 %v406
  %617 = vmatpush.bf16.msra.mxu0 %v404
  %618 = vmatpush.bf16.msra.mxu0 %v402
  %619 = vmatmul.bf16.gmra.mxu0 %v483
  %v620 = vpop.f32.mrf.mxu0
  %v621 = vadd.f32 %v607, %v620
  %v622 = vpop.f32.mrf.mxu0
  %v623 = vadd.f32 %v609, %v622
  %624 = vdwg.mxu0
  %v625 = vld [vmem:[%s2] sm:$0xff]
  %v626 = vld [vmem:[%s2 + $0x8] sm:$0xff]
  %628 = vset.pattern.permute.xlu0 0
  %629 = vperm.xlu0 %628, %v625
  %v630 = vpop.permute.xlu0 %629
  %633 = vset.pattern.permute.xlu0 0
  %634 = vperm.xlu0 %633, %v626
  %v635 = vpop.permute.xlu0 %634
  %v637 = vmul.f32 %v551, %v630
  %v638 = vmul.f32 %v621, %v630
  %v639 = vmul.f32 %v553, %v635
  %v640 = vmul.f32 %v623, %v635
  %v641 = vld [vmem:[%s3] sm:$0xff]
  %v642 = vld [vmem:[%s3 + $0x8] sm:$0xff]
  %644 = vset.pattern.permute.xlu0 0
  %645 = vperm.xlu0 %644, %v641
  %v646 = vpop.permute.xlu0 %645
  %649 = vset.pattern.permute.xlu0 0
  %650 = vperm.xlu0 %649, %v642
  %v651 = vpop.permute.xlu0 %650
  %v653 = vadd.f32 %v637, %v646
  %v654 = vadd.f32 %v638, %v646
  %v655 = vadd.f32 %v639, %v651
  %v656 = vadd.f32 %v640, %v651
  %v657 = vpack.c.bf16 %v654, %v653
  %v658 = vpack.c.bf16 %v656, %v655
  %vm659 = vcmask 1043456
  %vm660 = vcmask 277508
  %vm661 = vmor %vm660, %vm659
  %662 = vst.msk [vmem:[%s4] sm:$0xff] %vm661, %v657
  %663 = vst.msk [vmem:[%s4 + $0x8] sm:$0xff] %vm661, %v658
  // Predicated region
  $region18: #{cifarnet_forward.15} parent=0 // pred_check
    _
  $region19: #{cifarnet_forward.15} parent=0 // pred_check_branch
    %665 = sbr.rel (0) target = $region21
  $region20: #{cifarnet_forward.15} parent=0 // pred_region
    _
  $region21: #{cifarnet_forward.15} parent=0 // pred_fallthru
    _
  // Predicated region
  $region22: #{cifarnet_forward.15} parent=0 // pred_check
    _
  $region23: #{cifarnet_forward.15} parent=0 // pred_check_branch
    %667 = sbr.rel (0) target = $region25
  $region24: #{cifarnet_forward.15} parent=0 // pred_region
    _
  $region25: #{cifarnet_forward.15} parent=0 // pred_fallthru
    _

// kernel: cifarnet_forward.16
$region0: #{cifarnet_forward.16}
  #allocation0 [shape = 'u32[]', space=smem, size = 0x4, offset = 0x4, fixed_abs, tag = 'smem constant byte address 0x4 - core index']
  #allocation1 [shape = 'u32[72,128]{1,0:T(1,128)}', space=vmem, size = 0x9000, scoped, tag = 'internal scratch']
  %s0 = inlined_call_operand.vmem [shape: bf16[32,144], index: 0, kind: input, shape index: {}]
  %s1 = inlined_call_operand.vmem [shape: bf16[144,162], index: 1, kind: input, shape index: {}]
  %s2 = inlined_call_operand.vmem [shape: f32[32,1], index: 2, kind: input, shape index: {}]
  %s3 = inlined_call_operand.vmem [shape: f32[32,1], index: 3, kind: input, shape index: {}]
  %s4 = inlined_call_operand.vmem [shape: bf16[32,162], index: 4, kind: output, shape index: {}]
  %s5 = sld [smem:[#allocation0]]
  $region26: #{cifarnet_forward.16} parent=0
    _
  %s7 = ssub.s32 1, %s5
  %s8 = scalar_select 0, %s7, %s5
  // Predicated region
  $region2: #{cifarnet_forward.16} parent=0 // pred_check
    _
  $region3: #{cifarnet_forward.16} parent=0 // pred_check_branch
    %10 = sbr.rel (0) target = $region5
  $region4: #{cifarnet_forward.16} parent=0 // pred_region
    _
  $region5: #{cifarnet_forward.16} parent=0 // pred_fallthru
    _
  // Predicated region
  $region6: #{cifarnet_forward.16} parent=0 // pred_check
    _
  $region7: #{cifarnet_forward.16} parent=0 // pred_check_branch
    %12 = sbr.rel (0) target = $region9
  $region8: #{cifarnet_forward.16} parent=0 // pred_region
    _
  $region9: #{cifarnet_forward.16} parent=0 // pred_fallthru
    _
  // Predicated region
  $region10: #{cifarnet_forward.16} parent=0 // pred_check
    _
  $region11: #{cifarnet_forward.16} parent=0 // pred_check_branch
    %14 = sbr.rel (0) target = $region13
  $region12: #{cifarnet_forward.16} parent=0 // pred_region
    _
  $region13: #{cifarnet_forward.16} parent=0 // pred_fallthru
    _
  // Predicated region
  $region14: #{cifarnet_forward.16} parent=0 // pred_check
    _
  $region15: #{cifarnet_forward.16} parent=0 // pred_check_branch
    %16 = sbr.rel (0) target = $region17
  $region16: #{cifarnet_forward.16} parent=0 // pred_region
    _
  $region17: #{cifarnet_forward.16} parent=0 // pred_fallthru
    _
  %v18 = vld [vmem:[%s0] sm:$0xff]
  %v19 = vld [vmem:[%s0 + $0x8] sm:$0xff]
  %v20 = vld [vmem:[%s0 + $0x10] sm:$0xff]
  %v21 = vld [vmem:[%s0 + $0x18] sm:$0xff]
  %v22 = vld [vmem:[%s1] sm:$0xff]
  %v23 = vld [vmem:[%s1 + $0x8] sm:$0xff]
  %v24 = vld [vmem:[%s1 + $0x10] sm:$0xff]
  %v25 = vld [vmem:[%s1 + $0x18] sm:$0xff]
  %v26 = vld [vmem:[%s1 + $0x20] sm:$0xff]
  %v27 = vld [vmem:[%s1 + $0x28] sm:$0xff]
  %v28 = vld [vmem:[%s1 + $0x30] sm:$0xff]
  %v29 = vld [vmem:[%s1 + $0x38] sm:$0xff]
  %v30 = vld [vmem:[%s1 + $0x40] sm:$0xff]
  %v31 = vld [vmem:[%s1 + $0x48] sm:$0xff]
  %v32 = vld [vmem:[%s1 + $0x50] sm:$0xff]
  %v33 = vld [vmem:[%s1 + $0x58] sm:$0xff]
  %v34 = vld [vmem:[%s1 + $0x60] sm:$0xff]
  %v35 = vld [vmem:[%s1 + $0x68] sm:$0xff]
  %v36 = vld [vmem:[%s1 + $0x70] sm:$0xff]
  %v37 = vld [vmem:[%s1 + $0x78] sm:$0xff]
  %v38 = vld [vmem:[%s1 + $0x80] sm:$0xff]
  %v39 = vld [vmem:[%s1 + $0x88] sm:$0xff]
  %v44 = vunpack.c.l.b16 %v18
  %v45 = vunpack.c.h.b16 %v18
  %v46 = vunpack.c.l.b16 %v19
  %v47 = vunpack.c.h.b16 %v19
  %v48 = vunpack.c.l.b16 %v20
  %v49 = vunpack.c.h.b16 %v20
  %v50 = vunpack.c.l.b16 %v21
  %v51 = vunpack.c.h.b16 %v21
  %v52 = vpack.c.b16 %v46, %v44
  %v53 = vpack.c.b16 %v47, %v45
  %v54 = vpack.c.b16 %v50, %v48
  %v55 = vpack.c.b16 %v51, %v49
  %v76 = vunpack.c.l.b16 %v22
  %v77 = vunpack.c.h.b16 %v22
  %v78 = vunpack.c.l.b16 %v23
  %v79 = vunpack.c.h.b16 %v23
  %v80 = vunpack.c.l.b16 %v24
  %v81 = vunpack.c.h.b16 %v24
  %v82 = vunpack.c.l.b16 %v25
  %v83 = vunpack.c.h.b16 %v25
  %v84 = vunpack.c.l.b16 %v26
  %v85 = vunpack.c.h.b16 %v26
  %v86 = vunpack.c.l.b16 %v27
  %v87 = vunpack.c.h.b16 %v27
  %v88 = vunpack.c.l.b16 %v28
  %v89 = vunpack.c.h.b16 %v28
  %v90 = vunpack.c.l.b16 %v29
  %v91 = vunpack.c.h.b16 %v29
  %v92 = vunpack.c.l.b16 %v30
  %v93 = vunpack.c.h.b16 %v30
  %v94 = vunpack.c.l.b16 %v31
  %v95 = vunpack.c.h.b16 %v31
  %v96 = vunpack.c.l.b16 %v32
  %v97 = vunpack.c.h.b16 %v32
  %v98 = vunpack.c.l.b16 %v33
  %v99 = vunpack.c.h.b16 %v33
  %v100 = vunpack.c.l.b16 %v34
  %v101 = vunpack.c.h.b16 %v34
  %v102 = vunpack.c.l.b16 %v35
  %v103 = vunpack.c.h.b16 %v35
  %v104 = vunpack.c.l.b16 %v36
  %v105 = vunpack.c.h.b16 %v36
  %v106 = vunpack.c.l.b16 %v37
  %v107 = vunpack.c.h.b16 %v37
  %v108 = vunpack.c.l.b16 %v38
  %v109 = vunpack.c.h.b16 %v38
  %v110 = vunpack.c.l.b16 %v39
  %v111 = vunpack.c.h.b16 %v39
  %v112 = vpack.c.b16 %v78, %v76
  %v113 = vpack.c.b16 %v79, %v77
  %v114 = vpack.c.b16 %v82, %v80
  %v115 = vpack.c.b16 %v83, %v81
  %v116 = vpack.c.b16 %v86, %v84
  %v117 = vpack.c.b16 %v87, %v85
  %v118 = vpack.c.b16 %v90, %v88
  %v119 = vpack.c.b16 %v91, %v89
  %v120 = vpack.c.b16 %v94, %v92
  %v121 = vpack.c.b16 %v95, %v93
  %v122 = vpack.c.b16 %v98, %v96
  %v123 = vpack.c.b16 %v99, %v97
  %v124 = vpack.c.b16 %v102, %v100
  %v125 = vpack.c.b16 %v103, %v101
  %v126 = vpack.c.b16 %v106, %v104
  %v127 = vpack.c.b16 %v107, %v105
  %v128 = vpack.c.b16 %v110, %v108
  %v129 = vpack.c.b16 %v111, %v109
  %vm148 = vcmask 130048
  %v150 = vsel %vm148, %v53, 0
  %v153 = vsel %vm148, %v55, 0
  %155 = vmatpush.bf16.msra.mxu0 %v126
  %156 = vmatpush.bf16.msra.mxu0 %v124
  %157 = vmatpush.bf16.msra.mxu0 %v122
  %158 = vmatpush.bf16.msra.mxu0 %v120
  %159 = vmatpush.bf16.msra.mxu0 %v118
  %160 = vmatpush.bf16.msra.mxu0 %v116
  %161 = vmatpush.bf16.msra.mxu0 %v114
  %162 = vmatpush.bf16.msra.mxu0 %v112
  %163 = vmatmul.bf16.gmra.mxu0 %v52
  %v164 = vpop.f32.mrf.mxu0
  %v165 = vadd.f32 0.0, %v164
  %v166 = vpop.f32.mrf.mxu0
  %v167 = vadd.f32 0.0, %v166
  %168 = vmatmul.bf16.gmra.mxu0 %v54
  %v169 = vpop.f32.mrf.mxu0
  %v170 = vadd.f32 0.0, %v169
  %v171 = vpop.f32.mrf.mxu0
  %v172 = vadd.f32 0.0, %v171
  %173 = vdwg.mxu0
  %174 = vmatpush.bf16.msra.mxu0 0
  %175 = vmatpush.bf16.msra.mxu0 0
  %176 = vmatpush.bf16.msra.mxu0 0
  %177 = vmatpush.bf16.msra.mxu0 0
  %178 = vmatpush.bf16.msra.mxu0 0
  %179 = vmatpush.bf16.msra.mxu0 0
  %180 = vmatpush.bf16.msra.mxu0 0
  %181 = vmatpush.bf16.msra.mxu0 %v128
  %182 = vmatmul.bf16.gmra.mxu0 %v150
  %v183 = vpop.f32.mrf.mxu0
  %v184 = vadd.f32 %v165, %v183
  %v185 = vpop.f32.mrf.mxu0
  %v186 = vadd.f32 %v167, %v185
  %187 = vmatmul.bf16.gmra.mxu0 %v153
  %v188 = vpop.f32.mrf.mxu0
  %v189 = vadd.f32 %v170, %v188
  %v190 = vpop.f32.mrf.mxu0
  %v191 = vadd.f32 %v172, %v190
  %192 = vdwg.mxu0
  %193 = vmatpush.bf16.msra.mxu0 %v127
  %194 = vmatpush.bf16.msra.mxu0 %v125
  %195 = vmatpush.bf16.msra.mxu0 %v123
  %196 = vmatpush.bf16.msra.mxu0 %v121
  %197 = vmatpush.bf16.msra.mxu0 %v119
  %198 = vmatpush.bf16.msra.mxu0 %v117
  %199 = vmatpush.bf16.msra.mxu0 %v115
  %200 = vmatpush.bf16.msra.mxu0 %v113
  %201 = vmatmul.bf16.gmra.mxu0 %v52
  %v202 = vpop.f32.mrf.mxu0
  %v203 = vadd.f32 0.0, %v202
  %v204 = vpop.f32.mrf.mxu0
  %v205 = vadd.f32 0.0, %v204
  %206 = vmatmul.bf16.gmra.mxu0 %v54
  %v207 = vpop.f32.mrf.mxu0
  %v208 = vadd.f32 0.0, %v207
  %v209 = vpop.f32.mrf.mxu0
  %v210 = vadd.f32 0.0, %v209
  %211 = vdwg.mxu0
  %212 = vmatpush.bf16.msra.mxu0 0
  %213 = vmatpush.bf16.msra.mxu0 0
  %214 = vmatpush.bf16.msra.mxu0 0
  %215 = vmatpush.bf16.msra.mxu0 0
  %216 = vmatpush.bf16.msra.mxu0 0
  %217 = vmatpush.bf16.msra.mxu0 0
  %218 = vmatpush.bf16.msra.mxu0 0
  %219 = vmatpush.bf16.msra.mxu0 %v129
  %220 = vmatmul.bf16.gmra.mxu0 %v150
  %v221 = vpop.f32.mrf.mxu0
  %v222 = vadd.f32 %v203, %v221
  %v223 = vpop.f32.mrf.mxu0
  %v224 = vadd.f32 %v205, %v223
  %225 = vmatmul.bf16.gmra.mxu0 %v153
  %v226 = vpop.f32.mrf.mxu0
  %v227 = vadd.f32 %v208, %v226
  %v228 = vpop.f32.mrf.mxu0
  %v229 = vadd.f32 %v210, %v228
  %230 = vdwg.mxu0
  %v231 = vmax.f32 %v184, 0.0
  %v232 = vmax.f32 %v222, 0.0
  %v233 = vmax.f32 %v186, 0.0
  %v234 = vmax.f32 %v224, 0.0
  %v235 = vmax.f32 %v189, 0.0
  %v236 = vmax.f32 %v227, 0.0
  %v237 = vmax.f32 %v191, 0.0
  %v238 = vmax.f32 %v229, 0.0
  %v239 = vld [vmem:[%s2] sm:$0xff]
  %v240 = vld [vmem:[%s2 + $0x8] sm:$0xff]
  %v241 = vld [vmem:[%s2 + $0x10] sm:$0xff]
  %v242 = vld [vmem:[%s2 + $0x18] sm:$0xff]
  %244 = vset.pattern.permute.xlu0 0
  %245 = vperm.xlu0 %244, %v239
  %v246 = vpop.permute.xlu0 %245
  %249 = vset.pattern.permute.xlu0 0
  %250 = vperm.xlu0 %249, %v240
  %v251 = vpop.permute.xlu0 %250
  %254 = vset.pattern.permute.xlu0 0
  %255 = vperm.xlu0 %254, %v241
  %v256 = vpop.permute.xlu0 %255
  %259 = vset.pattern.permute.xlu0 0
  %260 = vperm.xlu0 %259, %v242
  %v261 = vpop.permute.xlu0 %260
  %v263 = vmul.f32 %v231, %v246
  %v264 = vmul.f32 %v232, %v246
  %v265 = vmul.f32 %v233, %v251
  %v266 = vmul.f32 %v234, %v251
  %v267 = vmul.f32 %v235, %v256
  %v268 = vmul.f32 %v236, %v256
  %v269 = vmul.f32 %v237, %v261
  %v270 = vmul.f32 %v238, %v261
  %v271 = vld [vmem:[%s3] sm:$0xff]
  %v272 = vld [vmem:[%s3 + $0x8] sm:$0xff]
  %v273 = vld [vmem:[%s3 + $0x10] sm:$0xff]
  %v274 = vld [vmem:[%s3 + $0x18] sm:$0xff]
  %276 = vset.pattern.permute.xlu0 0
  %277 = vperm.xlu0 %276, %v271
  %v278 = vpop.permute.xlu0 %277
  %281 = vset.pattern.permute.xlu0 0
  %282 = vperm.xlu0 %281, %v272
  %v283 = vpop.permute.xlu0 %282
  %286 = vset.pattern.permute.xlu0 0
  %287 = vperm.xlu0 %286, %v273
  %v288 = vpop.permute.xlu0 %287
  %291 = vset.pattern.permute.xlu0 0
  %292 = vperm.xlu0 %291, %v274
  %v293 = vpop.permute.xlu0 %292
  %v295 = vadd.f32 %v263, %v278
  %v296 = vadd.f32 %v264, %v278
  %v297 = vadd.f32 %v265, %v283
  %v298 = vadd.f32 %v266, %v283
  %v299 = vadd.f32 %v267, %v288
  %v300 = vadd.f32 %v268, %v288
  %v301 = vadd.f32 %v269, %v293
  %v302 = vadd.f32 %v270, %v293
  %v303 = vpack.c.bf16 %v296, %v295
  %v304 = vpack.c.bf16 %v298, %v297
  %v305 = vpack.c.bf16 %v300, %v299
  %v306 = vpack.c.bf16 %v302, %v301
  %vm307 = vcmask 1043456
  %vm308 = vcmask 277508
  %vm309 = vmor %vm308, %vm307
  %310 = vst.msk [vmem:[%s4] sm:$0xff] %vm309, %v303
  %311 = vst.msk [vmem:[%s4 + $0x8] sm:$0xff] %vm309, %v304
  %312 = vst.msk [vmem:[%s4 + $0x10] sm:$0xff] %vm309, %v305
  %313 = vst.msk [vmem:[%s4 + $0x18] sm:$0xff] %vm309, %v306
  // Predicated region
  $region18: #{cifarnet_forward.16} parent=0 // pred_check
    _
  $region19: #{cifarnet_forward.16} parent=0 // pred_check_branch
    %315 = sbr.rel (0) target = $region21
  $region20: #{cifarnet_forward.16} parent=0 // pred_region
    _
  $region21: #{cifarnet_forward.16} parent=0 // pred_fallthru
    _
  // Predicated region
  $region22: #{cifarnet_forward.16} parent=0 // pred_check
    _
  $region23: #{cifarnet_forward.16} parent=0 // pred_check_branch
    %317 = sbr.rel (0) target = $region25
  $region24: #{cifarnet_forward.16} parent=0 // pred_region
    _
  $region25: #{cifarnet_forward.16} parent=0 // pred_fallthru
    _

// kernel: cifarnet_forward.17
$region0: #{cifarnet_forward.17}
  #allocation0 [shape = 'u32[]', space=smem, size = 0x4, offset = 0x4, fixed_abs, tag = 'smem constant byte address 0x4 - core index']
  #allocation1 [shape = 'u32[72,128]{1,0:T(1,128)}', space=vmem, size = 0x9000, scoped, tag = 'internal scratch']
  %s0 = inlined_call_operand.vmem [shape: bf16[64,288], index: 0, kind: input, shape index: {}]
  %s1 = inlined_call_operand.vmem [shape: bf16[288,162], index: 1, kind: input, shape index: {}]
  %s2 = inlined_call_operand.vmem [shape: f32[64,1], index: 2, kind: input, shape index: {}]
  %s3 = inlined_call_operand.vmem [shape: f32[64,1], index: 3, kind: input, shape index: {}]
  %s4 = inlined_call_operand.vmem [shape: bf16[64,162], index: 4, kind: output, shape index: {}]
  %s5 = sld [smem:[#allocation0]]
  $region26: #{cifarnet_forward.17} parent=0
    _
  %s7 = ssub.s32 1, %s5
  %s8 = scalar_select 0, %s7, %s5
  // Predicated region
  $region2: #{cifarnet_forward.17} parent=0 // pred_check
    _
  $region3: #{cifarnet_forward.17} parent=0 // pred_check_branch
    %10 = sbr.rel (0) target = $region5
  $region4: #{cifarnet_forward.17} parent=0 // pred_region
    _
  $region5: #{cifarnet_forward.17} parent=0 // pred_fallthru
    _
  // Predicated region
  $region6: #{cifarnet_forward.17} parent=0 // pred_check
    _
  $region7: #{cifarnet_forward.17} parent=0 // pred_check_branch
    %12 = sbr.rel (0) target = $region9
  $region8: #{cifarnet_forward.17} parent=0 // pred_region
    _
  $region9: #{cifarnet_forward.17} parent=0 // pred_fallthru
    _
  // Predicated region
  $region10: #{cifarnet_forward.17} parent=0 // pred_check
    _
  $region11: #{cifarnet_forward.17} parent=0 // pred_check_branch
    %14 = sbr.rel (0) target = $region13
  $region12: #{cifarnet_forward.17} parent=0 // pred_region
    _
  $region13: #{cifarnet_forward.17} parent=0 // pred_fallthru
    _
  // Predicated region
  $region14: #{cifarnet_forward.17} parent=0 // pred_check
    _
  $region15: #{cifarnet_forward.17} parent=0 // pred_check_branch
    %16 = sbr.rel (0) target = $region17
  $region16: #{cifarnet_forward.17} parent=0 // pred_region
    _
  $region17: #{cifarnet_forward.17} parent=0 // pred_fallthru
    _
  %v18 = vld [vmem:[%s0] sm:$0xff]
  %v19 = vld [vmem:[%s0 + $0x8] sm:$0xf]
  %v20 = vld [vmem:[%s0 + $0xc] sm:$0xff]
  %v21 = vld [vmem:[%s0 + $0x14] sm:$0xf]
  %v22 = vld [vmem:[%s0 + $0x18] sm:$0xff]
  %v23 = vld [vmem:[%s0 + $0x20] sm:$0xf]
  %v24 = vld [vmem:[%s0 + $0x24] sm:$0xff]
  %v25 = vld [vmem:[%s0 + $0x2c] sm:$0xf]
  %v26 = vld [vmem:[%s0 + $0x30] sm:$0xff]
  %v27 = vld [vmem:[%s0 + $0x38] sm:$0xf]
  %v28 = vld [vmem:[%s0 + $0x3c] sm:$0xff]
  %v29 = vld [vmem:[%s0 + $0x44] sm:$0xf]
  %v30 = vld [vmem:[%s0 + $0x48] sm:$0xff]
  %v31 = vld [vmem:[%s0 + $0x50] sm:$0xf]
  %v32 = vld [vmem:[%s0 + $0x54] sm:$0xff]
  %v33 = vld [vmem:[%s0 + $0x5c] sm:$0xf]
  %v34 = vld [vmem:[%s1] sm:$0xff]
  %v35 = vld [vmem:[%s1 + $0x8] sm:$0xff]
  %v36 = vld [vmem:[%s1 + $0x10] sm:$0xff]
  %v37 = vld [vmem:[%s1 + $0x18] sm:$0xff]
  %v38 = vld [vmem:[%s1 + $0x20] sm:$0xff]
  %v39 = vld [vmem:[%s1 + $0x28] sm:$0xff]
  %v40 = vld [vmem:[%s1 + $0x30] sm:$0xff]
  %v41 = vld [vmem:[%s1 + $0x38] sm:$0xff]
  %v42 = vld [vmem:[%s1 + $0x40] sm:$0xff]
  %v43 = vld [vmem:[%s1 + $0x48] sm:$0xff]
  %v44 = vld [vmem:[%s1 + $0x50] sm:$0xff]
  %v45 = vld [vmem:[%s1 + $0x58] sm:$0xff]
  %v46 = vld [vmem:[%s1 + $0x60] sm:$0xff]
  %v47 = vld [vmem:[%s1 + $0x68] sm:$0xff]
  %v48 = vld [vmem:[%s1 + $0x70] sm:$0xff]
  %v49 = vld [vmem:[%s1 + $0x78] sm:$0xff]
  %v50 = vld [vmem:[%s1 + $0x80] sm:$0xff]
  %v51 = vld [vmem:[%s1 + $0x88] sm:$0xff]
  %v52 = vld [vmem:[%s1 + $0x90] sm:$0xff]
  %v53 = vld [vmem:[%s1 + $0x98] sm:$0xff]
  %v54 = vld [vmem:[%s1 + $0xa0] sm:$0xff]
  %v55 = vld [vmem:[%s1 + $0xa8] sm:$0xff]
  %v56 = vld [vmem:[%s1 + $0xb0] sm:$0xff]
  %v57 = vld [vmem:[%s1 + $0xb8] sm:$0xff]
  %v58 = vld [vmem:[%s1 + $0xc0] sm:$0xff]
  %v59 = vld [vmem:[%s1 + $0xc8] sm:$0xff]
  %v60 = vld [vmem:[%s1 + $0xd0] sm:$0xff]
  %v61 = vld [vmem:[%s1 + $0xd8] sm:$0xff]
  %v62 = vld [vmem:[%s1 + $0xe0] sm:$0xff]
  %v63 = vld [vmem:[%s1 + $0xe8] sm:$0xff]
  %v64 = vld [vmem:[%s1 + $0xf0] sm:$0xff]
  %v65 = vld [vmem:[%s1 + $0xf8] sm:$0xff]
  %v66 = vld [vmem:[%s1 + $0x100] sm:$0xff]
  %v67 = vld [vmem:[%s1 + $0x108] sm:$0xff]
  %v68 = vld [vmem:[%s1 + $0x110] sm:$0xff]
  %v69 = vld [vmem:[%s1 + $0x118] sm:$0xff]
  %v86 = vunpack.c.l.b16 %v18
  %v87 = vunpack.c.h.b16 %v18
  %v88 = vunpack.c.l.b16 %v19
  %v89 = vunpack.c.l.b16 %v20
  %v90 = vunpack.c.h.b16 %v20
  %v91 = vunpack.c.l.b16 %v21
  %v92 = vunpack.c.l.b16 %v22
  %v93 = vunpack.c.h.b16 %v22
  %v94 = vunpack.c.l.b16 %v23
  %v95 = vunpack.c.l.b16 %v24
  %v96 = vunpack.c.h.b16 %v24
  %v97 = vunpack.c.l.b16 %v25
  %v98 = vunpack.c.l.b16 %v26
  %v99 = vunpack.c.h.b16 %v26
  %v100 = vunpack.c.l.b16 %v27
  %v101 = vunpack.c.l.b16 %v28
  %v102 = vunpack.c.h.b16 %v28
  %v103 = vunpack.c.l.b16 %v29
  %v104 = vunpack.c.l.b16 %v30
  %v105 = vunpack.c.h.b16 %v30
  %v106 = vunpack.c.l.b16 %v31
  %v107 = vunpack.c.l.b16 %v32
  %v108 = vunpack.c.h.b16 %v32
  %v109 = vunpack.c.l.b16 %v33
  %v110 = vpack.c.b16 %v89, %v86
  %v111 = vpack.c.b16 %v90, %v87
  %v112 = vpack.c.b16 %v91, %v88
  %v113 = vpack.c.b16 %v95, %v92
  %v114 = vpack.c.b16 %v96, %v93
  %v115 = vpack.c.b16 %v97, %v94
  %v116 = vpack.c.b16 %v101, %v98
  %v117 = vpack.c.b16 %v102, %v99
  %v118 = vpack.c.b16 %v103, %v100
  %v119 = vpack.c.b16 %v107, %v104
  %v120 = vpack.c.b16 %v108, %v105
  %v121 = vpack.c.b16 %v109, %v106
  %v166 = vunpack.c.l.b16 %v34
  %v167 = vunpack.c.h.b16 %v34
  %v168 = vunpack.c.l.b16 %v35
  %v169 = vunpack.c.h.b16 %v35
  %v170 = vunpack.c.l.b16 %v36
  %v171 = vunpack.c.h.b16 %v36
  %v172 = vunpack.c.l.b16 %v37
  %v173 = vunpack.c.h.b16 %v37
  %v174 = vunpack.c.l.b16 %v38
  %v175 = vunpack.c.h.b16 %v38
  %v176 = vunpack.c.l.b16 %v39
  %v177 = vunpack.c.h.b16 %v39
  %v178 = vunpack.c.l.b16 %v40
  %v179 = vunpack.c.h.b16 %v40
  %v180 = vunpack.c.l.b16 %v41
  %v181 = vunpack.c.h.b16 %v41
  %v182 = vunpack.c.l.b16 %v42
  %v183 = vunpack.c.h.b16 %v42
  %v184 = vunpack.c.l.b16 %v43
  %v185 = vunpack.c.h.b16 %v43
  %v186 = vunpack.c.l.b16 %v44
  %v187 = vunpack.c.h.b16 %v44
  %v188 = vunpack.c.l.b16 %v45
  %v189 = vunpack.c.h.b16 %v45
  %v190 = vunpack.c.l.b16 %v46
  %v191 = vunpack.c.h.b16 %v46
  %v192 = vunpack.c.l.b16 %v47
  %v193 = vunpack.c.h.b16 %v47
  %v194 = vunpack.c.l.b16 %v48
  %v195 = vunpack.c.h.b16 %v48
  %v196 = vunpack.c.l.b16 %v49
  %v197 = vunpack.c.h.b16 %v49
  %v198 = vunpack.c.l.b16 %v50
  %v199 = vunpack.c.h.b16 %v50
  %v200 = vunpack.c.l.b16 %v51
  %v201 = vunpack.c.h.b16 %v51
  %v202 = vunpack.c.l.b16 %v52
  %v203 = vunpack.c.h.b16 %v52
  %v204 = vunpack.c.l.b16 %v53
  %v205 = vunpack.c.h.b16 %v53
  %v206 = vunpack.c.l.b16 %v54
  %v207 = vunpack.c.h.b16 %v54
  %v208 = vunpack.c.l.b16 %v55
  %v209 = vunpack.c.h.b16 %v55
  %v210 = vunpack.c.l.b16 %v56
  %v211 = vunpack.c.h.b16 %v56
  %v212 = vunpack.c.l.b16 %v57
  %v213 = vunpack.c.h.b16 %v57
  %v214 = vunpack.c.l.b16 %v58
  %v215 = vunpack.c.h.b16 %v58
  %v216 = vunpack.c.l.b16 %v59
  %v217 = vunpack.c.h.b16 %v59
  %v218 = vunpack.c.l.b16 %v60
  %v219 = vunpack.c.h.b16 %v60
  %v220 = vunpack.c.l.b16 %v61
  %v221 = vunpack.c.h.b16 %v61
  %v222 = vunpack.c.l.b16 %v62
  %v223 = vunpack.c.h.b16 %v62
  %v224 = vunpack.c.l.b16 %v63
  %v225 = vunpack.c.h.b16 %v63
  %v226 = vunpack.c.l.b16 %v64
  %v227 = vunpack.c.h.b16 %v64
  %v228 = vunpack.c.l.b16 %v65
  %v229 = vunpack.c.h.b16 %v65
  %v230 = vunpack.c.l.b16 %v66
  %v231 = vunpack.c.h.b16 %v66
  %v232 = vunpack.c.l.b16 %v67
  %v233 = vunpack.c.h.b16 %v67
  %v234 = vunpack.c.l.b16 %v68
  %v235 = vunpack.c.h.b16 %v68
  %v236 = vunpack.c.l.b16 %v69
  %v237 = vunpack.c.h.b16 %v69
  %v238 = vpack.c.b16 %v168, %v166
  %v239 = vpack.c.b16 %v169, %v167
  %v240 = vpack.c.b16 %v172, %v170
  %v241 = vpack.c.b16 %v173, %v171
  %v242 = vpack.c.b16 %v176, %v174
  %v243 = vpack.c.b16 %v177, %v175
  %v244 = vpack.c.b16 %v180, %v178
  %v245 = vpack.c.b16 %v181, %v179
  %v246 = vpack.c.b16 %v184, %v182
  %v247 = vpack.c.b16 %v185, %v183
  %v248 = vpack.c.b16 %v188, %v186
  %v249 = vpack.c.b16 %v189, %v187
  %v250 = vpack.c.b16 %v192, %v190
  %v251 = vpack.c.b16 %v193, %v191
  %v252 = vpack.c.b16 %v196, %v194
  %v253 = vpack.c.b16 %v197, %v195
  %v254 = vpack.c.b16 %v200, %v198
  %v255 = vpack.c.b16 %v201, %v199
  %v256 = vpack.c.b16 %v204, %v202
  %v257 = vpack.c.b16 %v205, %v203
  %v258 = vpack.c.b16 %v208, %v206
  %v259 = vpack.c.b16 %v209, %v207
  %v260 = vpack.c.b16 %v212, %v210
  %v261 = vpack.c.b16 %v213, %v211
  %v262 = vpack.c.b16 %v216, %v214
  %v263 = vpack.c.b16 %v217, %v215
  %v264 = vpack.c.b16 %v220, %v218
  %v265 = vpack.c.b16 %v221, %v219
  %v266 = vpack.c.b16 %v224, %v222
  %v267 = vpack.c.b16 %v225, %v223
  %v268 = vpack.c.b16 %v228, %v226
  %v269 = vpack.c.b16 %v229, %v227
  %v270 = vpack.c.b16 %v232, %v230
  %v271 = vpack.c.b16 %v233, %v231
  %v272 = vpack.c.b16 %v236, %v234
  %v273 = vpack.c.b16 %v237, %v235
  %vm310 = vcmask 261120
  %v312 = vsel %vm310, %v112, 0
  %v315 = vsel %vm310, %v115, 0
  %v318 = vsel %vm310, %v118, 0
  %v321 = vsel %vm310, %v121, 0
  %323 = vmatpush.bf16.msra.mxu0 %v252
  %324 = vmatpush.bf16.msra.mxu0 %v250
  %325 = vmatpush.bf16.msra.mxu0 %v248
  %326 = vmatpush.bf16.msra.mxu0 %v246
  %327 = vmatpush.bf16.msra.mxu0 %v244
  %328 = vmatpush.bf16.msra.mxu0 %v242
  %329 = vmatpush.bf16.msra.mxu0 %v240
  %330 = vmatpush.bf16.msra.mxu0 %v238
  %331 = vmatmul.bf16.gmra.mxu0 %v110
  %v332 = vpop.f32.mrf.mxu0
  %v333 = vadd.f32 0.0, %v332
  %v334 = vpop.f32.mrf.mxu0
  %v335 = vadd.f32 0.0, %v334
  %336 = vmatmul.bf16.gmra.mxu0 %v113
  %v337 = vpop.f32.mrf.mxu0
  %v338 = vadd.f32 0.0, %v337
  %v339 = vpop.f32.mrf.mxu0
  %v340 = vadd.f32 0.0, %v339
  %341 = vmatmul.bf16.gmra.mxu0 %v116
  %v342 = vpop.f32.mrf.mxu0
  %v343 = vadd.f32 0.0, %v342
  %v344 = vpop.f32.mrf.mxu0
  %v345 = vadd.f32 0.0, %v344
  %346 = vmatmul.bf16.gmra.mxu0 %v119
  %v347 = vpop.f32.mrf.mxu0
  %v348 = vadd.f32 0.0, %v347
  %v349 = vpop.f32.mrf.mxu0
  %v350 = vadd.f32 0.0, %v349
  %351 = vdwg.mxu0
  %352 = vmatpush.bf16.msra.mxu0 %v268
  %353 = vmatpush.bf16.msra.mxu0 %v266
  %354 = vmatpush.bf16.msra.mxu0 %v264
  %355 = vmatpush.bf16.msra.mxu0 %v262
  %356 = vmatpush.bf16.msra.mxu0 %v260
  %357 = vmatpush.bf16.msra.mxu0 %v258
  %358 = vmatpush.bf16.msra.mxu0 %v256
  %359 = vmatpush.bf16.msra.mxu0 %v254
  %360 = vmatmul.bf16.gmra.mxu0 %v111
  %v361 = vpop.f32.mrf.mxu0
  %v362 = vadd.f32 %v333, %v361
  %v363 = vpop.f32.mrf.mxu0
  %v364 = vadd.f32 %v335, %v363
  %365 = vmatmul.bf16.gmra.mxu0 %v114
  %v366 = vpop.f32.mrf.mxu0
  %v367 = vadd.f32 %v338, %v366
  %v368 = vpop.f32.mrf.mxu0
  %v369 = vadd.f32 %v340, %v368
  %370 = vmatmul.bf16.gmra.mxu0 %v117
  %v371 = vpop.f32.mrf.mxu0
  %v372 = vadd.f32 %v343, %v371
  %v373 = vpop.f32.mrf.mxu0
  %v374 = vadd.f32 %v345, %v373
  %375 = vmatmul.bf16.gmra.mxu0 %v120
  %v376 = vpop.f32.mrf.mxu0
  %v377 = vadd.f32 %v348, %v376
  %v378 = vpop.f32.mrf.mxu0
  %v379 = vadd.f32 %v350, %v378
  %380 = vdwg.mxu0
  %381 = vmatpush.bf16.msra.mxu0 0
  %382 = vmatpush.bf16.msra.mxu0 0
  %383 = vmatpush.bf16.msra.mxu0 0
  %384 = vmatpush.bf16.msra.mxu0 0
  %385 = vmatpush.bf16.msra.mxu0 0
  %386 = vmatpush.bf16.msra.mxu0 0
  %387 = vmatpush.bf16.msra.mxu0 %v272
  %388 = vmatpush.bf16.msra.mxu0 %v270
  %389 = vmatmul.bf16.gmra.mxu0 %v312
  %v390 = vpop.f32.mrf.mxu0
  %v391 = vadd.f32 %v362, %v390
  %v392 = vpop.f32.mrf.mxu0
  %v393 = vadd.f32 %v364, %v392
  %394 = vmatmul.bf16.gmra.mxu0 %v315
  %v395 = vpop.f32.mrf.mxu0
  %v396 = vadd.f32 %v367, %v395
  %v397 = vpop.f32.mrf.mxu0
  %v398 = vadd.f32 %v369, %v397
  %399 = vmatmul.bf16.gmra.mxu0 %v318
  %v400 = vpop.f32.mrf.mxu0
  %v401 = vadd.f32 %v372, %v400
  %v402 = vpop.f32.mrf.mxu0
  %v403 = vadd.f32 %v374, %v402
  %404 = vmatmul.bf16.gmra.mxu0 %v321
  %v405 = vpop.f32.mrf.mxu0
  %v406 = vadd.f32 %v377, %v405
  %v407 = vpop.f32.mrf.mxu0
  %v408 = vadd.f32 %v379, %v407
  %409 = vdwg.mxu0
  %410 = vmatpush.bf16.msra.mxu0 %v253
  %411 = vmatpush.bf16.msra.mxu0 %v251
  %412 = vmatpush.bf16.msra.mxu0 %v249
  %413 = vmatpush.bf16.msra.mxu0 %v247
  %414 = vmatpush.bf16.msra.mxu0 %v245
  %415 = vmatpush.bf16.msra.mxu0 %v243
  %416 = vmatpush.bf16.msra.mxu0 %v241
  %417 = vmatpush.bf16.msra.mxu0 %v239
  %418 = vmatmul.bf16.gmra.mxu0 %v110
  %v419 = vpop.f32.mrf.mxu0
  %v420 = vadd.f32 0.0, %v419
  %v421 = vpop.f32.mrf.mxu0
  %v422 = vadd.f32 0.0, %v421
  %423 = vmatmul.bf16.gmra.mxu0 %v113
  %v424 = vpop.f32.mrf.mxu0
  %v425 = vadd.f32 0.0, %v424
  %v426 = vpop.f32.mrf.mxu0
  %v427 = vadd.f32 0.0, %v426
  %428 = vmatmul.bf16.gmra.mxu0 %v116
  %v429 = vpop.f32.mrf.mxu0
  %v430 = vadd.f32 0.0, %v429
  %v431 = vpop.f32.mrf.mxu0
  %v432 = vadd.f32 0.0, %v431
  %433 = vmatmul.bf16.gmra.mxu0 %v119
  %v434 = vpop.f32.mrf.mxu0
  %v435 = vadd.f32 0.0, %v434
  %v436 = vpop.f32.mrf.mxu0
  %v437 = vadd.f32 0.0, %v436
  %438 = vdwg.mxu0
  %439 = vmatpush.bf16.msra.mxu0 %v269
  %440 = vmatpush.bf16.msra.mxu0 %v267
  %441 = vmatpush.bf16.msra.mxu0 %v265
  %442 = vmatpush.bf16.msra.mxu0 %v263
  %443 = vmatpush.bf16.msra.mxu0 %v261
  %444 = vmatpush.bf16.msra.mxu0 %v259
  %445 = vmatpush.bf16.msra.mxu0 %v257
  %446 = vmatpush.bf16.msra.mxu0 %v255
  %447 = vmatmul.bf16.gmra.mxu0 %v111
  %v448 = vpop.f32.mrf.mxu0
  %v449 = vadd.f32 %v420, %v448
  %v450 = vpop.f32.mrf.mxu0
  %v451 = vadd.f32 %v422, %v450
  %452 = vmatmul.bf16.gmra.mxu0 %v114
  %v453 = vpop.f32.mrf.mxu0
  %v454 = vadd.f32 %v425, %v453
  %v455 = vpop.f32.mrf.mxu0
  %v456 = vadd.f32 %v427, %v455
  %457 = vmatmul.bf16.gmra.mxu0 %v117
  %v458 = vpop.f32.mrf.mxu0
  %v459 = vadd.f32 %v430, %v458
  %v460 = vpop.f32.mrf.mxu0
  %v461 = vadd.f32 %v432, %v460
  %462 = vmatmul.bf16.gmra.mxu0 %v120
  %v463 = vpop.f32.mrf.mxu0
  %v464 = vadd.f32 %v435, %v463
  %v465 = vpop.f32.mrf.mxu0
  %v466 = vadd.f32 %v437, %v465
  %467 = vdwg.mxu0
  %468 = vmatpush.bf16.msra.mxu0 0
  %469 = vmatpush.bf16.msra.mxu0 0
  %470 = vmatpush.bf16.msra.mxu0 0
  %471 = vmatpush.bf16.msra.mxu0 0
  %472 = vmatpush.bf16.msra.mxu0 0
  %473 = vmatpush.bf16.msra.mxu0 0
  %474 = vmatpush.bf16.msra.mxu0 %v273
  %475 = vmatpush.bf16.msra.mxu0 %v271
  %476 = vmatmul.bf16.gmra.mxu0 %v312
  %v477 = vpop.f32.mrf.mxu0
  %v478 = vadd.f32 %v449, %v477
  %v479 = vpop.f32.mrf.mxu0
  %v480 = vadd.f32 %v451, %v479
  %481 = vmatmul.bf16.gmra.mxu0 %v315
  %v482 = vpop.f32.mrf.mxu0
  %v483 = vadd.f32 %v454, %v482
  %v484 = vpop.f32.mrf.mxu0
  %v485 = vadd.f32 %v456, %v484
  %486 = vmatmul.bf16.gmra.mxu0 %v318
  %v487 = vpop.f32.mrf.mxu0
  %v488 = vadd.f32 %v459, %v487
  %v489 = vpop.f32.mrf.mxu0
  %v490 = vadd.f32 %v461, %v489
  %491 = vmatmul.bf16.gmra.mxu0 %v321
  %v492 = vpop.f32.mrf.mxu0
  %v493 = vadd.f32 %v464, %v492
  %v494 = vpop.f32.mrf.mxu0
  %v495 = vadd.f32 %v466, %v494
  %496 = vdwg.mxu0
  %v497 = vmax.f32 %v391, 0.0
  %v498 = vmax.f32 %v478, 0.0
  %v499 = vmax.f32 %v393, 0.0
  %v500 = vmax.f32 %v480, 0.0
  %v501 = vmax.f32 %v396, 0.0
  %v502 = vmax.f32 %v483, 0.0
  %v503 = vmax.f32 %v398, 0.0
  %v504 = vmax.f32 %v485, 0.0
  %v505 = vmax.f32 %v401, 0.0
  %v506 = vmax.f32 %v488, 0.0
  %v507 = vmax.f32 %v403, 0.0
  %v508 = vmax.f32 %v490, 0.0
  %v509 = vmax.f32 %v406, 0.0
  %v510 = vmax.f32 %v493, 0.0
  %v511 = vmax.f32 %v408, 0.0
  %v512 = vmax.f32 %v495, 0.0
  %v513 = vld [vmem:[%s2] sm:$0xff]
  %v514 = vld [vmem:[%s2 + $0x8] sm:$0xff]
  %v515 = vld [vmem:[%s2 + $0x10] sm:$0xff]
  %v516 = vld [vmem:[%s2 + $0x18] sm:$0xff]
  %v517 = vld [vmem:[%s2 + $0x20] sm:$0xff]
  %v518 = vld [vmem:[%s2 + $0x28] sm:$0xff]
  %v519 = vld [vmem:[%s2 + $0x30] sm:$0xff]
  %v520 = vld [vmem:[%s2 + $0x38] sm:$0xff]
  %522 = vset.pattern.permute.xlu0 0
  %523 = vperm.xlu0 %522, %v513
  %v524 = vpop.permute.xlu0 %523
  %527 = vset.pattern.permute.xlu0 0
  %528 = vperm.xlu0 %527, %v514
  %v529 = vpop.permute.xlu0 %528
  %532 = vset.pattern.permute.xlu0 0
  %533 = vperm.xlu0 %532, %v515
  %v534 = vpop.permute.xlu0 %533
  %537 = vset.pattern.permute.xlu0 0
  %538 = vperm.xlu0 %537, %v516
  %v539 = vpop.permute.xlu0 %538
  %542 = vset.pattern.permute.xlu0 0
  %543 = vperm.xlu0 %542, %v517
  %v544 = vpop.permute.xlu0 %543
  %547 = vset.pattern.permute.xlu0 0
  %548 = vperm.xlu0 %547, %v518
  %v549 = vpop.permute.xlu0 %548
  %552 = vset.pattern.permute.xlu0 0
  %553 = vperm.xlu0 %552, %v519
  %v554 = vpop.permute.xlu0 %553
  %557 = vset.pattern.permute.xlu0 0
  %558 = vperm.xlu0 %557, %v520
  %v559 = vpop.permute.xlu0 %558
  %v561 = vmul.f32 %v497, %v524
  %v562 = vmul.f32 %v498, %v524
  %v563 = vmul.f32 %v499, %v529
  %v564 = vmul.f32 %v500, %v529
  %v565 = vmul.f32 %v501, %v534
  %v566 = vmul.f32 %v502, %v534
  %v567 = vmul.f32 %v503, %v539
  %v568 = vmul.f32 %v504, %v539
  %v569 = vmul.f32 %v505, %v544
  %v570 = vmul.f32 %v506, %v544
  %v571 = vmul.f32 %v507, %v549
  %v572 = vmul.f32 %v508, %v549
  %v573 = vmul.f32 %v509, %v554
  %v574 = vmul.f32 %v510, %v554
  %v575 = vmul.f32 %v511, %v559
  %v576 = vmul.f32 %v512, %v559
  %v577 = vld [vmem:[%s3] sm:$0xff]
  %v578 = vld [vmem:[%s3 + $0x8] sm:$0xff]
  %v579 = vld [vmem:[%s3 + $0x10] sm:$0xff]
  %v580 = vld [vmem:[%s3 + $0x18] sm:$0xff]
  %v581 = vld [vmem:[%s3 + $0x20] sm:$0xff]
  %v582 = vld [vmem:[%s3 + $0x28] sm:$0xff]
  %v583 = vld [vmem:[%s3 + $0x30] sm:$0xff]
  %v584 = vld [vmem:[%s3 + $0x38] sm:$0xff]
  %586 = vset.pattern.permute.xlu0 0
  %587 = vperm.xlu0 %586, %v577
  %v588 = vpop.permute.xlu0 %587
  %591 = vset.pattern.permute.xlu0 0
  %592 = vperm.xlu0 %591, %v578
  %v593 = vpop.permute.xlu0 %592
  %596 = vset.pattern.permute.xlu0 0
  %597 = vperm.xlu0 %596, %v579
  %v598 = vpop.permute.xlu0 %597
  %601 = vset.pattern.permute.xlu0 0
  %602 = vperm.xlu0 %601, %v580
  %v603 = vpop.permute.xlu0 %602
  %606 = vset.pattern.permute.xlu0 0
  %607 = vperm.xlu0 %606, %v581
  %v608 = vpop.permute.xlu0 %607
  %611 = vset.pattern.permute.xlu0 0
  %612 = vperm.xlu0 %611, %v582
  %v613 = vpop.permute.xlu0 %612
  %616 = vset.pattern.permute.xlu0 0
  %617 = vperm.xlu0 %616, %v583
  %v618 = vpop.permute.xlu0 %617
  %621 = vset.pattern.permute.xlu0 0
  %622 = vperm.xlu0 %621, %v584
  %v623 = vpop.permute.xlu0 %622
  %v625 = vadd.f32 %v561, %v588
  %v626 = vadd.f32 %v562, %v588
  %v627 = vadd.f32 %v563, %v593
  %v628 = vadd.f32 %v564, %v593
  %v629 = vadd.f32 %v565, %v598
  %v630 = vadd.f32 %v566, %v598
  %v631 = vadd.f32 %v567, %v603
  %v632 = vadd.f32 %v568, %v603
  %v633 = vadd.f32 %v569, %v608
  %v634 = vadd.f32 %v570, %v608
  %v635 = vadd.f32 %v571, %v613
  %v636 = vadd.f32 %v572, %v613
  %v637 = vadd.f32 %v573, %v618
  %v638 = vadd.f32 %v574, %v618
  %v639 = vadd.f32 %v575, %v623
  %v640 = vadd.f32 %v576, %v623
  %v641 = vpack.c.bf16 %v626, %v625
  %v642 = vpack.c.bf16 %v628, %v627
  %v643 = vpack.c.bf16 %v630, %v629
  %v644 = vpack.c.bf16 %v632, %v631
  %v645 = vpack.c.bf16 %v634, %v633
  %v646 = vpack.c.bf16 %v636, %v635
  %v647 = vpack.c.bf16 %v638, %v637
  %v648 = vpack.c.bf16 %v640, %v639
  %vm649 = vcmask 1043456
  %vm650 = vcmask 277508
  %vm651 = vmor %vm650, %vm649
  %652 = vst.msk [vmem:[%s4] sm:$0xff] %vm651, %v641
  %653 = vst.msk [vmem:[%s4 + $0x8] sm:$0xff] %vm651, %v642
  %654 = vst.msk [vmem:[%s4 + $0x10] sm:$0xff] %vm651, %v643
  %655 = vst.msk [vmem:[%s4 + $0x18] sm:$0xff] %vm651, %v644
  %656 = vst.msk [vmem:[%s4 + $0x20] sm:$0xff] %vm651, %v645
  %657 = vst.msk [vmem:[%s4 + $0x28] sm:$0xff] %vm651, %v646
  %658 = vst.msk [vmem:[%s4 + $0x30] sm:$0xff] %vm651, %v647
  %659 = vst.msk [vmem:[%s4 + $0x38] sm:$0xff] %vm651, %v648
  // Predicated region
  $region18: #{cifarnet_forward.17} parent=0 // pred_check
    _
  $region19: #{cifarnet_forward.17} parent=0 // pred_check_branch
    %661 = sbr.rel (0) target = $region21
  $region20: #{cifarnet_forward.17} parent=0 // pred_region
    _
  $region21: #{cifarnet_forward.17} parent=0 // pred_fallthru
    _
  // Predicated region
  $region22: #{cifarnet_forward.17} parent=0 // pred_check
    _
  $region23: #{cifarnet_forward.17} parent=0 // pred_check_branch
    %663 = sbr.rel (0) target = $region25
  $region24: #{cifarnet_forward.17} parent=0 // pred_region
    _
  $region25: #{cifarnet_forward.17} parent=0 // pred_fallthru
    _

// kernel: cifarnet_forward.18
$region0: #{cifarnet_forward.18}
  #allocation0 [shape = 'u32[]', space=smem, size = 0x4, offset = 0x4, fixed_abs, tag = 'smem constant byte address 0x4 - core index']
  #allocation1 [shape = 'u32[72,128]{1,0:T(1,128)}', space=vmem, size = 0x9000, scoped, tag = 'internal scratch']
  %s0 = inlined_call_operand.vmem [shape: bf16[16,576], index: 0, kind: input, shape index: {}]
  %s1 = inlined_call_operand.vmem [shape: bf16[576,50], index: 1, kind: input, shape index: {}]
  %s2 = inlined_call_operand.vmem [shape: f32[16,1], index: 2, kind: input, shape index: {}]
  %s3 = inlined_call_operand.vmem [shape: f32[16,1], index: 3, kind: input, shape index: {}]
  %s4 = inlined_call_operand.vmem [shape: bf16[16,50], index: 4, kind: output, shape index: {}]
  %s5 = sld [smem:[#allocation0]]
  $region26: #{cifarnet_forward.18} parent=0
    _
  %s7 = ssub.s32 1, %s5
  %s8 = scalar_select 0, %s7, %s5
  // Predicated region
  $region2: #{cifarnet_forward.18} parent=0 // pred_check
    _
  $region3: #{cifarnet_forward.18} parent=0 // pred_check_branch
    %10 = sbr.rel (0) target = $region5
  $region4: #{cifarnet_forward.18} parent=0 // pred_region
    _
  $region5: #{cifarnet_forward.18} parent=0 // pred_fallthru
    _
  // Predicated region
  $region6: #{cifarnet_forward.18} parent=0 // pred_check
    _
  $region7: #{cifarnet_forward.18} parent=0 // pred_check_branch
    %12 = sbr.rel (0) target = $region9
  $region8: #{cifarnet_forward.18} parent=0 // pred_region
    _
  $region9: #{cifarnet_forward.18} parent=0 // pred_fallthru
    _
  // Predicated region
  $region10: #{cifarnet_forward.18} parent=0 // pred_check
    _
  $region11: #{cifarnet_forward.18} parent=0 // pred_check_branch
    %14 = sbr.rel (0) target = $region13
  $region12: #{cifarnet_forward.18} parent=0 // pred_region
    _
  $region13: #{cifarnet_forward.18} parent=0 // pred_fallthru
    _
  // Predicated region
  $region14: #{cifarnet_forward.18} parent=0 // pred_check
    _
  $region15: #{cifarnet_forward.18} parent=0 // pred_check_branch
    %16 = sbr.rel (0) target = $region17
  $region16: #{cifarnet_forward.18} parent=0 // pred_region
    _
  $region17: #{cifarnet_forward.18} parent=0 // pred_fallthru
    _
  %v18 = vld [vmem:[%s0] sm:$0xff]
  %v19 = vld [vmem:[%s0 + $0x8] sm:$0xff]
  %v20 = vld [vmem:[%s0 + $0x10] sm:$0xf]
  %v21 = vld [vmem:[%s0 + $0x14] sm:$0xff]
  %v22 = vld [vmem:[%s0 + $0x1c] sm:$0xff]
  %v23 = vld [vmem:[%s0 + $0x24] sm:$0xf]
  %v24 = vld [vmem:[%s1] sm:$0xf]
  %v25 = vld [vmem:[%s1 + $0x4] sm:$0xf]
  %v26 = vld [vmem:[%s1 + $0x8] sm:$0xf]
  %v27 = vld [vmem:[%s1 + $0xc] sm:$0xf]
  %v28 = vld [vmem:[%s1 + $0x10] sm:$0xf]
  %v29 = vld [vmem:[%s1 + $0x14] sm:$0xf]
  %v30 = vld [vmem:[%s1 + $0x18] sm:$0xf]
  %v31 = vld [vmem:[%s1 + $0x1c] sm:$0xf]
  %v32 = vld [vmem:[%s1 + $0x20] sm:$0xf]
  %v33 = vld [vmem:[%s1 + $0x24] sm:$0xf]
  %v34 = vld [vmem:[%s1 + $0x28] sm:$0xf]
  %v35 = vld [vmem:[%s1 + $0x2c] sm:$0xf]
  %v36 = vld [vmem:[%s1 + $0x30] sm:$0xf]
  %v37 = vld [vmem:[%s1 + $0x34] sm:$0xf]
  %v38 = vld [vmem:[%s1 + $0x38] sm:$0xf]
  %v39 = vld [vmem:[%s1 + $0x3c] sm:$0xf]
  %v40 = vld [vmem:[%s1 + $0x40] sm:$0xf]
  %v41 = vld [vmem:[%s1 + $0x44] sm:$0xf]
  %v42 = vld [vmem:[%s1 + $0x48] sm:$0xf]
  %v43 = vld [vmem:[%s1 + $0x4c] sm:$0xf]
  %v44 = vld [vmem:[%s1 + $0x50] sm:$0xf]
  %v45 = vld [vmem:[%s1 + $0x54] sm:$0xf]
  %v46 = vld [vmem:[%s1 + $0x58] sm:$0xf]
  %v47 = vld [vmem:[%s1 + $0x5c] sm:$0xf]
  %v48 = vld [vmem:[%s1 + $0x60] sm:$0xf]
  %v49 = vld [vmem:[%s1 + $0x64] sm:$0xf]
  %v50 = vld [vmem:[%s1 + $0x68] sm:$0xf]
  %v51 = vld [vmem:[%s1 + $0x6c] sm:$0xf]
  %v52 = vld [vmem:[%s1 + $0x70] sm:$0xf]
  %v53 = vld [vmem:[%s1 + $0x74] sm:$0xf]
  %v54 = vld [vmem:[%s1 + $0x78] sm:$0xf]
  %v55 = vld [vmem:[%s1 + $0x7c] sm:$0xf]
  %v56 = vld [vmem:[%s1 + $0x80] sm:$0xf]
  %v57 = vld [vmem:[%s1 + $0x84] sm:$0xf]
  %v58 = vld [vmem:[%s1 + $0x88] sm:$0xf]
  %v59 = vld [vmem:[%s1 + $0x8c] sm:$0xf]
  %v60 = vld [vmem:[%s1 + $0x90] sm:$0xf]
  %v61 = vld [vmem:[%s1 + $0x94] sm:$0xf]
  %v62 = vld [vmem:[%s1 + $0x98] sm:$0xf]
  %v63 = vld [vmem:[%s1 + $0x9c] sm:$0xf]
  %v64 = vld [vmem:[%s1 + $0xa0] sm:$0xf]
  %v65 = vld [vmem:[%s1 + $0xa4] sm:$0xf]
  %v66 = vld [vmem:[%s1 + $0xa8] sm:$0xf]
  %v67 = vld [vmem:[%s1 + $0xac] sm:$0xf]
  %v68 = vld [vmem:[%s1 + $0xb0] sm:$0xf]
  %v69 = vld [vmem:[%s1 + $0xb4] sm:$0xf]
  %v70 = vld [vmem:[%s1 + $0xb8] sm:$0xf]
  %v71 = vld [vmem:[%s1 + $0xbc] sm:$0xf]
  %v72 = vld [vmem:[%s1 + $0xc0] sm:$0xf]
  %v73 = vld [vmem:[%s1 + $0xc4] sm:$0xf]
  %v74 = vld [vmem:[%s1 + $0xc8] sm:$0xf]
  %v75 = vld [vmem:[%s1 + $0xcc] sm:$0xf]
  %v76 = vld [vmem:[%s1 + $0xd0] sm:$0xf]
  %v77 = vld [vmem:[%s1 + $0xd4] sm:$0xf]
  %v78 = vld [vmem:[%s1 + $0xd8] sm:$0xf]
  %v79 = vld [vmem:[%s1 + $0xdc] sm:$0xf]
  %v80 = vld [vmem:[%s1 + $0xe0] sm:$0xf]
  %v81 = vld [vmem:[%s1 + $0xe4] sm:$0xf]
  %v82 = vld [vmem:[%s1 + $0xe8] sm:$0xf]
  %v83 = vld [vmem:[%s1 + $0xec] sm:$0xf]
  %v84 = vld [vmem:[%s1 + $0xf0] sm:$0xf]
  %v85 = vld [vmem:[%s1 + $0xf4] sm:$0xf]
  %v86 = vld [vmem:[%s1 + $0xf8] sm:$0xf]
  %v87 = vld [vmem:[%s1 + $0xfc] sm:$0xf]
  %v88 = vld [vmem:[%s1 + $0x100] sm:$0xf]
  %v89 = vld [vmem:[%s1 + $0x104] sm:$0xf]
  %v90 = vld [vmem:[%s1 + $0x108] sm:$0xf]
  %v91 = vld [vmem:[%s1 + $0x10c] sm:$0xf]
  %v92 = vld [vmem:[%s1 + $0x110] sm:$0xf]
  %v93 = vld [vmem:[%s1 + $0x114] sm:$0xf]
  %v94 = vld [vmem:[%s1 + $0x118] sm:$0xf]
  %v95 = vld [vmem:[%s1 + $0x11c] sm:$0xf]
  %v102 = vunpack.c.l.b16 %v18
  %v103 = vunpack.c.h.b16 %v18
  %v104 = vunpack.c.l.b16 %v19
  %v105 = vunpack.c.h.b16 %v19
  %v106 = vunpack.c.l.b16 %v20
  %v107 = vunpack.c.l.b16 %v21
  %v108 = vunpack.c.h.b16 %v21
  %v109 = vunpack.c.l.b16 %v22
  %v110 = vunpack.c.h.b16 %v22
  %v111 = vunpack.c.l.b16 %v23
  %v112 = vpack.c.b16 %v107, %v102
  %v113 = vpack.c.b16 %v108, %v103
  %v114 = vpack.c.b16 %v109, %v104
  %v115 = vpack.c.b16 %v110, %v105
  %v116 = vpack.c.b16 %v111, %v106
  %v193 = vunpack.c.l.b16 %v24
  %v194 = vunpack.c.l.b16 %v25
  %v195 = vunpack.c.l.b16 %v26
  %v196 = vunpack.c.l.b16 %v27
  %v197 = vunpack.c.l.b16 %v28
  %v198 = vunpack.c.l.b16 %v29
  %v199 = vunpack.c.l.b16 %v30
  %v200 = vunpack.c.l.b16 %v31
  %v201 = vunpack.c.l.b16 %v32
  %v202 = vunpack.c.l.b16 %v33
  %v203 = vunpack.c.l.b16 %v34
  %v204 = vunpack.c.l.b16 %v35
  %v205 = vunpack.c.l.b16 %v36
  %v206 = vunpack.c.l.b16 %v37
  %v207 = vunpack.c.l.b16 %v38
  %v208 = vunpack.c.l.b16 %v39
  %v209 = vunpack.c.l.b16 %v40
  %v210 = vunpack.c.l.b16 %v41
  %v211 = vunpack.c.l.b16 %v42
  %v212 = vunpack.c.l.b16 %v43
  %v213 = vunpack.c.l.b16 %v44
  %v214 = vunpack.c.l.b16 %v45
  %v215 = vunpack.c.l.b16 %v46
  %v216 = vunpack.c.l.b16 %v47
  %v217 = vunpack.c.l.b16 %v48
  %v218 = vunpack.c.l.b16 %v49
  %v219 = vunpack.c.l.b16 %v50
  %v220 = vunpack.c.l.b16 %v51
  %v221 = vunpack.c.l.b16 %v52
  %v222 = vunpack.c.l.b16 %v53
  %v223 = vunpack.c.l.b16 %v54
  %v224 = vunpack.c.l.b16 %v55
  %v225 = vunpack.c.l.b16 %v56
  %v226 = vunpack.c.l.b16 %v57
  %v227 = vunpack.c.l.b16 %v58
  %v228 = vunpack.c.l.b16 %v59
  %v229 = vunpack.c.l.b16 %v60
  %v230 = vunpack.c.l.b16 %v61
  %v231 = vunpack.c.l.b16 %v62
  %v232 = vunpack.c.l.b16 %v63
  %v233 = vunpack.c.l.b16 %v64
  %v234 = vunpack.c.l.b16 %v65
  %v235 = vunpack.c.l.b16 %v66
  %v236 = vunpack.c.l.b16 %v67
  %v237 = vunpack.c.l.b16 %v68
  %v238 = vunpack.c.l.b16 %v69
  %v239 = vunpack.c.l.b16 %v70
  %v240 = vunpack.c.l.b16 %v71
  %v241 = vunpack.c.l.b16 %v72
  %v242 = vunpack.c.l.b16 %v73
  %v243 = vunpack.c.l.b16 %v74
  %v244 = vunpack.c.l.b16 %v75
  %v245 = vunpack.c.l.b16 %v76
  %v246 = vunpack.c.l.b16 %v77
  %v247 = vunpack.c.l.b16 %v78
  %v248 = vunpack.c.l.b16 %v79
  %v249 = vunpack.c.l.b16 %v80
  %v250 = vunpack.c.l.b16 %v81
  %v251 = vunpack.c.l.b16 %v82
  %v252 = vunpack.c.l.b16 %v83
  %v253 = vunpack.c.l.b16 %v84
  %v254 = vunpack.c.l.b16 %v85
  %v255 = vunpack.c.l.b16 %v86
  %v256 = vunpack.c.l.b16 %v87
  %v257 = vunpack.c.l.b16 %v88
  %v258 = vunpack.c.l.b16 %v89
  %v259 = vunpack.c.l.b16 %v90
  %v260 = vunpack.c.l.b16 %v91
  %v261 = vunpack.c.l.b16 %v92
  %v262 = vunpack.c.l.b16 %v93
  %v263 = vunpack.c.l.b16 %v94
  %v264 = vunpack.c.l.b16 %v95
  %v265 = vpack.c.b16 %v194, %v193
  %v266 = vpack.c.b16 %v196, %v195
  %v267 = vpack.c.b16 %v198, %v197
  %v268 = vpack.c.b16 %v200, %v199
  %v269 = vpack.c.b16 %v202, %v201
  %v270 = vpack.c.b16 %v204, %v203
  %v271 = vpack.c.b16 %v206, %v205
  %v272 = vpack.c.b16 %v208, %v207
  %v273 = vpack.c.b16 %v210, %v209
  %v274 = vpack.c.b16 %v212, %v211
  %v275 = vpack.c.b16 %v214, %v213
  %v276 = vpack.c.b16 %v216, %v215
  %v277 = vpack.c.b16 %v218, %v217
  %v278 = vpack.c.b16 %v220, %v219
  %v279 = vpack.c.b16 %v222, %v221
  %v280 = vpack.c.b16 %v224, %v223
  %v281 = vpack.c.b16 %v226, %v225
  %v282 = vpack.c.b16 %v228, %v227
  %v283 = vpack.c.b16 %v230, %v229
  %v284 = vpack.c.b16 %v232, %v231
  %v285 = vpack.c.b16 %v234, %v233
  %v286 = vpack.c.b16 %v236, %v235
  %v287 = vpack.c.b16 %v238, %v237
  %v288 = vpack.c.b16 %v240, %v239
  %v289 = vpack.c.b16 %v242, %v241
  %v290 = vpack.c.b16 %v244, %v243
  %v291 = vpack.c.b16 %v246, %v245
  %v292 = vpack.c.b16 %v248, %v247
  %v293 = vpack.c.b16 %v250, %v249
  %v294 = vpack.c.b16 %v252, %v251
  %v295 = vpack.c.b16 %v254, %v253
  %v296 = vpack.c.b16 %v256, %v255
  %v297 = vpack.c.b16 %v258, %v257
  %v298 = vpack.c.b16 %v260, %v259
  %v299 = vpack.c.b16 %v262, %v261
  %v300 = vpack.c.b16 %v264, %v263
  %vm337 = vcmask 523264
  %v339 = vsel %vm337, %v116, 0
  %341 = vmatpush.bf16.msra.mxu0 %v272
  %342 = vmatpush.bf16.msra.mxu0 %v271
  %343 = vmatpush.bf16.msra.mxu0 %v270
  %344 = vmatpush.bf16.msra.mxu0 %v269
  %345 = vmatpush.bf16.msra.mxu0 %v268
  %346 = vmatpush.bf16.msra.mxu0 %v267
  %347 = vmatpush.bf16.msra.mxu0 %v266
  %348 = vmatpush.bf16.msra.mxu0 %v265
  %349 = vmatmul.bf16.gmra.mxu0 %v112
  %v350 = vpop.f32.mrf.mxu0
  %v351 = vadd.f32 0.0, %v350
  %v352 = vpop.f32.mrf.mxu0
  %v353 = vadd.f32 0.0, %v352
  %354 = vdwg.mxu0
  %355 = vmatpush.bf16.msra.mxu0 %v280
  %356 = vmatpush.bf16.msra.mxu0 %v279
  %357 = vmatpush.bf16.msra.mxu0 %v278
  %358 = vmatpush.bf16.msra.mxu0 %v277
  %359 = vmatpush.bf16.msra.mxu0 %v276
  %360 = vmatpush.bf16.msra.mxu0 %v275
  %361 = vmatpush.bf16.msra.mxu0 %v274
  %362 = vmatpush.bf16.msra.mxu0 %v273
  %363 = vmatmul.bf16.gmra.mxu0 %v113
  %v364 = vpop.f32.mrf.mxu0
  %v365 = vadd.f32 %v351, %v364
  %v366 = vpop.f32.mrf.mxu0
  %v367 = vadd.f32 %v353, %v366
  %368 = vdwg.mxu0
  %369 = vmatpush.bf16.msra.mxu0 %v288
  %370 = vmatpush.bf16.msra.mxu0 %v287
  %371 = vmatpush.bf16.msra.mxu0 %v286
  %372 = vmatpush.bf16.msra.mxu0 %v285
  %373 = vmatpush.bf16.msra.mxu0 %v284
  %374 = vmatpush.bf16.msra.mxu0 %v283
  %375 = vmatpush.bf16.msra.mxu0 %v282
  %376 = vmatpush.bf16.msra.mxu0 %v281
  %377 = vmatmul.bf16.gmra.mxu0 %v114
  %v378 = vpop.f32.mrf.mxu0
  %v379 = vadd.f32 %v365, %v378
  %v380 = vpop.f32.mrf.mxu0
  %v381 = vadd.f32 %v367, %v380
  %382 = vdwg.mxu0
  %383 = vmatpush.bf16.msra.mxu0 %v296
  %384 = vmatpush.bf16.msra.mxu0 %v295
  %385 = vmatpush.bf16.msra.mxu0 %v294
  %386 = vmatpush.bf16.msra.mxu0 %v293
  %387 = vmatpush.bf16.msra.mxu0 %v292
  %388 = vmatpush.bf16.msra.mxu0 %v291
  %389 = vmatpush.bf16.msra.mxu0 %v290
  %390 = vmatpush.bf16.msra.mxu0 %v289
  %391 = vmatmul.bf16.gmra.mxu0 %v115
  %v392 = vpop.f32.mrf.mxu0
  %v393 = vadd.f32 %v379, %v392
  %v394 = vpop.f32.mrf.mxu0
  %v395 = vadd.f32 %v381, %v394
  %396 = vdwg.mxu0
  %397 = vmatpush.bf16.msra.mxu0 0
  %398 = vmatpush.bf16.msra.mxu0 0
  %399 = vmatpush.bf16.msra.mxu0 0
  %400 = vmatpush.bf16.msra.mxu0 0
  %401 = vmatpush.bf16.msra.mxu0 %v300
  %402 = vmatpush.bf16.msra.mxu0 %v299
  %403 = vmatpush.bf16.msra.mxu0 %v298
  %404 = vmatpush.bf16.msra.mxu0 %v297
  %405 = vmatmul.bf16.gmra.mxu0 %v339
  %v406 = vpop.f32.mrf.mxu0
  %v407 = vadd.f32 %v393, %v406
  %v408 = vpop.f32.mrf.mxu0
  %v409 = vadd.f32 %v395, %v408
  %410 = vdwg.mxu0
  %v411 = vld [vmem:[%s2] sm:$0xff]
  %v412 = vld [vmem:[%s2 + $0x8] sm:$0xff]
  %414 = vset.pattern.permute.xlu0 0
  %415 = vperm.xlu0 %414, %v411
  %v416 = vpop.permute.xlu0 %415
  %419 = vset.pattern.permute.xlu0 0
  %420 = vperm.xlu0 %419, %v412
  %v421 = vpop.permute.xlu0 %420
  %v423 = vmul.f32 %v407, %v416
  %v424 = vmul.f32 %v409, %v421
  %v425 = vld [vmem:[%s3] sm:$0xff]
  %v426 = vld [vmem:[%s3 + $0x8] sm:$0xff]
  %428 = vset.pattern.permute.xlu0 0
  %429 = vperm.xlu0 %428, %v425
  %v430 = vpop.permute.xlu0 %429
  %433 = vset.pattern.permute.xlu0 0
  %434 = vperm.xlu0 %433, %v426
  %v435 = vpop.permute.xlu0 %434
  %v437 = vadd.f32 %v423, %v430
  %v438 = vadd.f32 %v424, %v435
  %v439 = vpack.c.bf16 %v437, %v437
  %v440 = vpack.c.bf16 %v438, %v438
  %vm441 = vcmask 404480
  %442 = vst.msk [vmem:[%s4] sm:$0xf] %vm441, %v439
  %443 = vst.msk [vmem:[%s4 + $0x4] sm:$0xf] %vm441, %v440
  // Predicated region
  $region18: #{cifarnet_forward.18} parent=0 // pred_check
    _
  $region19: #{cifarnet_forward.18} parent=0 // pred_check_branch
    %445 = sbr.rel (0) target = $region21
  $region20: #{cifarnet_forward.18} parent=0 // pred_region
    _
  $region21: #{cifarnet_forward.18} parent=0 // pred_fallthru
    _
  // Predicated region
  $region22: #{cifarnet_forward.18} parent=0 // pred_check
    _
  $region23: #{cifarnet_forward.18} parent=0 // pred_check_branch
    %447 = sbr.rel (0) target = $region25
  $region24: #{cifarnet_forward.18} parent=0 // pred_region
    _
  $region25: #{cifarnet_forward.18} parent=0 // pred_fallthru
    _

// kernel: cifarnet_forward.19
$region0: #{cifarnet_forward.19}
  #allocation0 [shape = 'u32[]', space=smem, size = 0x4, offset = 0x4, fixed_abs, tag = 'smem constant byte address 0x4 - core index']
  #allocation1 [shape = 'u32[72,128]{1,0:T(1,128)}', space=vmem, size = 0x9000, scoped, tag = 'internal scratch']
  %s0 = inlined_call_operand.vmem [shape: bf16[16,50], index: 0, kind: input, shape index: {}]
  %s1 = inlined_call_operand.vmem [shape: bf16[32,16], index: 1, kind: input, shape index: {}]
  %s2 = inlined_call_operand.vmem [shape: f32[32,1], index: 2, kind: input, shape index: {}]
  %s3 = inlined_call_operand.vmem [shape: f32[32,1], index: 3, kind: input, shape index: {}]
  %s4 = inlined_call_operand.vmem [shape: f32[50,2], index: 4, kind: input, shape index: {}]
  %s5 = inlined_call_operand.vmem [shape: f32[10,32], index: 5, kind: input, shape index: {}]
  %s6 = inlined_call_operand.vmem [shape: f32[10,1], index: 6, kind: input, shape index: {}]
  %s7 = inlined_call_operand.vmem [shape: f32[10,2], index: 7, kind: output, shape index: {}]
  %s8 = sld [smem:[#allocation0]]
  $region38: #{cifarnet_forward.19} parent=0
    _
  %s10 = ssub.s32 1, %s8
  %s11 = scalar_select 0, %s10, %s8
  // Predicated region
  $region2: #{cifarnet_forward.19} parent=0 // pred_check
    _
  $region3: #{cifarnet_forward.19} parent=0 // pred_check_branch
    %13 = sbr.rel (0) target = $region5
  $region4: #{cifarnet_forward.19} parent=0 // pred_region
    _
  $region5: #{cifarnet_forward.19} parent=0 // pred_fallthru
    _
  // Predicated region
  $region6: #{cifarnet_forward.19} parent=0 // pred_check
    _
  $region7: #{cifarnet_forward.19} parent=0 // pred_check_branch
    %15 = sbr.rel (0) target = $region9
  $region8: #{cifarnet_forward.19} parent=0 // pred_region
    _
  $region9: #{cifarnet_forward.19} parent=0 // pred_fallthru
    _
  // Predicated region
  $region10: #{cifarnet_forward.19} parent=0 // pred_check
    _
  $region11: #{cifarnet_forward.19} parent=0 // pred_check_branch
    %17 = sbr.rel (0) target = $region13
  $region12: #{cifarnet_forward.19} parent=0 // pred_region
    _
  $region13: #{cifarnet_forward.19} parent=0 // pred_fallthru
    _
  // Predicated region
  $region14: #{cifarnet_forward.19} parent=0 // pred_check
    _
  $region15: #{cifarnet_forward.19} parent=0 // pred_check_branch
    %19 = sbr.rel (0) target = $region17
  $region16: #{cifarnet_forward.19} parent=0 // pred_region
    _
  $region17: #{cifarnet_forward.19} parent=0 // pred_fallthru
    _
  // Predicated region
  $region18: #{cifarnet_forward.19} parent=0 // pred_check
    _
  $region19: #{cifarnet_forward.19} parent=0 // pred_check_branch
    %21 = sbr.rel (0) target = $region21
  $region20: #{cifarnet_forward.19} parent=0 // pred_region
    _
  $region21: #{cifarnet_forward.19} parent=0 // pred_fallthru
    _
  // Predicated region
  $region22: #{cifarnet_forward.19} parent=0 // pred_check
    _
  $region23: #{cifarnet_forward.19} parent=0 // pred_check_branch
    %23 = sbr.rel (0) target = $region25
  $region24: #{cifarnet_forward.19} parent=0 // pred_region
    _
  $region25: #{cifarnet_forward.19} parent=0 // pred_fallthru
    _
  // Predicated region
  $region26: #{cifarnet_forward.19} parent=0 // pred_check
    _
  $region27: #{cifarnet_forward.19} parent=0 // pred_check_branch
    %25 = sbr.rel (0) target = $region29
  $region28: #{cifarnet_forward.19} parent=0 // pred_region
    _
  $region29: #{cifarnet_forward.19} parent=0 // pred_fallthru
    _
  %v27 = vld [vmem:[%s1] sm:$0xf]
  %v28 = vld [vmem:[%s1 + $0x4] sm:$0xf]
  %v29 = vld [vmem:[%s1 + $0x8] sm:$0xf]
  %v30 = vld [vmem:[%s1 + $0xc] sm:$0xf]
  %v31 = vld [vmem:[%s0] sm:$0xf]
  %v32 = vld [vmem:[%s0 + $0x4] sm:$0xf]
  %v37 = vunpack.c.l.b16 %v27
  %v38 = vunpack.c.l.b16 %v28
  %v39 = vunpack.c.l.b16 %v29
  %v40 = vunpack.c.l.b16 %v30
  %v41 = vpack.c.b16 %v38, %v37
  %v42 = vpack.c.b16 %v40, %v39
  %v45 = vunpack.c.l.b16 %v31
  %v46 = vunpack.c.l.b16 %v32
  %v47 = vpack.c.b16 %v46, %v45
  %vm49 = vcmask 130048
  %v51 = vsel %vm49, %v41, 0
  %v54 = vsel %vm49, %v42, 0
  %56 = vmatpush.bf16.msra.mxu0 0
  %57 = vmatpush.bf16.msra.mxu0 0
  %58 = vmatpush.bf16.msra.mxu0 0
  %59 = vmatpush.bf16.msra.mxu0 0
  %60 = vmatpush.bf16.msra.mxu0 0
  %61 = vmatpush.bf16.msra.mxu0 0
  %62 = vmatpush.bf16.msra.mxu0 0
  %63 = vmatpush.bf16.msra.mxu0 %v47
  %64 = vmatmul.bf16.gmra.mxu0 %v51
  %v65 = vpop.f32.mrf.mxu0
  %v66 = vadd.f32 0.0, %v65
  %v67 = vpop.f32.mrf.mxu0
  %v68 = vadd.f32 0.0, %v67
  %69 = vmatmul.bf16.gmra.mxu0 %v54
  %v70 = vpop.f32.mrf.mxu0
  %v71 = vadd.f32 0.0, %v70
  %v72 = vpop.f32.mrf.mxu0
  %v73 = vadd.f32 0.0, %v72
  %74 = vdwg.mxu0
  %v75 = vmax.f32 %v66, 0.0
  %v76 = vmax.f32 %v68, 0.0
  %v77 = vmax.f32 %v71, 0.0
  %v78 = vmax.f32 %v73, 0.0
  %v79 = vld [vmem:[%s2] sm:$0xff]
  %v80 = vld [vmem:[%s2 + $0x8] sm:$0xff]
  %v81 = vld [vmem:[%s2 + $0x10] sm:$0xff]
  %v82 = vld [vmem:[%s2 + $0x18] sm:$0xff]
  %84 = vset.pattern.permute.xlu0 0
  %85 = vperm.xlu0 %84, %v79
  %v86 = vpop.permute.xlu0 %85
  %89 = vset.pattern.permute.xlu0 0
  %90 = vperm.xlu0 %89, %v80
  %v91 = vpop.permute.xlu0 %90
  %94 = vset.pattern.permute.xlu0 0
  %95 = vperm.xlu0 %94, %v81
  %v96 = vpop.permute.xlu0 %95
  %99 = vset.pattern.permute.xlu0 0
  %100 = vperm.xlu0 %99, %v82
  %v101 = vpop.permute.xlu0 %100
  %v103 = vmul.f32 %v75, %v86
  %v104 = vmul.f32 %v76, %v91
  %v105 = vmul.f32 %v77, %v96
  %v106 = vmul.f32 %v78, %v101
  %v107 = vld [vmem:[%s3] sm:$0xff]
  %v108 = vld [vmem:[%s3 + $0x8] sm:$0xff]
  %v109 = vld [vmem:[%s3 + $0x10] sm:$0xff]
  %v110 = vld [vmem:[%s3 + $0x18] sm:$0xff]
  %112 = vset.pattern.permute.xlu0 0
  %113 = vperm.xlu0 %112, %v107
  %v114 = vpop.permute.xlu0 %113
  %117 = vset.pattern.permute.xlu0 0
  %118 = vperm.xlu0 %117, %v108
  %v119 = vpop.permute.xlu0 %118
  %122 = vset.pattern.permute.xlu0 0
  %123 = vperm.xlu0 %122, %v109
  %v124 = vpop.permute.xlu0 %123
  %127 = vset.pattern.permute.xlu0 0
  %128 = vperm.xlu0 %127, %v110
  %v129 = vpop.permute.xlu0 %128
  %v131 = vadd.f32 %v103, %v114
  %v132 = vadd.f32 %v104, %v119
  %v133 = vadd.f32 %v105, %v124
  %v134 = vadd.f32 %v106, %v129
  %v135 = vld [vmem:[%s4] sm:$0xff]
  %v136 = vld [vmem:[%s4 + $0x8] sm:$0xff]
  %v137 = vld [vmem:[%s4 + $0x10] sm:$0xff]
  %v138 = vld [vmem:[%s4 + $0x18] sm:$0xff]
  %v139 = vld [vmem:[%s4 + $0x20] sm:$0xff]
  %v140 = vld [vmem:[%s4 + $0x28] sm:$0xff]
  %v141 = vld [vmem:[%s4 + $0x30] sm:$0x3]
  %vm142 = vcmask 408576
  %v144 = vsel %vm142, %v131, 0
  %v147 = vsel %vm142, %v132, 0
  %v150 = vsel %vm142, %v133, 0
  %v153 = vsel %vm142, %v134, 0
  %vm155 = vcmask 1041408
  %v157 = vsel %vm155, %v141, 0
  %159 = vmatpush.msra.mxu0 0.0
  %160 = vmatpush.msra.mxu0 0.0
  %161 = vmatpush.msra.mxu0 0.0
  %162 = vmatpush.msra.mxu0 0.0
  %163 = vmatpush.msra.mxu0 0.0
  %164 = vmatpush.msra.mxu0 0.0
  %165 = vmatpush.msra.mxu0 0.0
  %166 = vmatpush.msra.mxu0 0.0
  %167 = vmatpush.msra.mxu0 0.0
  %168 = vmatpush.msra.mxu0 %v157
  %169 = vmatpush.msra.mxu0 %v140
  %170 = vmatpush.msra.mxu0 %v139
  %171 = vmatpush.msra.mxu0 %v138
  %172 = vmatpush.msra.mxu0 %v137
  %173 = vmatpush.msra.mxu0 %v136
  %174 = vmatpush.msra.mxu0 %v135
  %175 = vmatmul.f32.gmra.mxu0 %v144
  %v176 = vpop.f32.mrf.mxu0
  %v177 = vadd.f32 0.0, %v176
  %178 = vmatmul.f32.gmra.mxu0 %v147
  %v179 = vpop.f32.mrf.mxu0
  %v180 = vadd.f32 0.0, %v179
  %181 = vmatmul.f32.gmra.mxu0 %v150
  %v182 = vpop.f32.mrf.mxu0
  %v183 = vadd.f32 0.0, %v182
  %184 = vmatmul.f32.gmra.mxu0 %v153
  %v185 = vpop.f32.mrf.mxu0
  %v186 = vadd.f32 0.0, %v185
  %187 = vdwg.mxu0
  %v188 = vld [vmem:[%s5] sm:$0xff]
  %v189 = vld [vmem:[%s5 + $0x8] sm:$0x3]
  %v190 = vld [vmem:[%s6] sm:$0xff]
  %v191 = vld [vmem:[%s6 + $0x8] sm:$0x3]
  %193 = vset.pattern.permute.xlu0 0
  %194 = vperm.xlu0 %193, %v190
  %v195 = vpop.permute.xlu0 %194
  %198 = vset.pattern.permute.xlu0 0
  %199 = vperm.xlu0 %198, %v191
  %v200 = vpop.permute.xlu0 %199
  %vm202 = vcmask 261120
  %v204 = vsel %vm202, %v188, 0
  %v207 = vsel %vm202, %v189, 0
  %209 = vmatpush.msra.mxu0 0.0
  %210 = vmatpush.msra.mxu0 0.0
  %211 = vmatpush.msra.mxu0 0.0
  %212 = vmatpush.msra.mxu0 0.0
  %213 = vmatpush.msra.mxu0 0.0
  %214 = vmatpush.msra.mxu0 0.0
  %215 = vmatpush.msra.mxu0 0.0
  %216 = vmatpush.msra.mxu0 0.0
  %217 = vmatpush.msra.mxu0 0.0
  %218 = vmatpush.msra.mxu0 0.0
  %219 = vmatpush.msra.mxu0 0.0
  %220 = vmatpush.msra.mxu0 0.0
  %221 = vmatpush.msra.mxu0 %v186
  %222 = vmatpush.msra.mxu0 %v183
  %223 = vmatpush.msra.mxu0 %v180
  %224 = vmatpush.msra.mxu0 %v177
  %225 = vmatmul.f32.gmra.mxu0 %v204
  %v226 = vpop.f32.mrf.mxu0
  %v227 = vadd.f32 %v195, %v226
  %228 = vmatmul.f32.gmra.mxu0 %v207
  %v229 = vpop.f32.mrf.mxu0
  %v230 = vadd.f32 %v200, %v229
  %231 = vdwg.mxu0
  %vm232 = vcmask 15360
  %v233 = vsel %vm232, %v227, -inf
  %vm234 = vcmask 9216
  %v235 = vsel %vm234, %v230, -inf
  %v236 = vmax.f32 %v233, %v235
  %v237 = vrot.slane %v236, 4
  %v238 = vmax.f32 %v236, %v237
  %v239 = vrot.slane %v238, 2
  %v240 = vmax.f32 %v238, %v239
  %v241 = vrot.slane %v240, 1
  %v242 = vmax.f32 %v240, %v241
  %v243 = vsub.f32 %v227, %v242
  %v244 = vsub.f32 %v230, %v242
  %v245 = vmul.f32 %v243, 1.442695
  %v246 = vpow.pop %v245
  %v247 = vmul.f32 %v244, 1.442695
  %v248 = vpow.pop %v247
  %v249 = vsel %vm232, %v246, 0.0
  %v250 = vsel %vm234, %v248, 0.0
  %v251 = vadd.f32 %v249, %v250
  %v252 = vrot.slane %v251, 4
  %v253 = vadd.f32 %v251, %v252
  %v254 = vrot.slane %v253, 2
  %v255 = vadd.f32 %v253, %v254
  %v256 = vrot.slane %v255, 1
  %v257 = vadd.f32 %v255, %v256
  %v258 = vlog2.pop %v257
  %v259 = vmul.f32 %v258, 0.6931472
  %v260 = vsub.f32 %v243, %v259
  %v261 = vsub.f32 %v244, %v259
  %262 = vst.msk [vmem:[%s7] sm:$0xff] %vm232, %v260
  %263 = vst.msk [vmem:[%s7 + $0x8] sm:$0x3] %vm234, %v261
  // Predicated region
  $region30: #{cifarnet_forward.19} parent=0 // pred_check
    _
  $region31: #{cifarnet_forward.19} parent=0 // pred_check_branch
    %265 = sbr.rel (0) target = $region33
  $region32: #{cifarnet_forward.19} parent=0 // pred_region
    _
  $region33: #{cifarnet_forward.19} parent=0 // pred_fallthru
    _
  // Predicated region
  $region34: #{cifarnet_forward.19} parent=0 // pred_check
    _
  $region35: #{cifarnet_forward.19} parent=0 // pred_check_branch
    %267 = sbr.rel (0) target = $region37
  $region36: #{cifarnet_forward.19} parent=0 // pred_region
    _
  $region37: #{cifarnet_forward.19} parent=0 // pred_fallthru
    _

</llo_original>
